<compile_context>
chip_gen: v7x
topology: tpu7x:2x2x1
jax: 0.10.0
libtpu: 0.0.40
codegen_flags: <defaults>
</compile_context>

<pallas_src>
import math
from functools import partial

import jax
import jax.numpy as jnp
from jax.experimental import pallas as pl
from jax.experimental.pallas import tpu as pltpu  # noqa: F401  (kept for TPU-specific tuning hooks)


LANE = 128  # pad the final projection output to a full lane width


# ----------------------------------------------------------------------------
# Fused kernel
# ----------------------------------------------------------------------------
def _layernorm(y, gamma, beta, eps=1e-5):
    mu = jnp.mean(y, axis=-1, keepdims=True)
    var = jnp.mean((y - mu) ** 2, axis=-1, keepdims=True)
    return (y - mu) * jax.lax.rsqrt(var + eps) * gamma + beta


def _fused_forward_kernel(x_ref, pe_ref, in_w_ref,
                          wqkv_ref, bqkv_ref, wo_ref, bo_ref,
                          g1_ref, be1_ref, w1_ref, bf1_ref,
                          w2_ref, bf2_ref, g2_ref, be2_ref,
                          out_w_ref, out_b_ref,
                          o_ref,
                          *, num_heads, num_layers, batch, seq_len):
    D = wo_ref.shape[1]                       # wo: (L, D, D)
    dk = D // num_heads
    rows = batch * seq_len
    inv_scale = 1.0 / math.sqrt(dk)

    # ---- input projection + (PE + folded input bias) ------------------------
    # x_ref: (B*S, F) batch-major rows; pe_ref is pre-tiled (B*S, D) and
    # already contains the input-projection bias.
    x = (jnp.dot(x_ref[...], in_w_ref[...], preferred_element_type=jnp.float32)
         + pe_ref[...])                                            # (B*S, D)

    # ---- transformer blocks (static unrolled layer loop) --------------------
    for l in range(num_layers):
        wqkv_l = wqkv_ref[l]                                       # (D, 3D)
        bqkv_l = bqkv_ref[l]                                       # (1, 3D)
        wo_l = wo_ref[l]                                           # (D, D)

        # fused QKV projection: one wide matmul per layer
        qkv = (jnp.dot(x, wqkv_l, preferred_element_type=jnp.float32)
               + bqkv_l)                                           # (B*S, 3D)

        # Attention: per-head, batched over the batch dim; contexts are
        # accumulated straight into the Wo product (no scratch, no masked
        # sub-lane-width stores).
        attn = jnp.zeros((rows, D), jnp.float32)
        for h in range(num_heads):
            c0 = h * dk
            qh = qkv[:, c0:c0 + dk].reshape(batch, seq_len, dk)
            kh = qkv[:, D + c0:D + c0 + dk].reshape(batch, seq_len, dk)
            vh = qkv[:, 2 * D + c0:2 * D + c0 + dk].reshape(batch, seq_len, dk)

            s = jnp.einsum('bqd,bkd->bqk', qh, kh,
                           preferred_element_type=jnp.float32) * inv_scale
            s = s - jnp.max(s, axis=-1, keepdims=True)
            p = jnp.exp(s)
            p = p / jnp.sum(p, axis=-1, keepdims=True)             # exact softmax
            ctx = jnp.einsum('bqk,bkd->bqd', p, vh,
                             preferred_element_type=jnp.float32)   # (B, S, dk)

            # sublane-aligned Wo row-slice; full-D-wide matmul output
            attn = attn + jnp.dot(ctx.reshape(rows, dk),
                                  wo_l[c0:c0 + dk, :],
                                  preferred_element_type=jnp.float32)

        # residual + LayerNorm 1 (attention output bias added once)
        x = _layernorm(x + attn + bo_ref[l], g1_ref[l], be1_ref[l])

        # feed-forward (Linear -> ReLU -> Linear)
        h1 = jnp.dot(x, w1_ref[l], preferred_element_type=jnp.float32) + bf1_ref[l]
        h1 = jnp.maximum(h1, 0.0)
        f = jnp.dot(h1, w2_ref[l], preferred_element_type=jnp.float32) + bf2_ref[l]

        # residual + LayerNorm 2
        x = _layernorm(x + f, g2_ref[l], be2_ref[l])

    # ---- output projection, lane-padded to 128 -> dense unmasked stores ----
    o_ref[...] = (jnp.dot(x, out_w_ref[...],
                          preferred_element_type=jnp.float32) + out_b_ref[...])


# ----------------------------------------------------------------------------
# Wrapper
# ----------------------------------------------------------------------------
@partial(jax.jit, static_argnums=(2, 3))
def transformer_forward(src, params, num_heads, pred_len):
    """src: (S, B, input_size), sequence-major like the PyTorch module."""
    S, B, F = src.shape
    D = params['in_w'].shape[1]
    lp = params['layers']
    L = lp['wq'].shape[0]

    # Batch-major flattened rows: row b*S + s holds (batch b, position s).
    x2d = jnp.transpose(src, (1, 0, 2)).reshape(B * S, F)

    # Pre-tiled positional encoding with the input-projection bias folded in.
    pe_b = jnp.tile(params['pe'][:S], (B, 1)) + params['in_b']     # (B*S, D)

    # Fused QKV weight / bias stacks: (L, D, 3D) and (L, 1, 3D).
    wqkv = jnp.concatenate([lp['wq'], lp['wk'], lp['wv']], axis=2)
    bqkv = jnp.concatenate([lp['bq'], lp['bk'], lp['bv']], axis=2)

    # Zero-pad the output projection to a full 128-lane width (lane-dense
    # stores in the kernel); the extra columns are sliced away below.
    out_w_pad = jnp.zeros((D, LANE), jnp.float32).at[:, :F].set(params['out_w'])
    out_b_pad = jnp.zeros((1, LANE), jnp.float32).at[:, :F].set(params['out_b'])

    kernel = partial(_fused_forward_kernel, num_heads=num_heads,
                     num_layers=L, batch=B, seq_len=S)

    out_pad = pl.pallas_call(
        kernel,
        out_shape=jax.ShapeDtypeStruct((B * S, LANE), jnp.float32),
    )(x2d, pe_b, params['in_w'],
      wqkv, bqkv, lp['wo'], lp['bo'],
      lp['g1'], lp['be1'], lp['w1'], lp['bf1'],
      lp['w2'], lp['bf2'], lp['g2'], lp['be2'],
      out_w_pad, out_b_pad)

    out = out_pad.reshape(B, S, LANE)[:, S - pred_len:, :F]        # (B, P, F)
    return jnp.transpose(out, (1, 0, 2))                           # (P, B, F)


# ----------------------------------------------------------------------------
# Parameters (deterministic synthetic init; PyTorch Linear weights stored
# pre-transposed as (in, out) so kernels compute x @ W + b).  Per-layer
# parameters are stacked with a leading L axis for the fused kernel.
# ----------------------------------------------------------------------------
def make_positional_encoding(d_model, max_len=100):
    pos = jnp.arange(max_len, dtype=jnp.float32)[:, None]
    div_term = jnp.exp(jnp.arange(0, d_model, 2, dtype=jnp.float32)
                       * -(math.log(10000.0) / d_model))
    pe = jnp.zeros((max_len, d_model), jnp.float32)
    pe = pe.at[:, 0::2].set(jnp.sin(pos * div_term))
    pe = pe.at[:, 1::2].set(jnp.cos(pos * div_term))
    return pe


def init_params(key, input_size, d_model, num_heads, num_layers,
                dim_ff=256, max_len=100):
    def linear(k, fin, fout):
        kw, kb = jax.random.split(k)
        w = jax.random.normal(kw, (fin, fout), jnp.float32) / math.sqrt(fin)
        b = 0.01 * jax.random.normal(kb, (1, fout), jnp.float32)
        return w, b

    keys = jax.random.split(key, 2 + num_layers)
    in_w, in_b = linear(keys[0], input_size, d_model)
    out_w, out_b = linear(keys[1], d_model, input_size)

    per_layer = []
    for l in range(num_layers):
        lk = jax.random.split(keys[2 + l], 10)
        wq, bq = linear(lk[0], d_model, d_model)
        wk, bk = linear(lk[1], d_model, d_model)
        wv, bv = linear(lk[2], d_model, d_model)
        wo, bo = linear(lk[3], d_model, d_model)
        w1, bf1 = linear(lk[4], d_model, dim_ff)
        w2, bf2 = linear(lk[5], dim_ff, d_model)
        g1 = 1.0 + 0.1 * jax.random.normal(lk[6], (1, d_model), jnp.float32)
        be1 = 0.05 * jax.random.normal(lk[7], (1, d_model), jnp.float32)
        g2 = 1.0 + 0.1 * jax.random.normal(lk[8], (1, d_model), jnp.float32)
        be2 = 0.05 * jax.random.normal(lk[9], (1, d_model), jnp.float32)
        per_layer.append(dict(wq=wq, bq=bq, wk=wk, bk=bk, wv=wv, bv=bv,
                              wo=wo, bo=bo, g1=g1, be1=be1,
                              w1=w1, bf1=bf1, w2=w2, bf2=bf2, g2=g2, be2=be2))

    layers = {k: jnp.stack([p[k] for p in per_layer]) for k in per_layer[0]}
    return dict(in_w=in_w, in_b=in_b, out_w=out_w, out_b=out_b,
                pe=make_positional_encoding(d_model, max_len), layers=layers)


# ----------------------------------------------------------------------------
# Pure-JAX reference (mirrors the PyTorch forward, sequence-major)
# ----------------------------------------------------------------------------
def reference_forward(src, params, num_heads, pred_len):
    def ln(y, g, b, eps=1e-5):
        mu = jnp.mean(y, -1, keepdims=True)
        var = jnp.mean((y - mu) ** 2, -1, keepdims=True)
        return (y - mu) / jnp.sqrt(var + eps) * g + b

    lp = params['layers']
    num_layers = lp['wq'].shape[0]
    x = src @ params['in_w'] + params['in_b'][0]
    x = x + params['pe'][:x.shape[0], None, :]
    for l in range(num_layers):
        S, B, D = x.shape
        dk = D // num_heads
        q = (x @ lp['wq'][l] + lp['bq'][l, 0]).reshape(S, B, num_heads, dk).transpose(1, 2, 0, 3)
        k = (x @ lp['wk'][l] + lp['bk'][l, 0]).reshape(S, B, num_heads, dk).transpose(1, 2, 0, 3)
        v = (x @ lp['wv'][l] + lp['bv'][l, 0]).reshape(S, B, num_heads, dk).transpose(1, 2, 0, 3)
        scores = q @ jnp.swapaxes(k, -2, -1) / math.sqrt(dk)
        attn = jax.nn.softmax(scores, axis=-1)
        ctx = (attn @ v).transpose(2, 0, 1, 3).reshape(S, B, D)
        a = ctx @ lp['wo'][l] + lp['bo'][l, 0]
        x2 = ln(x + a, lp['g1'][l, 0], lp['be1'][l, 0])
        f = jnp.maximum(x2 @ lp['w1'][l] + lp['bf1'][l, 0], 0.0) @ lp['w2'][l] + lp['bf2'][l, 0]
        x = ln(x2 + f, lp['g2'][l, 0], lp['be2'][l, 0])
    return x[-pred_len:] @ params['out_w'] + params['out_b'][0]


# ----------------------------------------------------------------------------
if __name__ == "__main__":
    S, B, input_size = 8, 2, 4
    d_model, num_heads, num_layers, pred_len = 32, 4, 2, 4

    key = jax.random.PRNGKey(0)
    pkey, xkey = jax.random.split(key)
    params = init_params(pkey, input_size, d_model, num_heads, num_layers)
    src = jax.random.normal(xkey, (S, B, input_size), jnp.float32)

    out = transformer_forward(src, params, num_heads, pred_len)
    out = jax.block_until_ready(out)
    assert out.shape == (pred_len, B, input_size)

    ref = reference_forward(src, params, num_heads, pred_len)
    max_err = float(jnp.max(jnp.abs(out - ref)))
    # Exact softmax reciprocal now used in-kernel -> tight tolerance.
    assert max_err < 1e-4, f"mismatch vs reference: {max_err}"

    print("KERNEL_OK")
</pallas_src>

<mosaic_0001>
module attributes {stable_mosaic.version = 11 : i64} {
  func.func @_fused_forward_kernel(%arg0: memref<16x4xf32, #tpu.memory_space<vmem>>, %arg1: memref<16x32xf32, #tpu.memory_space<vmem>>, %arg2: memref<4x32xf32, #tpu.memory_space<vmem>>, %arg3: memref<2x32x96xf32, #tpu.memory_space<vmem>>, %arg4: memref<2x1x96xf32, #tpu.memory_space<vmem>>, %arg5: memref<2x32x32xf32, #tpu.memory_space<vmem>>, %arg6: memref<2x1x32xf32, #tpu.memory_space<vmem>>, %arg7: memref<2x1x32xf32, #tpu.memory_space<vmem>>, %arg8: memref<2x1x32xf32, #tpu.memory_space<vmem>>, %arg9: memref<2x32x256xf32, #tpu.memory_space<vmem>>, %arg10: memref<2x1x256xf32, #tpu.memory_space<vmem>>, %arg11: memref<2x256x32xf32, #tpu.memory_space<vmem>>, %arg12: memref<2x1x32xf32, #tpu.memory_space<vmem>>, %arg13: memref<2x1x32xf32, #tpu.memory_space<vmem>>, %arg14: memref<2x1x32xf32, #tpu.memory_space<vmem>>, %arg15: memref<32x128xf32, #tpu.memory_space<vmem>>, %arg16: memref<1x128xf32, #tpu.memory_space<vmem>>, %arg17: memref<16x128xf32, #tpu.memory_space<vmem>>) attributes {dimension_semantics = [], scalar_prefetch = 0 : i64, scratch_operands = 0 : i64, tpu.core_type = #tpu.core_type<tc>} {
    %c0 = arith.constant 0 : index
    %c0_0 = arith.constant 0 : index
    %0 = vector.load %arg0[%c0, %c0_0] : memref<16x4xf32, #tpu.memory_space<vmem>>, vector<16x4xf32>
    %c0_1 = arith.constant 0 : index
    %c0_2 = arith.constant 0 : index
    %1 = vector.load %arg2[%c0_1, %c0_2] : memref<4x32xf32, #tpu.memory_space<vmem>>, vector<4x32xf32>
    %cst = arith.constant dense<0.000000e+00> : vector<16x32xf32>
    %2 = tpu.matmul %0, %1, %cst {dimension_numbers = #tpu.dot_dimension_numbers<[1], [0], [0], [1], [0, 0, 1, 1], [], []>} : vector<16x4xf32>, vector<4x32xf32>, vector<16x32xf32> -> vector<16x32xf32>
    %c0_3 = arith.constant 0 : index
    %c0_4 = arith.constant 0 : index
    %3 = vector.load %arg1[%c0_3, %c0_4] : memref<16x32xf32, #tpu.memory_space<vmem>>, vector<16x32xf32>
    %4 = arith.addf %2, %3 : vector<16x32xf32>
    %c0_5 = arith.constant 0 : index
    %c0_6 = arith.constant 0 : index
    %c0_7 = arith.constant 0 : index
    %5 = vector.load %arg3[%c0_5, %c0_6, %c0_7] : memref<2x32x96xf32, #tpu.memory_space<vmem>>, vector<1x32x96xf32>
    %6 = vector.shape_cast %5 : vector<1x32x96xf32> to vector<32x96xf32>
    %c0_8 = arith.constant 0 : index
    %c0_9 = arith.constant 0 : index
    %c0_10 = arith.constant 0 : index
    %7 = vector.load %arg4[%c0_8, %c0_9, %c0_10] : memref<2x1x96xf32, #tpu.memory_space<vmem>>, vector<1x1x96xf32>
    %8 = vector.shape_cast %7 : vector<1x1x96xf32> to vector<1x96xf32>
    %c0_11 = arith.constant 0 : index
    %c0_12 = arith.constant 0 : index
    %c0_13 = arith.constant 0 : index
    %9 = vector.load %arg5[%c0_11, %c0_12, %c0_13] : memref<2x32x32xf32, #tpu.memory_space<vmem>>, vector<1x32x32xf32>
    %10 = vector.shape_cast %9 : vector<1x32x32xf32> to vector<32x32xf32>
    %cst_14 = arith.constant dense<0.000000e+00> : vector<16x96xf32>
    %11 = tpu.matmul %4, %6, %cst_14 {dimension_numbers = #tpu.dot_dimension_numbers<[1], [0], [0], [1], [0, 0, 1, 1], [], []>} : vector<16x32xf32>, vector<32x96xf32>, vector<16x96xf32> -> vector<16x96xf32>
    %12 = vector.broadcast %8 : vector<1x96xf32> to vector<16x96xf32>
    %13 = arith.addf %11, %12 : vector<16x96xf32>
    %cst_15 = arith.constant 0.000000e+00 : f32
    %14 = vector.broadcast %cst_15 : f32 to vector<16x32xf32>
    %15 = vector.extract_strided_slice %13 {offsets = [0, 0], sizes = [16, 8], strides = [1, 1]} : vector<16x96xf32> to vector<16x8xf32>
    %16 = vector.shape_cast %15 : vector<16x8xf32> to vector<2x8x8xf32>
    %17 = vector.extract_strided_slice %13 {offsets = [0, 32], sizes = [16, 8], strides = [1, 1]} : vector<16x96xf32> to vector<16x8xf32>
    %18 = vector.shape_cast %17 : vector<16x8xf32> to vector<2x8x8xf32>
    %19 = vector.extract_strided_slice %13 {offsets = [0, 64], sizes = [16, 8], strides = [1, 1]} : vector<16x96xf32> to vector<16x8xf32>
    %20 = vector.shape_cast %19 : vector<16x8xf32> to vector<2x8x8xf32>
    "tpu.trace_start"() <{level = 10 : i32, message = "bqd,bkd->bqk"}> : () -> ()
    %cst_16 = arith.constant dense<0.000000e+00> : vector<2x8x8xf32>
    %21 = tpu.matmul %16, %18, %cst_16 {dimension_numbers = #tpu.dot_dimension_numbers<[2], [2], [1], [1], [0, 0, 0, 1, 1, 1], [0], [0]>} : vector<2x8x8xf32>, vector<2x8x8xf32>, vector<2x8x8xf32> -> vector<2x8x8xf32>
    "tpu.trace_stop"() : () -> ()
    %cst_17 = arith.constant 0.353553385 : f32
    %22 = vector.broadcast %cst_17 : f32 to vector<2x8x8xf32>
    %23 = arith.mulf %21, %22 : vector<2x8x8xf32>
    %cst_18 = arith.constant dense<0xFF800000> : vector<2x8xf32>
    %24 = vector.multi_reduction <maximumf>, %23, %cst_18 [2] : vector<2x8x8xf32> to vector<2x8xf32>
    %25 = vector.shape_cast %24 : vector<2x8xf32> to vector<2x8x1xf32>
    %26 = vector.broadcast %25 : vector<2x8x1xf32> to vector<2x8x8xf32>
    %27 = arith.subf %23, %26 : vector<2x8x8xf32>
    %28 = math.exp %27 : vector<2x8x8xf32>
    %cst_19 = arith.constant dense<0.000000e+00> : vector<2x8xf32>
    %29 = vector.multi_reduction <add>, %28, %cst_19 [2] : vector<2x8x8xf32> to vector<2x8xf32>
    %30 = vector.shape_cast %29 : vector<2x8xf32> to vector<2x8x1xf32>
    %31 = vector.broadcast %30 : vector<2x8x1xf32> to vector<2x8x8xf32>
    %32 = arith.divf %28, %31 : vector<2x8x8xf32>
    "tpu.trace_start"() <{level = 10 : i32, message = "bqk,bkd->bqd"}> : () -> ()
    %cst_20 = arith.constant dense<0.000000e+00> : vector<2x8x8xf32>
    %33 = tpu.matmul %32, %20, %cst_20 {dimension_numbers = #tpu.dot_dimension_numbers<[2], [1], [1], [2], [0, 0, 0, 1, 1, 2], [0], [0]>} : vector<2x8x8xf32>, vector<2x8x8xf32>, vector<2x8x8xf32> -> vector<2x8x8xf32>
    "tpu.trace_stop"() : () -> ()
    %34 = vector.shape_cast %33 : vector<2x8x8xf32> to vector<16x8xf32>
    %35 = vector.extract_strided_slice %10 {offsets = [0, 0], sizes = [8, 32], strides = [1, 1]} : vector<32x32xf32> to vector<8x32xf32>
    %cst_21 = arith.constant dense<0.000000e+00> : vector<16x32xf32>
    %36 = tpu.matmul %34, %35, %cst_21 {dimension_numbers = #tpu.dot_dimension_numbers<[1], [0], [0], [1], [0, 0, 1, 1], [], []>} : vector<16x8xf32>, vector<8x32xf32>, vector<16x32xf32> -> vector<16x32xf32>
    %37 = arith.addf %14, %36 : vector<16x32xf32>
    %38 = vector.extract_strided_slice %13 {offsets = [0, 8], sizes = [16, 8], strides = [1, 1]} : vector<16x96xf32> to vector<16x8xf32>
    %39 = vector.shape_cast %38 : vector<16x8xf32> to vector<2x8x8xf32>
    %40 = vector.extract_strided_slice %13 {offsets = [0, 40], sizes = [16, 8], strides = [1, 1]} : vector<16x96xf32> to vector<16x8xf32>
    %41 = vector.shape_cast %40 : vector<16x8xf32> to vector<2x8x8xf32>
    %42 = vector.extract_strided_slice %13 {offsets = [0, 72], sizes = [16, 8], strides = [1, 1]} : vector<16x96xf32> to vector<16x8xf32>
    %43 = vector.shape_cast %42 : vector<16x8xf32> to vector<2x8x8xf32>
    "tpu.trace_start"() <{level = 10 : i32, message = "bqd,bkd->bqk"}> : () -> ()
    %cst_22 = arith.constant dense<0.000000e+00> : vector<2x8x8xf32>
    %44 = tpu.matmul %39, %41, %cst_22 {dimension_numbers = #tpu.dot_dimension_numbers<[2], [2], [1], [1], [0, 0, 0, 1, 1, 1], [0], [0]>} : vector<2x8x8xf32>, vector<2x8x8xf32>, vector<2x8x8xf32> -> vector<2x8x8xf32>
    "tpu.trace_stop"() : () -> ()
    %cst_23 = arith.constant 0.353553385 : f32
    %45 = vector.broadcast %cst_23 : f32 to vector<2x8x8xf32>
    %46 = arith.mulf %44, %45 : vector<2x8x8xf32>
    %cst_24 = arith.constant dense<0xFF800000> : vector<2x8xf32>
    %47 = vector.multi_reduction <maximumf>, %46, %cst_24 [2] : vector<2x8x8xf32> to vector<2x8xf32>
    %48 = vector.shape_cast %47 : vector<2x8xf32> to vector<2x8x1xf32>
    %49 = vector.broadcast %48 : vector<2x8x1xf32> to vector<2x8x8xf32>
    %50 = arith.subf %46, %49 : vector<2x8x8xf32>
    %51 = math.exp %50 : vector<2x8x8xf32>
    %cst_25 = arith.constant dense<0.000000e+00> : vector<2x8xf32>
    %52 = vector.multi_reduction <add>, %51, %cst_25 [2] : vector<2x8x8xf32> to vector<2x8xf32>
    %53 = vector.shape_cast %52 : vector<2x8xf32> to vector<2x8x1xf32>
    %54 = vector.broadcast %53 : vector<2x8x1xf32> to vector<2x8x8xf32>
    %55 = arith.divf %51, %54 : vector<2x8x8xf32>
    "tpu.trace_start"() <{level = 10 : i32, message = "bqk,bkd->bqd"}> : () -> ()
    %cst_26 = arith.constant dense<0.000000e+00> : vector<2x8x8xf32>
    %56 = tpu.matmul %55, %43, %cst_26 {dimension_numbers = #tpu.dot_dimension_numbers<[2], [1], [1], [2], [0, 0, 0, 1, 1, 2], [0], [0]>} : vector<2x8x8xf32>, vector<2x8x8xf32>, vector<2x8x8xf32> -> vector<2x8x8xf32>
    "tpu.trace_stop"() : () -> ()
    %57 = vector.shape_cast %56 : vector<2x8x8xf32> to vector<16x8xf32>
    %58 = vector.extract_strided_slice %10 {offsets = [8, 0], sizes = [8, 32], strides = [1, 1]} : vector<32x32xf32> to vector<8x32xf32>
    %cst_27 = arith.constant dense<0.000000e+00> : vector<16x32xf32>
    %59 = tpu.matmul %57, %58, %cst_27 {dimension_numbers = #tpu.dot_dimension_numbers<[1], [0], [0], [1], [0, 0, 1, 1], [], []>} : vector<16x8xf32>, vector<8x32xf32>, vector<16x32xf32> -> vector<16x32xf32>
    %60 = arith.addf %37, %59 : vector<16x32xf32>
    %61 = vector.extract_strided_slice %13 {offsets = [0, 16], sizes = [16, 8], strides = [1, 1]} : vector<16x96xf32> to vector<16x8xf32>
    %62 = vector.shape_cast %61 : vector<16x8xf32> to vector<2x8x8xf32>
    %63 = vector.extract_strided_slice %13 {offsets = [0, 48], sizes = [16, 8], strides = [1, 1]} : vector<16x96xf32> to vector<16x8xf32>
    %64 = vector.shape_cast %63 : vector<16x8xf32> to vector<2x8x8xf32>
    %65 = vector.extract_strided_slice %13 {offsets = [0, 80], sizes = [16, 8], strides = [1, 1]} : vector<16x96xf32> to vector<16x8xf32>
    %66 = vector.shape_cast %65 : vector<16x8xf32> to vector<2x8x8xf32>
    "tpu.trace_start"() <{level = 10 : i32, message = "bqd,bkd->bqk"}> : () -> ()
    %cst_28 = arith.constant dense<0.000000e+00> : vector<2x8x8xf32>
    %67 = tpu.matmul %62, %64, %cst_28 {dimension_numbers = #tpu.dot_dimension_numbers<[2], [2], [1], [1], [0, 0, 0, 1, 1, 1], [0], [0]>} : vector<2x8x8xf32>, vector<2x8x8xf32>, vector<2x8x8xf32> -> vector<2x8x8xf32>
    "tpu.trace_stop"() : () -> ()
    %cst_29 = arith.constant 0.353553385 : f32
    %68 = vector.broadcast %cst_29 : f32 to vector<2x8x8xf32>
    %69 = arith.mulf %67, %68 : vector<2x8x8xf32>
    %cst_30 = arith.constant dense<0xFF800000> : vector<2x8xf32>
    %70 = vector.multi_reduction <maximumf>, %69, %cst_30 [2] : vector<2x8x8xf32> to vector<2x8xf32>
    %71 = vector.shape_cast %70 : vector<2x8xf32> to vector<2x8x1xf32>
    %72 = vector.broadcast %71 : vector<2x8x1xf32> to vector<2x8x8xf32>
    %73 = arith.subf %69, %72 : vector<2x8x8xf32>
    %74 = math.exp %73 : vector<2x8x8xf32>
    %cst_31 = arith.constant dense<0.000000e+00> : vector<2x8xf32>
    %75 = vector.multi_reduction <add>, %74, %cst_31 [2] : vector<2x8x8xf32> to vector<2x8xf32>
    %76 = vector.shape_cast %75 : vector<2x8xf32> to vector<2x8x1xf32>
    %77 = vector.broadcast %76 : vector<2x8x1xf32> to vector<2x8x8xf32>
    %78 = arith.divf %74, %77 : vector<2x8x8xf32>
    "tpu.trace_start"() <{level = 10 : i32, message = "bqk,bkd->bqd"}> : () -> ()
    %cst_32 = arith.constant dense<0.000000e+00> : vector<2x8x8xf32>
    %79 = tpu.matmul %78, %66, %cst_32 {dimension_numbers = #tpu.dot_dimension_numbers<[2], [1], [1], [2], [0, 0, 0, 1, 1, 2], [0], [0]>} : vector<2x8x8xf32>, vector<2x8x8xf32>, vector<2x8x8xf32> -> vector<2x8x8xf32>
    "tpu.trace_stop"() : () -> ()
    %80 = vector.shape_cast %79 : vector<2x8x8xf32> to vector<16x8xf32>
    %81 = vector.extract_strided_slice %10 {offsets = [16, 0], sizes = [8, 32], strides = [1, 1]} : vector<32x32xf32> to vector<8x32xf32>
    %cst_33 = arith.constant dense<0.000000e+00> : vector<16x32xf32>
    %82 = tpu.matmul %80, %81, %cst_33 {dimension_numbers = #tpu.dot_dimension_numbers<[1], [0], [0], [1], [0, 0, 1, 1], [], []>} : vector<16x8xf32>, vector<8x32xf32>, vector<16x32xf32> -> vector<16x32xf32>
    %83 = arith.addf %60, %82 : vector<16x32xf32>
    %84 = vector.extract_strided_slice %13 {offsets = [0, 24], sizes = [16, 8], strides = [1, 1]} : vector<16x96xf32> to vector<16x8xf32>
    %85 = vector.shape_cast %84 : vector<16x8xf32> to vector<2x8x8xf32>
    %86 = vector.extract_strided_slice %13 {offsets = [0, 56], sizes = [16, 8], strides = [1, 1]} : vector<16x96xf32> to vector<16x8xf32>
    %87 = vector.shape_cast %86 : vector<16x8xf32> to vector<2x8x8xf32>
    %88 = vector.extract_strided_slice %13 {offsets = [0, 88], sizes = [16, 8], strides = [1, 1]} : vector<16x96xf32> to vector<16x8xf32>
    %89 = vector.shape_cast %88 : vector<16x8xf32> to vector<2x8x8xf32>
    "tpu.trace_start"() <{level = 10 : i32, message = "bqd,bkd->bqk"}> : () -> ()
    %cst_34 = arith.constant dense<0.000000e+00> : vector<2x8x8xf32>
    %90 = tpu.matmul %85, %87, %cst_34 {dimension_numbers = #tpu.dot_dimension_numbers<[2], [2], [1], [1], [0, 0, 0, 1, 1, 1], [0], [0]>} : vector<2x8x8xf32>, vector<2x8x8xf32>, vector<2x8x8xf32> -> vector<2x8x8xf32>
    "tpu.trace_stop"() : () -> ()
    %cst_35 = arith.constant 0.353553385 : f32
    %91 = vector.broadcast %cst_35 : f32 to vector<2x8x8xf32>
    %92 = arith.mulf %90, %91 : vector<2x8x8xf32>
    %cst_36 = arith.constant dense<0xFF800000> : vector<2x8xf32>
    %93 = vector.multi_reduction <maximumf>, %92, %cst_36 [2] : vector<2x8x8xf32> to vector<2x8xf32>
    %94 = vector.shape_cast %93 : vector<2x8xf32> to vector<2x8x1xf32>
    %95 = vector.broadcast %94 : vector<2x8x1xf32> to vector<2x8x8xf32>
    %96 = arith.subf %92, %95 : vector<2x8x8xf32>
    %97 = math.exp %96 : vector<2x8x8xf32>
    %cst_37 = arith.constant dense<0.000000e+00> : vector<2x8xf32>
    %98 = vector.multi_reduction <add>, %97, %cst_37 [2] : vector<2x8x8xf32> to vector<2x8xf32>
    %99 = vector.shape_cast %98 : vector<2x8xf32> to vector<2x8x1xf32>
    %100 = vector.broadcast %99 : vector<2x8x1xf32> to vector<2x8x8xf32>
    %101 = arith.divf %97, %100 : vector<2x8x8xf32>
    "tpu.trace_start"() <{level = 10 : i32, message = "bqk,bkd->bqd"}> : () -> ()
    %cst_38 = arith.constant dense<0.000000e+00> : vector<2x8x8xf32>
    %102 = tpu.matmul %101, %89, %cst_38 {dimension_numbers = #tpu.dot_dimension_numbers<[2], [1], [1], [2], [0, 0, 0, 1, 1, 2], [0], [0]>} : vector<2x8x8xf32>, vector<2x8x8xf32>, vector<2x8x8xf32> -> vector<2x8x8xf32>
    "tpu.trace_stop"() : () -> ()
    %103 = vector.shape_cast %102 : vector<2x8x8xf32> to vector<16x8xf32>
    %104 = vector.extract_strided_slice %10 {offsets = [24, 0], sizes = [8, 32], strides = [1, 1]} : vector<32x32xf32> to vector<8x32xf32>
    %cst_39 = arith.constant dense<0.000000e+00> : vector<16x32xf32>
    %105 = tpu.matmul %103, %104, %cst_39 {dimension_numbers = #tpu.dot_dimension_numbers<[1], [0], [0], [1], [0, 0, 1, 1], [], []>} : vector<16x8xf32>, vector<8x32xf32>, vector<16x32xf32> -> vector<16x32xf32>
    %106 = arith.addf %83, %105 : vector<16x32xf32>
    %107 = arith.addf %4, %106 : vector<16x32xf32>
    %c0_40 = arith.constant 0 : index
    %c0_41 = arith.constant 0 : index
    %c0_42 = arith.constant 0 : index
    %108 = vector.load %arg6[%c0_40, %c0_41, %c0_42] : memref<2x1x32xf32, #tpu.memory_space<vmem>>, vector<1x1x32xf32>
    %109 = vector.shape_cast %108 : vector<1x1x32xf32> to vector<1x32xf32>
    %110 = vector.broadcast %109 : vector<1x32xf32> to vector<16x32xf32>
    %111 = arith.addf %107, %110 : vector<16x32xf32>
    %c0_43 = arith.constant 0 : index
    %c0_44 = arith.constant 0 : index
    %c0_45 = arith.constant 0 : index
    %112 = vector.load %arg7[%c0_43, %c0_44, %c0_45] : memref<2x1x32xf32, #tpu.memory_space<vmem>>, vector<1x1x32xf32>
    %113 = vector.shape_cast %112 : vector<1x1x32xf32> to vector<1x32xf32>
    %c0_46 = arith.constant 0 : index
    %c0_47 = arith.constant 0 : index
    %c0_48 = arith.constant 0 : index
    %114 = vector.load %arg8[%c0_46, %c0_47, %c0_48] : memref<2x1x32xf32, #tpu.memory_space<vmem>>, vector<1x1x32xf32>
    %115 = vector.shape_cast %114 : vector<1x1x32xf32> to vector<1x32xf32>
    %cst_49 = arith.constant dense<0.000000e+00> : vector<16xf32>
    %116 = vector.multi_reduction <add>, %111, %cst_49 [1] : vector<16x32xf32> to vector<16xf32>
    %117 = vector.shape_cast %116 : vector<16xf32> to vector<16x1xf32>
    %cst_50 = arith.constant 3.200000e+01 : f32
    %118 = vector.broadcast %cst_50 : f32 to vector<16x1xf32>
    %119 = arith.divf %117, %118 : vector<16x1xf32>
    %120 = vector.broadcast %119 : vector<16x1xf32> to vector<16x32xf32>
    %121 = arith.subf %111, %120 : vector<16x32xf32>
    %122 = arith.mulf %121, %121 : vector<16x32xf32>
    %cst_51 = arith.constant dense<0.000000e+00> : vector<16xf32>
    %123 = vector.multi_reduction <add>, %122, %cst_51 [1] : vector<16x32xf32> to vector<16xf32>
    %124 = vector.shape_cast %123 : vector<16xf32> to vector<16x1xf32>
    %cst_52 = arith.constant 3.200000e+01 : f32
    %125 = vector.broadcast %cst_52 : f32 to vector<16x1xf32>
    %126 = arith.divf %124, %125 : vector<16x1xf32>
    %127 = vector.broadcast %119 : vector<16x1xf32> to vector<16x32xf32>
    %128 = arith.subf %111, %127 : vector<16x32xf32>
    %cst_53 = arith.constant 9.99999974E-6 : f32
    %129 = vector.broadcast %cst_53 : f32 to vector<16x1xf32>
    %130 = arith.addf %126, %129 : vector<16x1xf32>
    %131 = math.rsqrt %130 : vector<16x1xf32>
    %132 = vector.broadcast %131 : vector<16x1xf32> to vector<16x32xf32>
    %133 = arith.mulf %128, %132 : vector<16x32xf32>
    %134 = vector.broadcast %113 : vector<1x32xf32> to vector<16x32xf32>
    %135 = arith.mulf %133, %134 : vector<16x32xf32>
    %136 = vector.broadcast %115 : vector<1x32xf32> to vector<16x32xf32>
    %137 = arith.addf %135, %136 : vector<16x32xf32>
    %c0_54 = arith.constant 0 : index
    %c0_55 = arith.constant 0 : index
    %c0_56 = arith.constant 0 : index
    %138 = vector.load %arg9[%c0_54, %c0_55, %c0_56] : memref<2x32x256xf32, #tpu.memory_space<vmem>>, vector<1x32x256xf32>
    %139 = vector.shape_cast %138 : vector<1x32x256xf32> to vector<32x256xf32>
    %cst_57 = arith.constant dense<0.000000e+00> : vector<16x256xf32>
    %140 = tpu.matmul %137, %139, %cst_57 {dimension_numbers = #tpu.dot_dimension_numbers<[1], [0], [0], [1], [0, 0, 1, 1], [], []>} : vector<16x32xf32>, vector<32x256xf32>, vector<16x256xf32> -> vector<16x256xf32>
    %c0_58 = arith.constant 0 : index
    %c0_59 = arith.constant 0 : index
    %c0_60 = arith.constant 0 : index
    %141 = vector.load %arg10[%c0_58, %c0_59, %c0_60] : memref<2x1x256xf32, #tpu.memory_space<vmem>>, vector<1x1x256xf32>
    %142 = vector.shape_cast %141 : vector<1x1x256xf32> to vector<1x256xf32>
    %143 = vector.broadcast %142 : vector<1x256xf32> to vector<16x256xf32>
    %144 = arith.addf %140, %143 : vector<16x256xf32>
    %cst_61 = arith.constant 0.000000e+00 : f32
    %145 = vector.broadcast %cst_61 : f32 to vector<16x256xf32>
    %146 = arith.maximumf %144, %145 : vector<16x256xf32>
    %c0_62 = arith.constant 0 : index
    %c0_63 = arith.constant 0 : index
    %c0_64 = arith.constant 0 : index
    %147 = vector.load %arg11[%c0_62, %c0_63, %c0_64] : memref<2x256x32xf32, #tpu.memory_space<vmem>>, vector<1x256x32xf32>
    %148 = vector.shape_cast %147 : vector<1x256x32xf32> to vector<256x32xf32>
    %cst_65 = arith.constant dense<0.000000e+00> : vector<16x32xf32>
    %149 = tpu.matmul %146, %148, %cst_65 {dimension_numbers = #tpu.dot_dimension_numbers<[1], [0], [0], [1], [0, 0, 1, 1], [], []>} : vector<16x256xf32>, vector<256x32xf32>, vector<16x32xf32> -> vector<16x32xf32>
    %c0_66 = arith.constant 0 : index
    %c0_67 = arith.constant 0 : index
    %c0_68 = arith.constant 0 : index
    %150 = vector.load %arg12[%c0_66, %c0_67, %c0_68] : memref<2x1x32xf32, #tpu.memory_space<vmem>>, vector<1x1x32xf32>
    %151 = vector.shape_cast %150 : vector<1x1x32xf32> to vector<1x32xf32>
    %152 = vector.broadcast %151 : vector<1x32xf32> to vector<16x32xf32>
    %153 = arith.addf %149, %152 : vector<16x32xf32>
    %154 = arith.addf %137, %153 : vector<16x32xf32>
    %c0_69 = arith.constant 0 : index
    %c0_70 = arith.constant 0 : index
    %c0_71 = arith.constant 0 : index
    %155 = vector.load %arg13[%c0_69, %c0_70, %c0_71] : memref<2x1x32xf32, #tpu.memory_space<vmem>>, vector<1x1x32xf32>
    %156 = vector.shape_cast %155 : vector<1x1x32xf32> to vector<1x32xf32>
    %c0_72 = arith.constant 0 : index
    %c0_73 = arith.constant 0 : index
    %c0_74 = arith.constant 0 : index
    %157 = vector.load %arg14[%c0_72, %c0_73, %c0_74] : memref<2x1x32xf32, #tpu.memory_space<vmem>>, vector<1x1x32xf32>
    %158 = vector.shape_cast %157 : vector<1x1x32xf32> to vector<1x32xf32>
    %cst_75 = arith.constant dense<0.000000e+00> : vector<16xf32>
    %159 = vector.multi_reduction <add>, %154, %cst_75 [1] : vector<16x32xf32> to vector<16xf32>
    %160 = vector.shape_cast %159 : vector<16xf32> to vector<16x1xf32>
    %cst_76 = arith.constant 3.200000e+01 : f32
    %161 = vector.broadcast %cst_76 : f32 to vector<16x1xf32>
    %162 = arith.divf %160, %161 : vector<16x1xf32>
    %163 = vector.broadcast %162 : vector<16x1xf32> to vector<16x32xf32>
    %164 = arith.subf %154, %163 : vector<16x32xf32>
    %165 = arith.mulf %164, %164 : vector<16x32xf32>
    %cst_77 = arith.constant dense<0.000000e+00> : vector<16xf32>
    %166 = vector.multi_reduction <add>, %165, %cst_77 [1] : vector<16x32xf32> to vector<16xf32>
    %167 = vector.shape_cast %166 : vector<16xf32> to vector<16x1xf32>
    %cst_78 = arith.constant 3.200000e+01 : f32
    %168 = vector.broadcast %cst_78 : f32 to vector<16x1xf32>
    %169 = arith.divf %167, %168 : vector<16x1xf32>
    %170 = vector.broadcast %162 : vector<16x1xf32> to vector<16x32xf32>
    %171 = arith.subf %154, %170 : vector<16x32xf32>
    %cst_79 = arith.constant 9.99999974E-6 : f32
    %172 = vector.broadcast %cst_79 : f32 to vector<16x1xf32>
    %173 = arith.addf %169, %172 : vector<16x1xf32>
    %174 = math.rsqrt %173 : vector<16x1xf32>
    %175 = vector.broadcast %174 : vector<16x1xf32> to vector<16x32xf32>
    %176 = arith.mulf %171, %175 : vector<16x32xf32>
    %177 = vector.broadcast %156 : vector<1x32xf32> to vector<16x32xf32>
    %178 = arith.mulf %176, %177 : vector<16x32xf32>
    %179 = vector.broadcast %158 : vector<1x32xf32> to vector<16x32xf32>
    %180 = arith.addf %178, %179 : vector<16x32xf32>
    %c1 = arith.constant 1 : index
    %c0_80 = arith.constant 0 : index
    %c0_81 = arith.constant 0 : index
    %181 = vector.load %arg3[%c1, %c0_80, %c0_81] : memref<2x32x96xf32, #tpu.memory_space<vmem>>, vector<1x32x96xf32>
    %182 = vector.shape_cast %181 : vector<1x32x96xf32> to vector<32x96xf32>
    %c1_82 = arith.constant 1 : index
    %c0_83 = arith.constant 0 : index
    %c0_84 = arith.constant 0 : index
    %183 = vector.load %arg4[%c1_82, %c0_83, %c0_84] : memref<2x1x96xf32, #tpu.memory_space<vmem>>, vector<1x1x96xf32>
    %184 = vector.shape_cast %183 : vector<1x1x96xf32> to vector<1x96xf32>
    %c1_85 = arith.constant 1 : index
    %c0_86 = arith.constant 0 : index
    %c0_87 = arith.constant 0 : index
    %185 = vector.load %arg5[%c1_85, %c0_86, %c0_87] : memref<2x32x32xf32, #tpu.memory_space<vmem>>, vector<1x32x32xf32>
    %186 = vector.shape_cast %185 : vector<1x32x32xf32> to vector<32x32xf32>
    %cst_88 = arith.constant dense<0.000000e+00> : vector<16x96xf32>
    %187 = tpu.matmul %180, %182, %cst_88 {dimension_numbers = #tpu.dot_dimension_numbers<[1], [0], [0], [1], [0, 0, 1, 1], [], []>} : vector<16x32xf32>, vector<32x96xf32>, vector<16x96xf32> -> vector<16x96xf32>
    %188 = vector.broadcast %184 : vector<1x96xf32> to vector<16x96xf32>
    %189 = arith.addf %187, %188 : vector<16x96xf32>
    %cst_89 = arith.constant 0.000000e+00 : f32
    %190 = vector.broadcast %cst_89 : f32 to vector<16x32xf32>
    %191 = vector.extract_strided_slice %189 {offsets = [0, 0], sizes = [16, 8], strides = [1, 1]} : vector<16x96xf32> to vector<16x8xf32>
    %192 = vector.shape_cast %191 : vector<16x8xf32> to vector<2x8x8xf32>
    %193 = vector.extract_strided_slice %189 {offsets = [0, 32], sizes = [16, 8], strides = [1, 1]} : vector<16x96xf32> to vector<16x8xf32>
    %194 = vector.shape_cast %193 : vector<16x8xf32> to vector<2x8x8xf32>
    %195 = vector.extract_strided_slice %189 {offsets = [0, 64], sizes = [16, 8], strides = [1, 1]} : vector<16x96xf32> to vector<16x8xf32>
    %196 = vector.shape_cast %195 : vector<16x8xf32> to vector<2x8x8xf32>
    "tpu.trace_start"() <{level = 10 : i32, message = "bqd,bkd->bqk"}> : () -> ()
    %cst_90 = arith.constant dense<0.000000e+00> : vector<2x8x8xf32>
    %197 = tpu.matmul %192, %194, %cst_90 {dimension_numbers = #tpu.dot_dimension_numbers<[2], [2], [1], [1], [0, 0, 0, 1, 1, 1], [0], [0]>} : vector<2x8x8xf32>, vector<2x8x8xf32>, vector<2x8x8xf32> -> vector<2x8x8xf32>
    "tpu.trace_stop"() : () -> ()
    %cst_91 = arith.constant 0.353553385 : f32
    %198 = vector.broadcast %cst_91 : f32 to vector<2x8x8xf32>
    %199 = arith.mulf %197, %198 : vector<2x8x8xf32>
    %cst_92 = arith.constant dense<0xFF800000> : vector<2x8xf32>
    %200 = vector.multi_reduction <maximumf>, %199, %cst_92 [2] : vector<2x8x8xf32> to vector<2x8xf32>
    %201 = vector.shape_cast %200 : vector<2x8xf32> to vector<2x8x1xf32>
    %202 = vector.broadcast %201 : vector<2x8x1xf32> to vector<2x8x8xf32>
    %203 = arith.subf %199, %202 : vector<2x8x8xf32>
    %204 = math.exp %203 : vector<2x8x8xf32>
    %cst_93 = arith.constant dense<0.000000e+00> : vector<2x8xf32>
    %205 = vector.multi_reduction <add>, %204, %cst_93 [2] : vector<2x8x8xf32> to vector<2x8xf32>
    %206 = vector.shape_cast %205 : vector<2x8xf32> to vector<2x8x1xf32>
    %207 = vector.broadcast %206 : vector<2x8x1xf32> to vector<2x8x8xf32>
    %208 = arith.divf %204, %207 : vector<2x8x8xf32>
    "tpu.trace_start"() <{level = 10 : i32, message = "bqk,bkd->bqd"}> : () -> ()
    %cst_94 = arith.constant dense<0.000000e+00> : vector<2x8x8xf32>
    %209 = tpu.matmul %208, %196, %cst_94 {dimension_numbers = #tpu.dot_dimension_numbers<[2], [1], [1], [2], [0, 0, 0, 1, 1, 2], [0], [0]>} : vector<2x8x8xf32>, vector<2x8x8xf32>, vector<2x8x8xf32> -> vector<2x8x8xf32>
    "tpu.trace_stop"() : () -> ()
    %210 = vector.shape_cast %209 : vector<2x8x8xf32> to vector<16x8xf32>
    %211 = vector.extract_strided_slice %186 {offsets = [0, 0], sizes = [8, 32], strides = [1, 1]} : vector<32x32xf32> to vector<8x32xf32>
    %cst_95 = arith.constant dense<0.000000e+00> : vector<16x32xf32>
    %212 = tpu.matmul %210, %211, %cst_95 {dimension_numbers = #tpu.dot_dimension_numbers<[1], [0], [0], [1], [0, 0, 1, 1], [], []>} : vector<16x8xf32>, vector<8x32xf32>, vector<16x32xf32> -> vector<16x32xf32>
    %213 = arith.addf %190, %212 : vector<16x32xf32>
    %214 = vector.extract_strided_slice %189 {offsets = [0, 8], sizes = [16, 8], strides = [1, 1]} : vector<16x96xf32> to vector<16x8xf32>
    %215 = vector.shape_cast %214 : vector<16x8xf32> to vector<2x8x8xf32>
    %216 = vector.extract_strided_slice %189 {offsets = [0, 40], sizes = [16, 8], strides = [1, 1]} : vector<16x96xf32> to vector<16x8xf32>
    %217 = vector.shape_cast %216 : vector<16x8xf32> to vector<2x8x8xf32>
    %218 = vector.extract_strided_slice %189 {offsets = [0, 72], sizes = [16, 8], strides = [1, 1]} : vector<16x96xf32> to vector<16x8xf32>
    %219 = vector.shape_cast %218 : vector<16x8xf32> to vector<2x8x8xf32>
    "tpu.trace_start"() <{level = 10 : i32, message = "bqd,bkd->bqk"}> : () -> ()
    %cst_96 = arith.constant dense<0.000000e+00> : vector<2x8x8xf32>
    %220 = tpu.matmul %215, %217, %cst_96 {dimension_numbers = #tpu.dot_dimension_numbers<[2], [2], [1], [1], [0, 0, 0, 1, 1, 1], [0], [0]>} : vector<2x8x8xf32>, vector<2x8x8xf32>, vector<2x8x8xf32> -> vector<2x8x8xf32>
    "tpu.trace_stop"() : () -> ()
    %cst_97 = arith.constant 0.353553385 : f32
    %221 = vector.broadcast %cst_97 : f32 to vector<2x8x8xf32>
    %222 = arith.mulf %220, %221 : vector<2x8x8xf32>
    %cst_98 = arith.constant dense<0xFF800000> : vector<2x8xf32>
    %223 = vector.multi_reduction <maximumf>, %222, %cst_98 [2] : vector<2x8x8xf32> to vector<2x8xf32>
    %224 = vector.shape_cast %223 : vector<2x8xf32> to vector<2x8x1xf32>
    %225 = vector.broadcast %224 : vector<2x8x1xf32> to vector<2x8x8xf32>
    %226 = arith.subf %222, %225 : vector<2x8x8xf32>
    %227 = math.exp %226 : vector<2x8x8xf32>
    %cst_99 = arith.constant dense<0.000000e+00> : vector<2x8xf32>
    %228 = vector.multi_reduction <add>, %227, %cst_99 [2] : vector<2x8x8xf32> to vector<2x8xf32>
    %229 = vector.shape_cast %228 : vector<2x8xf32> to vector<2x8x1xf32>
    %230 = vector.broadcast %229 : vector<2x8x1xf32> to vector<2x8x8xf32>
    %231 = arith.divf %227, %230 : vector<2x8x8xf32>
    "tpu.trace_start"() <{level = 10 : i32, message = "bqk,bkd->bqd"}> : () -> ()
    %cst_100 = arith.constant dense<0.000000e+00> : vector<2x8x8xf32>
    %232 = tpu.matmul %231, %219, %cst_100 {dimension_numbers = #tpu.dot_dimension_numbers<[2], [1], [1], [2], [0, 0, 0, 1, 1, 2], [0], [0]>} : vector<2x8x8xf32>, vector<2x8x8xf32>, vector<2x8x8xf32> -> vector<2x8x8xf32>
    "tpu.trace_stop"() : () -> ()
    %233 = vector.shape_cast %232 : vector<2x8x8xf32> to vector<16x8xf32>
    %234 = vector.extract_strided_slice %186 {offsets = [8, 0], sizes = [8, 32], strides = [1, 1]} : vector<32x32xf32> to vector<8x32xf32>
    %cst_101 = arith.constant dense<0.000000e+00> : vector<16x32xf32>
    %235 = tpu.matmul %233, %234, %cst_101 {dimension_numbers = #tpu.dot_dimension_numbers<[1], [0], [0], [1], [0, 0, 1, 1], [], []>} : vector<16x8xf32>, vector<8x32xf32>, vector<16x32xf32> -> vector<16x32xf32>
    %236 = arith.addf %213, %235 : vector<16x32xf32>
    %237 = vector.extract_strided_slice %189 {offsets = [0, 16], sizes = [16, 8], strides = [1, 1]} : vector<16x96xf32> to vector<16x8xf32>
    %238 = vector.shape_cast %237 : vector<16x8xf32> to vector<2x8x8xf32>
    %239 = vector.extract_strided_slice %189 {offsets = [0, 48], sizes = [16, 8], strides = [1, 1]} : vector<16x96xf32> to vector<16x8xf32>
    %240 = vector.shape_cast %239 : vector<16x8xf32> to vector<2x8x8xf32>
    %241 = vector.extract_strided_slice %189 {offsets = [0, 80], sizes = [16, 8], strides = [1, 1]} : vector<16x96xf32> to vector<16x8xf32>
    %242 = vector.shape_cast %241 : vector<16x8xf32> to vector<2x8x8xf32>
    "tpu.trace_start"() <{level = 10 : i32, message = "bqd,bkd->bqk"}> : () -> ()
    %cst_102 = arith.constant dense<0.000000e+00> : vector<2x8x8xf32>
    %243 = tpu.matmul %238, %240, %cst_102 {dimension_numbers = #tpu.dot_dimension_numbers<[2], [2], [1], [1], [0, 0, 0, 1, 1, 1], [0], [0]>} : vector<2x8x8xf32>, vector<2x8x8xf32>, vector<2x8x8xf32> -> vector<2x8x8xf32>
    "tpu.trace_stop"() : () -> ()
    %cst_103 = arith.constant 0.353553385 : f32
    %244 = vector.broadcast %cst_103 : f32 to vector<2x8x8xf32>
    %245 = arith.mulf %243, %244 : vector<2x8x8xf32>
    %cst_104 = arith.constant dense<0xFF800000> : vector<2x8xf32>
    %246 = vector.multi_reduction <maximumf>, %245, %cst_104 [2] : vector<2x8x8xf32> to vector<2x8xf32>
    %247 = vector.shape_cast %246 : vector<2x8xf32> to vector<2x8x1xf32>
    %248 = vector.broadcast %247 : vector<2x8x1xf32> to vector<2x8x8xf32>
    %249 = arith.subf %245, %248 : vector<2x8x8xf32>
    %250 = math.exp %249 : vector<2x8x8xf32>
    %cst_105 = arith.constant dense<0.000000e+00> : vector<2x8xf32>
    %251 = vector.multi_reduction <add>, %250, %cst_105 [2] : vector<2x8x8xf32> to vector<2x8xf32>
    %252 = vector.shape_cast %251 : vector<2x8xf32> to vector<2x8x1xf32>
    %253 = vector.broadcast %252 : vector<2x8x1xf32> to vector<2x8x8xf32>
    %254 = arith.divf %250, %253 : vector<2x8x8xf32>
    "tpu.trace_start"() <{level = 10 : i32, message = "bqk,bkd->bqd"}> : () -> ()
    %cst_106 = arith.constant dense<0.000000e+00> : vector<2x8x8xf32>
    %255 = tpu.matmul %254, %242, %cst_106 {dimension_numbers = #tpu.dot_dimension_numbers<[2], [1], [1], [2], [0, 0, 0, 1, 1, 2], [0], [0]>} : vector<2x8x8xf32>, vector<2x8x8xf32>, vector<2x8x8xf32> -> vector<2x8x8xf32>
    "tpu.trace_stop"() : () -> ()
    %256 = vector.shape_cast %255 : vector<2x8x8xf32> to vector<16x8xf32>
    %257 = vector.extract_strided_slice %186 {offsets = [16, 0], sizes = [8, 32], strides = [1, 1]} : vector<32x32xf32> to vector<8x32xf32>
    %cst_107 = arith.constant dense<0.000000e+00> : vector<16x32xf32>
    %258 = tpu.matmul %256, %257, %cst_107 {dimension_numbers = #tpu.dot_dimension_numbers<[1], [0], [0], [1], [0, 0, 1, 1], [], []>} : vector<16x8xf32>, vector<8x32xf32>, vector<16x32xf32> -> vector<16x32xf32>
    %259 = arith.addf %236, %258 : vector<16x32xf32>
    %260 = vector.extract_strided_slice %189 {offsets = [0, 24], sizes = [16, 8], strides = [1, 1]} : vector<16x96xf32> to vector<16x8xf32>
    %261 = vector.shape_cast %260 : vector<16x8xf32> to vector<2x8x8xf32>
    %262 = vector.extract_strided_slice %189 {offsets = [0, 56], sizes = [16, 8], strides = [1, 1]} : vector<16x96xf32> to vector<16x8xf32>
    %263 = vector.shape_cast %262 : vector<16x8xf32> to vector<2x8x8xf32>
    %264 = vector.extract_strided_slice %189 {offsets = [0, 88], sizes = [16, 8], strides = [1, 1]} : vector<16x96xf32> to vector<16x8xf32>
    %265 = vector.shape_cast %264 : vector<16x8xf32> to vector<2x8x8xf32>
    "tpu.trace_start"() <{level = 10 : i32, message = "bqd,bkd->bqk"}> : () -> ()
    %cst_108 = arith.constant dense<0.000000e+00> : vector<2x8x8xf32>
    %266 = tpu.matmul %261, %263, %cst_108 {dimension_numbers = #tpu.dot_dimension_numbers<[2], [2], [1], [1], [0, 0, 0, 1, 1, 1], [0], [0]>} : vector<2x8x8xf32>, vector<2x8x8xf32>, vector<2x8x8xf32> -> vector<2x8x8xf32>
    "tpu.trace_stop"() : () -> ()
    %cst_109 = arith.constant 0.353553385 : f32
    %267 = vector.broadcast %cst_109 : f32 to vector<2x8x8xf32>
    %268 = arith.mulf %266, %267 : vector<2x8x8xf32>
    %cst_110 = arith.constant dense<0xFF800000> : vector<2x8xf32>
    %269 = vector.multi_reduction <maximumf>, %268, %cst_110 [2] : vector<2x8x8xf32> to vector<2x8xf32>
    %270 = vector.shape_cast %269 : vector<2x8xf32> to vector<2x8x1xf32>
    %271 = vector.broadcast %270 : vector<2x8x1xf32> to vector<2x8x8xf32>
    %272 = arith.subf %268, %271 : vector<2x8x8xf32>
    %273 = math.exp %272 : vector<2x8x8xf32>
    %cst_111 = arith.constant dense<0.000000e+00> : vector<2x8xf32>
    %274 = vector.multi_reduction <add>, %273, %cst_111 [2] : vector<2x8x8xf32> to vector<2x8xf32>
    %275 = vector.shape_cast %274 : vector<2x8xf32> to vector<2x8x1xf32>
    %276 = vector.broadcast %275 : vector<2x8x1xf32> to vector<2x8x8xf32>
    %277 = arith.divf %273, %276 : vector<2x8x8xf32>
    "tpu.trace_start"() <{level = 10 : i32, message = "bqk,bkd->bqd"}> : () -> ()
    %cst_112 = arith.constant dense<0.000000e+00> : vector<2x8x8xf32>
    %278 = tpu.matmul %277, %265, %cst_112 {dimension_numbers = #tpu.dot_dimension_numbers<[2], [1], [1], [2], [0, 0, 0, 1, 1, 2], [0], [0]>} : vector<2x8x8xf32>, vector<2x8x8xf32>, vector<2x8x8xf32> -> vector<2x8x8xf32>
    "tpu.trace_stop"() : () -> ()
    %279 = vector.shape_cast %278 : vector<2x8x8xf32> to vector<16x8xf32>
    %280 = vector.extract_strided_slice %186 {offsets = [24, 0], sizes = [8, 32], strides = [1, 1]} : vector<32x32xf32> to vector<8x32xf32>
    %cst_113 = arith.constant dense<0.000000e+00> : vector<16x32xf32>
    %281 = tpu.matmul %279, %280, %cst_113 {dimension_numbers = #tpu.dot_dimension_numbers<[1], [0], [0], [1], [0, 0, 1, 1], [], []>} : vector<16x8xf32>, vector<8x32xf32>, vector<16x32xf32> -> vector<16x32xf32>
    %282 = arith.addf %259, %281 : vector<16x32xf32>
    %283 = arith.addf %180, %282 : vector<16x32xf32>
    %c1_114 = arith.constant 1 : index
    %c0_115 = arith.constant 0 : index
    %c0_116 = arith.constant 0 : index
    %284 = vector.load %arg6[%c1_114, %c0_115, %c0_116] : memref<2x1x32xf32, #tpu.memory_space<vmem>>, vector<1x1x32xf32>
    %285 = vector.shape_cast %284 : vector<1x1x32xf32> to vector<1x32xf32>
    %286 = vector.broadcast %285 : vector<1x32xf32> to vector<16x32xf32>
    %287 = arith.addf %283, %286 : vector<16x32xf32>
    %c1_117 = arith.constant 1 : index
    %c0_118 = arith.constant 0 : index
    %c0_119 = arith.constant 0 : index
    %288 = vector.load %arg7[%c1_117, %c0_118, %c0_119] : memref<2x1x32xf32, #tpu.memory_space<vmem>>, vector<1x1x32xf32>
    %289 = vector.shape_cast %288 : vector<1x1x32xf32> to vector<1x32xf32>
    %c1_120 = arith.constant 1 : index
    %c0_121 = arith.constant 0 : index
    %c0_122 = arith.constant 0 : index
    %290 = vector.load %arg8[%c1_120, %c0_121, %c0_122] : memref<2x1x32xf32, #tpu.memory_space<vmem>>, vector<1x1x32xf32>
    %291 = vector.shape_cast %290 : vector<1x1x32xf32> to vector<1x32xf32>
    %cst_123 = arith.constant dense<0.000000e+00> : vector<16xf32>
    %292 = vector.multi_reduction <add>, %287, %cst_123 [1] : vector<16x32xf32> to vector<16xf32>
    %293 = vector.shape_cast %292 : vector<16xf32> to vector<16x1xf32>
    %cst_124 = arith.constant 3.200000e+01 : f32
    %294 = vector.broadcast %cst_124 : f32 to vector<16x1xf32>
    %295 = arith.divf %293, %294 : vector<16x1xf32>
    %296 = vector.broadcast %295 : vector<16x1xf32> to vector<16x32xf32>
    %297 = arith.subf %287, %296 : vector<16x32xf32>
    %298 = arith.mulf %297, %297 : vector<16x32xf32>
    %cst_125 = arith.constant dense<0.000000e+00> : vector<16xf32>
    %299 = vector.multi_reduction <add>, %298, %cst_125 [1] : vector<16x32xf32> to vector<16xf32>
    %300 = vector.shape_cast %299 : vector<16xf32> to vector<16x1xf32>
    %cst_126 = arith.constant 3.200000e+01 : f32
    %301 = vector.broadcast %cst_126 : f32 to vector<16x1xf32>
    %302 = arith.divf %300, %301 : vector<16x1xf32>
    %303 = vector.broadcast %295 : vector<16x1xf32> to vector<16x32xf32>
    %304 = arith.subf %287, %303 : vector<16x32xf32>
    %cst_127 = arith.constant 9.99999974E-6 : f32
    %305 = vector.broadcast %cst_127 : f32 to vector<16x1xf32>
    %306 = arith.addf %302, %305 : vector<16x1xf32>
    %307 = math.rsqrt %306 : vector<16x1xf32>
    %308 = vector.broadcast %307 : vector<16x1xf32> to vector<16x32xf32>
    %309 = arith.mulf %304, %308 : vector<16x32xf32>
    %310 = vector.broadcast %289 : vector<1x32xf32> to vector<16x32xf32>
    %311 = arith.mulf %309, %310 : vector<16x32xf32>
    %312 = vector.broadcast %291 : vector<1x32xf32> to vector<16x32xf32>
    %313 = arith.addf %311, %312 : vector<16x32xf32>
    %c1_128 = arith.constant 1 : index
    %c0_129 = arith.constant 0 : index
    %c0_130 = arith.constant 0 : index
    %314 = vector.load %arg9[%c1_128, %c0_129, %c0_130] : memref<2x32x256xf32, #tpu.memory_space<vmem>>, vector<1x32x256xf32>
    %315 = vector.shape_cast %314 : vector<1x32x256xf32> to vector<32x256xf32>
    %cst_131 = arith.constant dense<0.000000e+00> : vector<16x256xf32>
    %316 = tpu.matmul %313, %315, %cst_131 {dimension_numbers = #tpu.dot_dimension_numbers<[1], [0], [0], [1], [0, 0, 1, 1], [], []>} : vector<16x32xf32>, vector<32x256xf32>, vector<16x256xf32> -> vector<16x256xf32>
    %c1_132 = arith.constant 1 : index
    %c0_133 = arith.constant 0 : index
    %c0_134 = arith.constant 0 : index
    %317 = vector.load %arg10[%c1_132, %c0_133, %c0_134] : memref<2x1x256xf32, #tpu.memory_space<vmem>>, vector<1x1x256xf32>
    %318 = vector.shape_cast %317 : vector<1x1x256xf32> to vector<1x256xf32>
    %319 = vector.broadcast %318 : vector<1x256xf32> to vector<16x256xf32>
    %320 = arith.addf %316, %319 : vector<16x256xf32>
    %cst_135 = arith.constant 0.000000e+00 : f32
    %321 = vector.broadcast %cst_135 : f32 to vector<16x256xf32>
    %322 = arith.maximumf %320, %321 : vector<16x256xf32>
    %c1_136 = arith.constant 1 : index
    %c0_137 = arith.constant 0 : index
    %c0_138 = arith.constant 0 : index
    %323 = vector.load %arg11[%c1_136, %c0_137, %c0_138] : memref<2x256x32xf32, #tpu.memory_space<vmem>>, vector<1x256x32xf32>
    %324 = vector.shape_cast %323 : vector<1x256x32xf32> to vector<256x32xf32>
    %cst_139 = arith.constant dense<0.000000e+00> : vector<16x32xf32>
    %325 = tpu.matmul %322, %324, %cst_139 {dimension_numbers = #tpu.dot_dimension_numbers<[1], [0], [0], [1], [0, 0, 1, 1], [], []>} : vector<16x256xf32>, vector<256x32xf32>, vector<16x32xf32> -> vector<16x32xf32>
    %c1_140 = arith.constant 1 : index
    %c0_141 = arith.constant 0 : index
    %c0_142 = arith.constant 0 : index
    %326 = vector.load %arg12[%c1_140, %c0_141, %c0_142] : memref<2x1x32xf32, #tpu.memory_space<vmem>>, vector<1x1x32xf32>
    %327 = vector.shape_cast %326 : vector<1x1x32xf32> to vector<1x32xf32>
    %328 = vector.broadcast %327 : vector<1x32xf32> to vector<16x32xf32>
    %329 = arith.addf %325, %328 : vector<16x32xf32>
    %330 = arith.addf %313, %329 : vector<16x32xf32>
    %c1_143 = arith.constant 1 : index
    %c0_144 = arith.constant 0 : index
    %c0_145 = arith.constant 0 : index
    %331 = vector.load %arg13[%c1_143, %c0_144, %c0_145] : memref<2x1x32xf32, #tpu.memory_space<vmem>>, vector<1x1x32xf32>
    %332 = vector.shape_cast %331 : vector<1x1x32xf32> to vector<1x32xf32>
    %c1_146 = arith.constant 1 : index
    %c0_147 = arith.constant 0 : index
    %c0_148 = arith.constant 0 : index
    %333 = vector.load %arg14[%c1_146, %c0_147, %c0_148] : memref<2x1x32xf32, #tpu.memory_space<vmem>>, vector<1x1x32xf32>
    %334 = vector.shape_cast %333 : vector<1x1x32xf32> to vector<1x32xf32>
    %cst_149 = arith.constant dense<0.000000e+00> : vector<16xf32>
    %335 = vector.multi_reduction <add>, %330, %cst_149 [1] : vector<16x32xf32> to vector<16xf32>
    %336 = vector.shape_cast %335 : vector<16xf32> to vector<16x1xf32>
    %cst_150 = arith.constant 3.200000e+01 : f32
    %337 = vector.broadcast %cst_150 : f32 to vector<16x1xf32>
    %338 = arith.divf %336, %337 : vector<16x1xf32>
    %339 = vector.broadcast %338 : vector<16x1xf32> to vector<16x32xf32>
    %340 = arith.subf %330, %339 : vector<16x32xf32>
    %341 = arith.mulf %340, %340 : vector<16x32xf32>
    %cst_151 = arith.constant dense<0.000000e+00> : vector<16xf32>
    %342 = vector.multi_reduction <add>, %341, %cst_151 [1] : vector<16x32xf32> to vector<16xf32>
    %343 = vector.shape_cast %342 : vector<16xf32> to vector<16x1xf32>
    %cst_152 = arith.constant 3.200000e+01 : f32
    %344 = vector.broadcast %cst_152 : f32 to vector<16x1xf32>
    %345 = arith.divf %343, %344 : vector<16x1xf32>
    %346 = vector.broadcast %338 : vector<16x1xf32> to vector<16x32xf32>
    %347 = arith.subf %330, %346 : vector<16x32xf32>
    %cst_153 = arith.constant 9.99999974E-6 : f32
    %348 = vector.broadcast %cst_153 : f32 to vector<16x1xf32>
    %349 = arith.addf %345, %348 : vector<16x1xf32>
    %350 = math.rsqrt %349 : vector<16x1xf32>
    %351 = vector.broadcast %350 : vector<16x1xf32> to vector<16x32xf32>
    %352 = arith.mulf %347, %351 : vector<16x32xf32>
    %353 = vector.broadcast %332 : vector<1x32xf32> to vector<16x32xf32>
    %354 = arith.mulf %352, %353 : vector<16x32xf32>
    %355 = vector.broadcast %334 : vector<1x32xf32> to vector<16x32xf32>
    %356 = arith.addf %354, %355 : vector<16x32xf32>
    %c0_154 = arith.constant 0 : index
    %c0_155 = arith.constant 0 : index
    %357 = vector.load %arg15[%c0_154, %c0_155] : memref<32x128xf32, #tpu.memory_space<vmem>>, vector<32x128xf32>
    %cst_156 = arith.constant dense<0.000000e+00> : vector<16x128xf32>
    %358 = tpu.matmul %356, %357, %cst_156 {dimension_numbers = #tpu.dot_dimension_numbers<[1], [0], [0], [1], [0, 0, 1, 1], [], []>} : vector<16x32xf32>, vector<32x128xf32>, vector<16x128xf32> -> vector<16x128xf32>
    %c0_157 = arith.constant 0 : index
    %c0_158 = arith.constant 0 : index
    %359 = vector.load %arg16[%c0_157, %c0_158] : memref<1x128xf32, #tpu.memory_space<vmem>>, vector<1x128xf32>
    %360 = vector.broadcast %359 : vector<1x128xf32> to vector<16x128xf32>
    %361 = arith.addf %358, %360 : vector<16x128xf32>
    %c0_159 = arith.constant 0 : index
    %c0_160 = arith.constant 0 : index
    %362 = vector.load %arg17[%c0_159, %c0_160] : memref<16x128xf32, #tpu.memory_space<vmem>>, vector<16x128xf32>
    tpu.vector_store %arg17[%c0_159, %c0_160], %361 {strides = array<i32>} : memref<16x128xf32, #tpu.memory_space<vmem>>, vector<16x128xf32>,
    return
  }
}

</mosaic_0001>

<llo_original>
// kernel: transformer_forward.1
$region0: #{transformer_forward.1}
  #allocation0 [shape = 'u32[]', space=smem, size = 0x4, offset = 0x4, fixed_abs, tag = 'smem constant byte address 0x4 - core index']
  #allocation1 [shape = 'u32[144,128]{1,0:T(1,128)}', space=vmem, size = 0x12000, scoped, tag = 'internal scratch']
  %s0 = inlined_call_operand.vmem [shape: f32[16,4], index: 0, kind: input, shape index: {}]
  %s1 = inlined_call_operand.vmem [shape: f32[16,32], index: 1, kind: input, shape index: {}]
  %s2 = inlined_call_operand.vmem [shape: f32[4,32], index: 2, kind: input, shape index: {}]
  %s3 = inlined_call_operand.vmem [shape: f32[2,32,96], index: 3, kind: input, shape index: {}]
  %s4 = inlined_call_operand.vmem [shape: f32[2,1,96], index: 4, kind: input, shape index: {}]
  %s5 = inlined_call_operand.vmem [shape: f32[2,32,32], index: 5, kind: input, shape index: {}]
  %s6 = inlined_call_operand.vmem [shape: f32[2,1,32], index: 6, kind: input, shape index: {}]
  %s7 = inlined_call_operand.vmem [shape: f32[2,1,32], index: 7, kind: input, shape index: {}]
  %s8 = inlined_call_operand.vmem [shape: f32[2,1,32], index: 8, kind: input, shape index: {}]
  %s9 = inlined_call_operand.vmem [shape: f32[2,32,256], index: 9, kind: input, shape index: {}]
  %s10 = inlined_call_operand.vmem [shape: f32[2,1,256], index: 10, kind: input, shape index: {}]
  %s11 = inlined_call_operand.vmem [shape: f32[2,256,32], index: 11, kind: input, shape index: {}]
  %s12 = inlined_call_operand.vmem [shape: f32[2,1,32], index: 12, kind: input, shape index: {}]
  %s13 = inlined_call_operand.vmem [shape: f32[2,1,32], index: 13, kind: input, shape index: {}]
  %s14 = inlined_call_operand.vmem [shape: f32[2,1,32], index: 14, kind: input, shape index: {}]
  %s15 = inlined_call_operand.vmem [shape: f32[32,128], index: 15, kind: input, shape index: {}]
  %s16 = inlined_call_operand.vmem [shape: f32[1,128], index: 16, kind: input, shape index: {}]
  %s17 = inlined_call_operand.vmem [shape: f32[16,128], index: 17, kind: output, shape index: {}]
  %s18 = sld [smem:[#allocation0]]
  $region78: #{transformer_forward.1} parent=0
    _
  %s20 = ssub.s32 1, %s18
  %s21 = scalar_select 0, %s20, %s18
  // Predicated region
  $region2: #{transformer_forward.1} parent=0 // pred_check
    _
  $region3: #{transformer_forward.1} parent=0 // pred_check_branch
    %23 = sbr.rel (0) target = $region5
  $region4: #{transformer_forward.1} parent=0 // pred_region
    _
  $region5: #{transformer_forward.1} parent=0 // pred_fallthru
    _
  // Predicated region
  $region6: #{transformer_forward.1} parent=0 // pred_check
    _
  $region7: #{transformer_forward.1} parent=0 // pred_check_branch
    %25 = sbr.rel (0) target = $region9
  $region8: #{transformer_forward.1} parent=0 // pred_region
    _
  $region9: #{transformer_forward.1} parent=0 // pred_fallthru
    _
  // Predicated region
  $region10: #{transformer_forward.1} parent=0 // pred_check
    _
  $region11: #{transformer_forward.1} parent=0 // pred_check_branch
    %27 = sbr.rel (0) target = $region13
  $region12: #{transformer_forward.1} parent=0 // pred_region
    _
  $region13: #{transformer_forward.1} parent=0 // pred_fallthru
    _
  // Predicated region
  $region14: #{transformer_forward.1} parent=0 // pred_check
    _
  $region15: #{transformer_forward.1} parent=0 // pred_check_branch
    %29 = sbr.rel (0) target = $region17
  $region16: #{transformer_forward.1} parent=0 // pred_region
    _
  $region17: #{transformer_forward.1} parent=0 // pred_fallthru
    _
  // Predicated region
  $region18: #{transformer_forward.1} parent=0 // pred_check
    _
  $region19: #{transformer_forward.1} parent=0 // pred_check_branch
    %31 = sbr.rel (0) target = $region21
  $region20: #{transformer_forward.1} parent=0 // pred_region
    _
  $region21: #{transformer_forward.1} parent=0 // pred_fallthru
    _
  // Predicated region
  $region22: #{transformer_forward.1} parent=0 // pred_check
    _
  $region23: #{transformer_forward.1} parent=0 // pred_check_branch
    %33 = sbr.rel (0) target = $region25
  $region24: #{transformer_forward.1} parent=0 // pred_region
    _
  $region25: #{transformer_forward.1} parent=0 // pred_fallthru
    _
  // Predicated region
  $region26: #{transformer_forward.1} parent=0 // pred_check
    _
  $region27: #{transformer_forward.1} parent=0 // pred_check_branch
    %35 = sbr.rel (0) target = $region29
  $region28: #{transformer_forward.1} parent=0 // pred_region
    _
  $region29: #{transformer_forward.1} parent=0 // pred_fallthru
    _
  // Predicated region
  $region30: #{transformer_forward.1} parent=0 // pred_check
    _
  $region31: #{transformer_forward.1} parent=0 // pred_check_branch
    %37 = sbr.rel (0) target = $region33
  $region32: #{transformer_forward.1} parent=0 // pred_region
    _
  $region33: #{transformer_forward.1} parent=0 // pred_fallthru
    _
  // Predicated region
  $region34: #{transformer_forward.1} parent=0 // pred_check
    _
  $region35: #{transformer_forward.1} parent=0 // pred_check_branch
    %39 = sbr.rel (0) target = $region37
  $region36: #{transformer_forward.1} parent=0 // pred_region
    _
  $region37: #{transformer_forward.1} parent=0 // pred_fallthru
    _
  // Predicated region
  $region38: #{transformer_forward.1} parent=0 // pred_check
    _
  $region39: #{transformer_forward.1} parent=0 // pred_check_branch
    %41 = sbr.rel (0) target = $region41
  $region40: #{transformer_forward.1} parent=0 // pred_region
    _
  $region41: #{transformer_forward.1} parent=0 // pred_fallthru
    _
  // Predicated region
  $region42: #{transformer_forward.1} parent=0 // pred_check
    _
  $region43: #{transformer_forward.1} parent=0 // pred_check_branch
    %43 = sbr.rel (0) target = $region45
  $region44: #{transformer_forward.1} parent=0 // pred_region
    _
  $region45: #{transformer_forward.1} parent=0 // pred_fallthru
    _
  // Predicated region
  $region46: #{transformer_forward.1} parent=0 // pred_check
    _
  $region47: #{transformer_forward.1} parent=0 // pred_check_branch
    %45 = sbr.rel (0) target = $region49
  $region48: #{transformer_forward.1} parent=0 // pred_region
    _
  $region49: #{transformer_forward.1} parent=0 // pred_fallthru
    _
  // Predicated region
  $region50: #{transformer_forward.1} parent=0 // pred_check
    _
  $region51: #{transformer_forward.1} parent=0 // pred_check_branch
    %47 = sbr.rel (0) target = $region53
  $region52: #{transformer_forward.1} parent=0 // pred_region
    _
  $region53: #{transformer_forward.1} parent=0 // pred_fallthru
    _
  // Predicated region
  $region54: #{transformer_forward.1} parent=0 // pred_check
    _
  $region55: #{transformer_forward.1} parent=0 // pred_check_branch
    %49 = sbr.rel (0) target = $region57
  $region56: #{transformer_forward.1} parent=0 // pred_region
    _
  $region57: #{transformer_forward.1} parent=0 // pred_fallthru
    _
  // Predicated region
  $region58: #{transformer_forward.1} parent=0 // pred_check
    _
  $region59: #{transformer_forward.1} parent=0 // pred_check_branch
    %51 = sbr.rel (0) target = $region61
  $region60: #{transformer_forward.1} parent=0 // pred_region
    _
  $region61: #{transformer_forward.1} parent=0 // pred_fallthru
    _
  // Predicated region
  $region62: #{transformer_forward.1} parent=0 // pred_check
    _
  $region63: #{transformer_forward.1} parent=0 // pred_check_branch
    %53 = sbr.rel (0) target = $region65
  $region64: #{transformer_forward.1} parent=0 // pred_region
    _
  $region65: #{transformer_forward.1} parent=0 // pred_fallthru
    _
  // Predicated region
  $region66: #{transformer_forward.1} parent=0 // pred_check
    _
  $region67: #{transformer_forward.1} parent=0 // pred_check_branch
    %55 = sbr.rel (0) target = $region69
  $region68: #{transformer_forward.1} parent=0 // pred_region
    _
  $region69: #{transformer_forward.1} parent=0 // pred_fallthru
    _
  %v56 = vld [vmem:[%s0] sm:$0xff]
  %v57 = vld [vmem:[%s0 + $0x8] sm:$0xff]
  %v58 = vld [vmem:[%s2] sm:$0xf]
  %v59 = vld [vmem:[%s1] sm:$0xff]
  %v60 = vld [vmem:[%s1 + $0x8] sm:$0xff]
  %vm61 = vcmask 31744
  %v63 = vsel %vm61, %v56, 0
  %v66 = vsel %vm61, %v57, 0
  %vm68 = vcmask 1043456
  %v70 = vsel %vm68, %v58, 0
  %72 = vmatprep.subr.mxu0 0.0
  %73 = vmatpush1.msra.mxu0 %v70
  %74 = vmatprep.subr.mxu0 0.0
  %75 = vmatpush1.msra.mxu0 0.0
  %76 = vmatprep.subr.mxu0 0.0
  %77 = vmatpush1.msra.mxu0 0.0
  %78 = vmatprep.subr.mxu0 0.0
  %79 = vmatpush1.msra.mxu0 0.0
  %80 = vmatprep.subr.mxu0 0.0
  %81 = vmatpush1.msra.mxu0 0.0
  %82 = vmatprep.subr.mxu0 0.0
  %83 = vmatpush1.msra.mxu0 0.0
  %84 = vmatprep.subr.mxu0 0.0
  %85 = vmatpush1.msra.mxu0 0.0
  %86 = vmatprep.subr.mxu0 0.0
  %87 = vmatpush1.msra.mxu0 0.0
  %88 = vmatprep.subr.mxu0 0.0
  %89 = vmatpush1.msra.mxu0 0.0
  %90 = vmatprep.subr.mxu0 0.0
  %91 = vmatpush1.msra.mxu0 0.0
  %92 = vmatprep.subr.mxu0 0.0
  %93 = vmatpush1.msra.mxu0 0.0
  %94 = vmatprep.subr.mxu0 0.0
  %95 = vmatpush1.msra.mxu0 0.0
  %96 = vmatprep.subr.mxu0 0.0
  %97 = vmatpush1.msra.mxu0 0.0
  %98 = vmatprep.subr.mxu0 0.0
  %99 = vmatpush1.msra.mxu0 0.0
  %100 = vmatprep.subr.mxu0 0.0
  %101 = vmatpush1.msra.mxu0 0.0
  %102 = vmatprep.subr.mxu0 0.0
  %103 = vmatpush1.msra.mxu0 0.0
  %104 = vmatprep.subr.mxu0 0.0
  %105 = vmatpush1.msra.mxu0 0.0
  %106 = vmatprep.subr.mxu0 0.0
  %107 = vmatpush1.msra.mxu0 0.0
  %108 = vmatprep.subr.mxu0 0.0
  %109 = vmatpush1.msra.mxu0 0.0
  %110 = vmatprep.subr.mxu0 0.0
  %111 = vmatpush1.msra.mxu0 0.0
  %112 = vmatprep.subr.mxu0 0.0
  %113 = vmatpush1.msra.mxu0 0.0
  %114 = vmatprep.subr.mxu0 0.0
  %115 = vmatpush1.msra.mxu0 0.0
  %116 = vmatprep.subr.mxu0 0.0
  %117 = vmatpush1.msra.mxu0 0.0
  %118 = vmatprep.subr.mxu0 0.0
  %119 = vmatpush1.msra.mxu0 0.0
  %120 = vmatprep.subr.mxu0 0.0
  %121 = vmatpush1.msra.mxu0 0.0
  %122 = vmatprep.subr.mxu0 0.0
  %123 = vmatpush1.msra.mxu0 0.0
  %124 = vmatprep.subr.mxu0 0.0
  %125 = vmatpush1.msra.mxu0 0.0
  %126 = vmatprep.subr.mxu0 0.0
  %127 = vmatpush1.msra.mxu0 0.0
  %128 = vmatprep.subr.mxu0 0.0
  %129 = vmatpush1.msra.mxu0 0.0
  %130 = vmatprep.subr.mxu0 0.0
  %131 = vmatpush1.msra.mxu0 0.0
  %132 = vmatprep.subr.mxu0 0.0
  %133 = vmatpush1.msra.mxu0 0.0
  %134 = vmatprep.subr.mxu0 0.0
  %135 = vmatpush1.msra.mxu0 0.0
  %136 = vmatprep.mubr.f32.mxu0 0.0
  %137 = vmatmul.mubr.f32.gmra.mrb[0].mxu0 %v63
  %v138 = vpop.f32.mrb[0].mxu0
  %v139 = vadd.f32 %v59, %v138
  %v140 = vpop.f32.mrb[0].mxu0
  %141 = vmatprep.mubr.f32.mxu0 0.0
  %142 = vmatmul.mubr.f32.gmra.mrb[0].mxu0 %v66
  %v143 = vpop.f32.mrb[0].mxu0
  %v144 = vadd.f32 %v60, %v143
  %v145 = vpop.f32.mrb[0].mxu0
  %146 = vdwg.mxu0
  %v147 = vld [vmem:[%s3] sm:$0xff]
  %v148 = vld [vmem:[%s3 + $0x8] sm:$0xff]
  %v149 = vld [vmem:[%s3 + $0x10] sm:$0xff]
  %v150 = vld [vmem:[%s3 + $0x18] sm:$0xff]
  %v151 = vld [vmem:[%s4] sm:$0x1]
  %v152 = vld [vmem:[%s5] sm:$0xff]
  %v153 = vld [vmem:[%s5 + $0x8] sm:$0xff]
  %v154 = vld [vmem:[%s5 + $0x10] sm:$0xff]
  %v155 = vld [vmem:[%s5 + $0x18] sm:$0xff]
  %v157 = vlaneseq
  %v158 = vshrl.u32 %v157, 7
  %v159 = vsub.s32 0, %v158
  %v160 = vrot.slane %v151, %v159
  %vm162 = vcmask 261120
  %v164 = vsel %vm162, %v139, 0
  %v167 = vsel %vm162, %v144, 0
  %169 = vmatprep.subr.mxu0 0.0
  %170 = vmatpush1.msra.mxu0 %v147
  %171 = vmatprep.subr.mxu0 0.0
  %172 = vmatpush1.msra.mxu0 %v148
  %173 = vmatprep.subr.mxu0 0.0
  %174 = vmatpush1.msra.mxu0 %v149
  %175 = vmatprep.subr.mxu0 0.0
  %176 = vmatpush1.msra.mxu0 %v150
  %177 = vmatprep.subr.mxu0 0.0
  %178 = vmatpush1.msra.mxu0 0.0
  %179 = vmatprep.subr.mxu0 0.0
  %180 = vmatpush1.msra.mxu0 0.0
  %181 = vmatprep.subr.mxu0 0.0
  %182 = vmatpush1.msra.mxu0 0.0
  %183 = vmatprep.subr.mxu0 0.0
  %184 = vmatpush1.msra.mxu0 0.0
  %185 = vmatprep.subr.mxu0 0.0
  %186 = vmatpush1.msra.mxu0 0.0
  %187 = vmatprep.subr.mxu0 0.0
  %188 = vmatpush1.msra.mxu0 0.0
  %189 = vmatprep.subr.mxu0 0.0
  %190 = vmatpush1.msra.mxu0 0.0
  %191 = vmatprep.subr.mxu0 0.0
  %192 = vmatpush1.msra.mxu0 0.0
  %193 = vmatprep.subr.mxu0 0.0
  %194 = vmatpush1.msra.mxu0 0.0
  %195 = vmatprep.subr.mxu0 0.0
  %196 = vmatpush1.msra.mxu0 0.0
  %197 = vmatprep.subr.mxu0 0.0
  %198 = vmatpush1.msra.mxu0 0.0
  %199 = vmatprep.subr.mxu0 0.0
  %200 = vmatpush1.msra.mxu0 0.0
  %201 = vmatprep.subr.mxu0 0.0
  %202 = vmatpush1.msra.mxu0 0.0
  %203 = vmatprep.subr.mxu0 0.0
  %204 = vmatpush1.msra.mxu0 0.0
  %205 = vmatprep.subr.mxu0 0.0
  %206 = vmatpush1.msra.mxu0 0.0
  %207 = vmatprep.subr.mxu0 0.0
  %208 = vmatpush1.msra.mxu0 0.0
  %209 = vmatprep.subr.mxu0 0.0
  %210 = vmatpush1.msra.mxu0 0.0
  %211 = vmatprep.subr.mxu0 0.0
  %212 = vmatpush1.msra.mxu0 0.0
  %213 = vmatprep.subr.mxu0 0.0
  %214 = vmatpush1.msra.mxu0 0.0
  %215 = vmatprep.subr.mxu0 0.0
  %216 = vmatpush1.msra.mxu0 0.0
  %217 = vmatprep.subr.mxu0 0.0
  %218 = vmatpush1.msra.mxu0 0.0
  %219 = vmatprep.subr.mxu0 0.0
  %220 = vmatpush1.msra.mxu0 0.0
  %221 = vmatprep.subr.mxu0 0.0
  %222 = vmatpush1.msra.mxu0 0.0
  %223 = vmatprep.subr.mxu0 0.0
  %224 = vmatpush1.msra.mxu0 0.0
  %225 = vmatprep.subr.mxu0 0.0
  %226 = vmatpush1.msra.mxu0 0.0
  %227 = vmatprep.subr.mxu0 0.0
  %228 = vmatpush1.msra.mxu0 0.0
  %229 = vmatprep.subr.mxu0 0.0
  %230 = vmatpush1.msra.mxu0 0.0
  %231 = vmatprep.subr.mxu0 0.0
  %232 = vmatpush1.msra.mxu0 0.0
  %233 = vmatprep.mubr.f32.mxu0 0.0
  %234 = vmatmul.mubr.f32.gmra.mrb[0].mxu0 %v164
  %v235 = vpop.f32.mrb[0].mxu0
  %v236 = vadd.f32 %v160, %v235
  %v237 = vpop.f32.mrb[0].mxu0
  %238 = vmatprep.mubr.f32.mxu0 0.0
  %239 = vmatmul.mubr.f32.gmra.mrb[0].mxu0 %v167
  %v240 = vpop.f32.mrb[0].mxu0
  %v241 = vadd.f32 %v160, %v240
  %v242 = vpop.f32.mrb[0].mxu0
  %243 = vdwg.mxu0
  %245 = vrot.lane.b32.xlu0 %v236, 96
  %v246 = vpop.permute.xlu0 %245
  %vm247 = vcmask 64512
  %v248 = vsel %vm247, %v236, 0
  %v250 = vsel %vm247, %v246, 0
  %252 = vmatprep.subr.mxu0 0.0
  %253 = vmatpush1.xpose.msra.mxu0 %v250
  %254 = vmatprep.subr.mxu0 0.0
  %255 = vmatpush1.xpose.msra.mxu0 0.0
  %256 = vmatprep.subr.mxu0 0.0
  %257 = vmatpush1.xpose.msra.mxu0 0.0
  %258 = vmatprep.subr.mxu0 0.0
  %259 = vmatpush1.xpose.msra.mxu0 0.0
  %260 = vmatprep.subr.mxu0 0.0
  %261 = vmatpush1.xpose.msra.mxu0 0.0
  %262 = vmatprep.subr.mxu0 0.0
  %263 = vmatpush1.xpose.msra.mxu0 0.0
  %264 = vmatprep.subr.mxu0 0.0
  %265 = vmatpush1.xpose.msra.mxu0 0.0
  %266 = vmatprep.subr.mxu0 0.0
  %267 = vmatpush1.xpose.msra.mxu0 0.0
  %268 = vmatprep.subr.mxu0 0.0
  %269 = vmatpush1.xpose.msra.mxu0 0.0
  %270 = vmatprep.subr.mxu0 0.0
  %271 = vmatpush1.xpose.msra.mxu0 0.0
  %272 = vmatprep.subr.mxu0 0.0
  %273 = vmatpush1.xpose.msra.mxu0 0.0
  %274 = vmatprep.subr.mxu0 0.0
  %275 = vmatpush1.xpose.msra.mxu0 0.0
  %276 = vmatprep.subr.mxu0 0.0
  %277 = vmatpush1.xpose.msra.mxu0 0.0
  %278 = vmatprep.subr.mxu0 0.0
  %279 = vmatpush1.xpose.msra.mxu0 0.0
  %280 = vmatprep.subr.mxu0 0.0
  %281 = vmatpush1.xpose.msra.mxu0 0.0
  %282 = vmatprep.subr.mxu0 0.0
  %283 = vmatpush1.xpose.msra.mxu0 0.0
  %284 = vmatprep.subr.mxu0 0.0
  %285 = vmatpush1.xpose.msra.mxu0 0.0
  %286 = vmatprep.subr.mxu0 0.0
  %287 = vmatpush1.xpose.msra.mxu0 0.0
  %288 = vmatprep.subr.mxu0 0.0
  %289 = vmatpush1.xpose.msra.mxu0 0.0
  %290 = vmatprep.subr.mxu0 0.0
  %291 = vmatpush1.xpose.msra.mxu0 0.0
  %292 = vmatprep.subr.mxu0 0.0
  %293 = vmatpush1.xpose.msra.mxu0 0.0
  %294 = vmatprep.subr.mxu0 0.0
  %295 = vmatpush1.xpose.msra.mxu0 0.0
  %296 = vmatprep.subr.mxu0 0.0
  %297 = vmatpush1.xpose.msra.mxu0 0.0
  %298 = vmatprep.subr.mxu0 0.0
  %299 = vmatpush1.xpose.msra.mxu0 0.0
  %300 = vmatprep.subr.mxu0 0.0
  %301 = vmatpush1.xpose.msra.mxu0 0.0
  %302 = vmatprep.subr.mxu0 0.0
  %303 = vmatpush1.xpose.msra.mxu0 0.0
  %304 = vmatprep.subr.mxu0 0.0
  %305 = vmatpush1.xpose.msra.mxu0 0.0
  %306 = vmatprep.subr.mxu0 0.0
  %307 = vmatpush1.xpose.msra.mxu0 0.0
  %308 = vmatprep.subr.mxu0 0.0
  %309 = vmatpush1.xpose.msra.mxu0 0.0
  %310 = vmatprep.subr.mxu0 0.0
  %311 = vmatpush1.xpose.msra.mxu0 0.0
  %312 = vmatprep.subr.mxu0 0.0
  %313 = vmatpush1.xpose.msra.mxu0 0.0
  %314 = vmatprep.subr.mxu0 0.0
  %315 = vmatpush1.xpose.msra.mxu0 0.0
  %316 = vmatprep.mubr.f32.mxu0 0.0
  %317 = vmatmul.mubr.f32.gmra.mrb[0].mxu0 %v248
  %v318 = vpop.f32.mrb[0].mxu0
  %v319 = vadd.f32 0.0, %v318
  %v320 = vpop.f32.mrb[0].mxu0
  %321 = vdwg.mxu0
  %323 = vrot.lane.b32.xlu0 %v241, 96
  %v324 = vpop.permute.xlu0 %323
  %v325 = vsel %vm247, %v241, 0
  %v327 = vsel %vm247, %v324, 0
  %329 = vmatprep.subr.mxu0 0.0
  %330 = vmatpush1.xpose.msra.mxu0 %v327
  %331 = vmatprep.subr.mxu0 0.0
  %332 = vmatpush1.xpose.msra.mxu0 0.0
  %333 = vmatprep.subr.mxu0 0.0
  %334 = vmatpush1.xpose.msra.mxu0 0.0
  %335 = vmatprep.subr.mxu0 0.0
  %336 = vmatpush1.xpose.msra.mxu0 0.0
  %337 = vmatprep.subr.mxu0 0.0
  %338 = vmatpush1.xpose.msra.mxu0 0.0
  %339 = vmatprep.subr.mxu0 0.0
  %340 = vmatpush1.xpose.msra.mxu0 0.0
  %341 = vmatprep.subr.mxu0 0.0
  %342 = vmatpush1.xpose.msra.mxu0 0.0
  %343 = vmatprep.subr.mxu0 0.0
  %344 = vmatpush1.xpose.msra.mxu0 0.0
  %345 = vmatprep.subr.mxu0 0.0
  %346 = vmatpush1.xpose.msra.mxu0 0.0
  %347 = vmatprep.subr.mxu0 0.0
  %348 = vmatpush1.xpose.msra.mxu0 0.0
  %349 = vmatprep.subr.mxu0 0.0
  %350 = vmatpush1.xpose.msra.mxu0 0.0
  %351 = vmatprep.subr.mxu0 0.0
  %352 = vmatpush1.xpose.msra.mxu0 0.0
  %353 = vmatprep.subr.mxu0 0.0
  %354 = vmatpush1.xpose.msra.mxu0 0.0
  %355 = vmatprep.subr.mxu0 0.0
  %356 = vmatpush1.xpose.msra.mxu0 0.0
  %357 = vmatprep.subr.mxu0 0.0
  %358 = vmatpush1.xpose.msra.mxu0 0.0
  %359 = vmatprep.subr.mxu0 0.0
  %360 = vmatpush1.xpose.msra.mxu0 0.0
  %361 = vmatprep.subr.mxu0 0.0
  %362 = vmatpush1.xpose.msra.mxu0 0.0
  %363 = vmatprep.subr.mxu0 0.0
  %364 = vmatpush1.xpose.msra.mxu0 0.0
  %365 = vmatprep.subr.mxu0 0.0
  %366 = vmatpush1.xpose.msra.mxu0 0.0
  %367 = vmatprep.subr.mxu0 0.0
  %368 = vmatpush1.xpose.msra.mxu0 0.0
  %369 = vmatprep.subr.mxu0 0.0
  %370 = vmatpush1.xpose.msra.mxu0 0.0
  %371 = vmatprep.subr.mxu0 0.0
  %372 = vmatpush1.xpose.msra.mxu0 0.0
  %373 = vmatprep.subr.mxu0 0.0
  %374 = vmatpush1.xpose.msra.mxu0 0.0
  %375 = vmatprep.subr.mxu0 0.0
  %376 = vmatpush1.xpose.msra.mxu0 0.0
  %377 = vmatprep.subr.mxu0 0.0
  %378 = vmatpush1.xpose.msra.mxu0 0.0
  %379 = vmatprep.subr.mxu0 0.0
  %380 = vmatpush1.xpose.msra.mxu0 0.0
  %381 = vmatprep.subr.mxu0 0.0
  %382 = vmatpush1.xpose.msra.mxu0 0.0
  %383 = vmatprep.subr.mxu0 0.0
  %384 = vmatpush1.xpose.msra.mxu0 0.0
  %385 = vmatprep.subr.mxu0 0.0
  %386 = vmatpush1.xpose.msra.mxu0 0.0
  %387 = vmatprep.subr.mxu0 0.0
  %388 = vmatpush1.xpose.msra.mxu0 0.0
  %389 = vmatprep.subr.mxu0 0.0
  %390 = vmatpush1.xpose.msra.mxu0 0.0
  %391 = vmatprep.subr.mxu0 0.0
  %392 = vmatpush1.xpose.msra.mxu0 0.0
  %393 = vmatprep.mubr.f32.mxu0 0.0
  %394 = vmatmul.mubr.f32.gmra.mrb[0].mxu0 %v325
  %v395 = vpop.f32.mrb[0].mxu0
  %v396 = vadd.f32 0.0, %v395
  %v397 = vpop.f32.mrb[0].mxu0
  %398 = vdwg.mxu0
  %v399 = vmul.f32 %v319, 0.35355338
  %v400 = vmul.f32 %v396, 0.35355338
  %v401 = vsel %vm247, %v399, -inf
  %402 = vmax.xlane.f32.xlu0 %v401
  %v403 = vpop.xlane.xlu0 %402
  %v404 = vsel %vm247, %v400, -inf
  %405 = vmax.xlane.f32.xlu0 %v404
  %v406 = vpop.xlane.xlu0 %405
  %v407 = vsub.f32 %v399, %v403
  %v408 = vsub.f32 %v400, %v406
  %v409 = vmul.f32 %v407, 1.442695
  %v410 = vpow.pop %v409
  %v411 = vmul.f32 %v408, 1.442695
  %v412 = vpow.pop %v411
  %v413 = vsel %vm247, %v410, 0.0
  %414 = vadd.xlane.f32.xlu0 %v413
  %v415 = vpop.xlane.xlu0 %414
  %v416 = vsel %vm247, %v412, 0.0
  %417 = vadd.xlane.f32.xlu0 %v416
  %v418 = vpop.xlane.xlu0 %417
  %v419 = vrcp.pop %v415
  %v420 = vmul.f32 %v410, %v419
  %v421 = vrcp.pop %v418
  %v422 = vmul.f32 %v412, %v421
  %423 = vrot.lane.b32.xlu0 %v236, 64
  %v424 = vpop.permute.xlu0 %423
  %v427 = vsel %vm247, %v420, 0
  %429 = vmatprep.subr.mxu0 0.0
  %430 = vmatpush1.msra.mxu0 %v424
  %431 = vmatprep.subr.mxu0 0.0
  %432 = vmatpush1.msra.mxu0 0.0
  %433 = vmatprep.subr.mxu0 0.0
  %434 = vmatpush1.msra.mxu0 0.0
  %435 = vmatprep.subr.mxu0 0.0
  %436 = vmatpush1.msra.mxu0 0.0
  %437 = vmatprep.subr.mxu0 0.0
  %438 = vmatpush1.msra.mxu0 0.0
  %439 = vmatprep.subr.mxu0 0.0
  %440 = vmatpush1.msra.mxu0 0.0
  %441 = vmatprep.subr.mxu0 0.0
  %442 = vmatpush1.msra.mxu0 0.0
  %443 = vmatprep.subr.mxu0 0.0
  %444 = vmatpush1.msra.mxu0 0.0
  %445 = vmatprep.subr.mxu0 0.0
  %446 = vmatpush1.msra.mxu0 0.0
  %447 = vmatprep.subr.mxu0 0.0
  %448 = vmatpush1.msra.mxu0 0.0
  %449 = vmatprep.subr.mxu0 0.0
  %450 = vmatpush1.msra.mxu0 0.0
  %451 = vmatprep.subr.mxu0 0.0
  %452 = vmatpush1.msra.mxu0 0.0
  %453 = vmatprep.subr.mxu0 0.0
  %454 = vmatpush1.msra.mxu0 0.0
  %455 = vmatprep.subr.mxu0 0.0
  %456 = vmatpush1.msra.mxu0 0.0
  %457 = vmatprep.subr.mxu0 0.0
  %458 = vmatpush1.msra.mxu0 0.0
  %459 = vmatprep.subr.mxu0 0.0
  %460 = vmatpush1.msra.mxu0 0.0
  %461 = vmatprep.subr.mxu0 0.0
  %462 = vmatpush1.msra.mxu0 0.0
  %463 = vmatprep.subr.mxu0 0.0
  %464 = vmatpush1.msra.mxu0 0.0
  %465 = vmatprep.subr.mxu0 0.0
  %466 = vmatpush1.msra.mxu0 0.0
  %467 = vmatprep.subr.mxu0 0.0
  %468 = vmatpush1.msra.mxu0 0.0
  %469 = vmatprep.subr.mxu0 0.0
  %470 = vmatpush1.msra.mxu0 0.0
  %471 = vmatprep.subr.mxu0 0.0
  %472 = vmatpush1.msra.mxu0 0.0
  %473 = vmatprep.subr.mxu0 0.0
  %474 = vmatpush1.msra.mxu0 0.0
  %475 = vmatprep.subr.mxu0 0.0
  %476 = vmatpush1.msra.mxu0 0.0
  %477 = vmatprep.subr.mxu0 0.0
  %478 = vmatpush1.msra.mxu0 0.0
  %479 = vmatprep.subr.mxu0 0.0
  %480 = vmatpush1.msra.mxu0 0.0
  %481 = vmatprep.subr.mxu0 0.0
  %482 = vmatpush1.msra.mxu0 0.0
  %483 = vmatprep.subr.mxu0 0.0
  %484 = vmatpush1.msra.mxu0 0.0
  %485 = vmatprep.subr.mxu0 0.0
  %486 = vmatpush1.msra.mxu0 0.0
  %487 = vmatprep.subr.mxu0 0.0
  %488 = vmatpush1.msra.mxu0 0.0
  %489 = vmatprep.subr.mxu0 0.0
  %490 = vmatpush1.msra.mxu0 0.0
  %491 = vmatprep.subr.mxu0 0.0
  %492 = vmatpush1.msra.mxu0 0.0
  %493 = vmatprep.mubr.f32.mxu0 0.0
  %494 = vmatmul.mubr.f32.gmra.mrb[0].mxu0 %v427
  %v495 = vpop.f32.mrb[0].mxu0
  %v496 = vadd.f32 0.0, %v495
  %v497 = vpop.f32.mrb[0].mxu0
  %498 = vdwg.mxu0
  %499 = vrot.lane.b32.xlu0 %v241, 64
  %v500 = vpop.permute.xlu0 %499
  %v503 = vsel %vm247, %v422, 0
  %505 = vmatprep.subr.mxu0 0.0
  %506 = vmatpush1.msra.mxu0 %v500
  %507 = vmatprep.subr.mxu0 0.0
  %508 = vmatpush1.msra.mxu0 0.0
  %509 = vmatprep.subr.mxu0 0.0
  %510 = vmatpush1.msra.mxu0 0.0
  %511 = vmatprep.subr.mxu0 0.0
  %512 = vmatpush1.msra.mxu0 0.0
  %513 = vmatprep.subr.mxu0 0.0
  %514 = vmatpush1.msra.mxu0 0.0
  %515 = vmatprep.subr.mxu0 0.0
  %516 = vmatpush1.msra.mxu0 0.0
  %517 = vmatprep.subr.mxu0 0.0
  %518 = vmatpush1.msra.mxu0 0.0
  %519 = vmatprep.subr.mxu0 0.0
  %520 = vmatpush1.msra.mxu0 0.0
  %521 = vmatprep.subr.mxu0 0.0
  %522 = vmatpush1.msra.mxu0 0.0
  %523 = vmatprep.subr.mxu0 0.0
  %524 = vmatpush1.msra.mxu0 0.0
  %525 = vmatprep.subr.mxu0 0.0
  %526 = vmatpush1.msra.mxu0 0.0
  %527 = vmatprep.subr.mxu0 0.0
  %528 = vmatpush1.msra.mxu0 0.0
  %529 = vmatprep.subr.mxu0 0.0
  %530 = vmatpush1.msra.mxu0 0.0
  %531 = vmatprep.subr.mxu0 0.0
  %532 = vmatpush1.msra.mxu0 0.0
  %533 = vmatprep.subr.mxu0 0.0
  %534 = vmatpush1.msra.mxu0 0.0
  %535 = vmatprep.subr.mxu0 0.0
  %536 = vmatpush1.msra.mxu0 0.0
  %537 = vmatprep.subr.mxu0 0.0
  %538 = vmatpush1.msra.mxu0 0.0
  %539 = vmatprep.subr.mxu0 0.0
  %540 = vmatpush1.msra.mxu0 0.0
  %541 = vmatprep.subr.mxu0 0.0
  %542 = vmatpush1.msra.mxu0 0.0
  %543 = vmatprep.subr.mxu0 0.0
  %544 = vmatpush1.msra.mxu0 0.0
  %545 = vmatprep.subr.mxu0 0.0
  %546 = vmatpush1.msra.mxu0 0.0
  %547 = vmatprep.subr.mxu0 0.0
  %548 = vmatpush1.msra.mxu0 0.0
  %549 = vmatprep.subr.mxu0 0.0
  %550 = vmatpush1.msra.mxu0 0.0
  %551 = vmatprep.subr.mxu0 0.0
  %552 = vmatpush1.msra.mxu0 0.0
  %553 = vmatprep.subr.mxu0 0.0
  %554 = vmatpush1.msra.mxu0 0.0
  %555 = vmatprep.subr.mxu0 0.0
  %556 = vmatpush1.msra.mxu0 0.0
  %557 = vmatprep.subr.mxu0 0.0
  %558 = vmatpush1.msra.mxu0 0.0
  %559 = vmatprep.subr.mxu0 0.0
  %560 = vmatpush1.msra.mxu0 0.0
  %561 = vmatprep.subr.mxu0 0.0
  %562 = vmatpush1.msra.mxu0 0.0
  %563 = vmatprep.subr.mxu0 0.0
  %564 = vmatpush1.msra.mxu0 0.0
  %565 = vmatprep.subr.mxu0 0.0
  %566 = vmatpush1.msra.mxu0 0.0
  %567 = vmatprep.subr.mxu0 0.0
  %568 = vmatpush1.msra.mxu0 0.0
  %569 = vmatprep.mubr.f32.mxu0 0.0
  %570 = vmatmul.mubr.f32.gmra.mrb[0].mxu0 %v503
  %v571 = vpop.f32.mrb[0].mxu0
  %v572 = vadd.f32 0.0, %v571
  %v573 = vpop.f32.mrb[0].mxu0
  %574 = vdwg.mxu0
  %575 = vrot.lane.b32.xlu0 %v236, 120
  %v576 = vpop.permute.xlu0 %575
  %577 = vrot.lane.b32.xlu0 %v236, 88
  %v578 = vpop.permute.xlu0 %577
  %v579 = vsel %vm247, %v576, 0
  %v581 = vsel %vm247, %v578, 0
  %583 = vmatprep.subr.mxu0 0.0
  %584 = vmatpush1.xpose.msra.mxu0 %v581
  %585 = vmatprep.subr.mxu0 0.0
  %586 = vmatpush1.xpose.msra.mxu0 0.0
  %587 = vmatprep.subr.mxu0 0.0
  %588 = vmatpush1.xpose.msra.mxu0 0.0
  %589 = vmatprep.subr.mxu0 0.0
  %590 = vmatpush1.xpose.msra.mxu0 0.0
  %591 = vmatprep.subr.mxu0 0.0
  %592 = vmatpush1.xpose.msra.mxu0 0.0
  %593 = vmatprep.subr.mxu0 0.0
  %594 = vmatpush1.xpose.msra.mxu0 0.0
  %595 = vmatprep.subr.mxu0 0.0
  %596 = vmatpush1.xpose.msra.mxu0 0.0
  %597 = vmatprep.subr.mxu0 0.0
  %598 = vmatpush1.xpose.msra.mxu0 0.0
  %599 = vmatprep.subr.mxu0 0.0
  %600 = vmatpush1.xpose.msra.mxu0 0.0
  %601 = vmatprep.subr.mxu0 0.0
  %602 = vmatpush1.xpose.msra.mxu0 0.0
  %603 = vmatprep.subr.mxu0 0.0
  %604 = vmatpush1.xpose.msra.mxu0 0.0
  %605 = vmatprep.subr.mxu0 0.0
  %606 = vmatpush1.xpose.msra.mxu0 0.0
  %607 = vmatprep.subr.mxu0 0.0
  %608 = vmatpush1.xpose.msra.mxu0 0.0
  %609 = vmatprep.subr.mxu0 0.0
  %610 = vmatpush1.xpose.msra.mxu0 0.0
  %611 = vmatprep.subr.mxu0 0.0
  %612 = vmatpush1.xpose.msra.mxu0 0.0
  %613 = vmatprep.subr.mxu0 0.0
  %614 = vmatpush1.xpose.msra.mxu0 0.0
  %615 = vmatprep.subr.mxu0 0.0
  %616 = vmatpush1.xpose.msra.mxu0 0.0
  %617 = vmatprep.subr.mxu0 0.0
  %618 = vmatpush1.xpose.msra.mxu0 0.0
  %619 = vmatprep.subr.mxu0 0.0
  %620 = vmatpush1.xpose.msra.mxu0 0.0
  %621 = vmatprep.subr.mxu0 0.0
  %622 = vmatpush1.xpose.msra.mxu0 0.0
  %623 = vmatprep.subr.mxu0 0.0
  %624 = vmatpush1.xpose.msra.mxu0 0.0
  %625 = vmatprep.subr.mxu0 0.0
  %626 = vmatpush1.xpose.msra.mxu0 0.0
  %627 = vmatprep.subr.mxu0 0.0
  %628 = vmatpush1.xpose.msra.mxu0 0.0
  %629 = vmatprep.subr.mxu0 0.0
  %630 = vmatpush1.xpose.msra.mxu0 0.0
  %631 = vmatprep.subr.mxu0 0.0
  %632 = vmatpush1.xpose.msra.mxu0 0.0
  %633 = vmatprep.subr.mxu0 0.0
  %634 = vmatpush1.xpose.msra.mxu0 0.0
  %635 = vmatprep.subr.mxu0 0.0
  %636 = vmatpush1.xpose.msra.mxu0 0.0
  %637 = vmatprep.subr.mxu0 0.0
  %638 = vmatpush1.xpose.msra.mxu0 0.0
  %639 = vmatprep.subr.mxu0 0.0
  %640 = vmatpush1.xpose.msra.mxu0 0.0
  %641 = vmatprep.subr.mxu0 0.0
  %642 = vmatpush1.xpose.msra.mxu0 0.0
  %643 = vmatprep.subr.mxu0 0.0
  %644 = vmatpush1.xpose.msra.mxu0 0.0
  %645 = vmatprep.subr.mxu0 0.0
  %646 = vmatpush1.xpose.msra.mxu0 0.0
  %647 = vmatprep.mubr.f32.mxu0 0.0
  %648 = vmatmul.mubr.f32.gmra.mrb[0].mxu0 %v579
  %v649 = vpop.f32.mrb[0].mxu0
  %v650 = vadd.f32 0.0, %v649
  %v651 = vpop.f32.mrb[0].mxu0
  %652 = vdwg.mxu0
  %653 = vrot.lane.b32.xlu0 %v241, 120
  %v654 = vpop.permute.xlu0 %653
  %655 = vrot.lane.b32.xlu0 %v241, 88
  %v656 = vpop.permute.xlu0 %655
  %v657 = vsel %vm247, %v654, 0
  %v659 = vsel %vm247, %v656, 0
  %661 = vmatprep.subr.mxu0 0.0
  %662 = vmatpush1.xpose.msra.mxu0 %v659
  %663 = vmatprep.subr.mxu0 0.0
  %664 = vmatpush1.xpose.msra.mxu0 0.0
  %665 = vmatprep.subr.mxu0 0.0
  %666 = vmatpush1.xpose.msra.mxu0 0.0
  %667 = vmatprep.subr.mxu0 0.0
  %668 = vmatpush1.xpose.msra.mxu0 0.0
  %669 = vmatprep.subr.mxu0 0.0
  %670 = vmatpush1.xpose.msra.mxu0 0.0
  %671 = vmatprep.subr.mxu0 0.0
  %672 = vmatpush1.xpose.msra.mxu0 0.0
  %673 = vmatprep.subr.mxu0 0.0
  %674 = vmatpush1.xpose.msra.mxu0 0.0
  %675 = vmatprep.subr.mxu0 0.0
  %676 = vmatpush1.xpose.msra.mxu0 0.0
  %677 = vmatprep.subr.mxu0 0.0
  %678 = vmatpush1.xpose.msra.mxu0 0.0
  %679 = vmatprep.subr.mxu0 0.0
  %680 = vmatpush1.xpose.msra.mxu0 0.0
  %681 = vmatprep.subr.mxu0 0.0
  %682 = vmatpush1.xpose.msra.mxu0 0.0
  %683 = vmatprep.subr.mxu0 0.0
  %684 = vmatpush1.xpose.msra.mxu0 0.0
  %685 = vmatprep.subr.mxu0 0.0
  %686 = vmatpush1.xpose.msra.mxu0 0.0
  %687 = vmatprep.subr.mxu0 0.0
  %688 = vmatpush1.xpose.msra.mxu0 0.0
  %689 = vmatprep.subr.mxu0 0.0
  %690 = vmatpush1.xpose.msra.mxu0 0.0
  %691 = vmatprep.subr.mxu0 0.0
  %692 = vmatpush1.xpose.msra.mxu0 0.0
  %693 = vmatprep.subr.mxu0 0.0
  %694 = vmatpush1.xpose.msra.mxu0 0.0
  %695 = vmatprep.subr.mxu0 0.0
  %696 = vmatpush1.xpose.msra.mxu0 0.0
  %697 = vmatprep.subr.mxu0 0.0
  %698 = vmatpush1.xpose.msra.mxu0 0.0
  %699 = vmatprep.subr.mxu0 0.0
  %700 = vmatpush1.xpose.msra.mxu0 0.0
  %701 = vmatprep.subr.mxu0 0.0
  %702 = vmatpush1.xpose.msra.mxu0 0.0
  %703 = vmatprep.subr.mxu0 0.0
  %704 = vmatpush1.xpose.msra.mxu0 0.0
  %705 = vmatprep.subr.mxu0 0.0
  %706 = vmatpush1.xpose.msra.mxu0 0.0
  %707 = vmatprep.subr.mxu0 0.0
  %708 = vmatpush1.xpose.msra.mxu0 0.0
  %709 = vmatprep.subr.mxu0 0.0
  %710 = vmatpush1.xpose.msra.mxu0 0.0
  %711 = vmatprep.subr.mxu0 0.0
  %712 = vmatpush1.xpose.msra.mxu0 0.0
  %713 = vmatprep.subr.mxu0 0.0
  %714 = vmatpush1.xpose.msra.mxu0 0.0
  %715 = vmatprep.subr.mxu0 0.0
  %716 = vmatpush1.xpose.msra.mxu0 0.0
  %717 = vmatprep.subr.mxu0 0.0
  %718 = vmatpush1.xpose.msra.mxu0 0.0
  %719 = vmatprep.subr.mxu0 0.0
  %720 = vmatpush1.xpose.msra.mxu0 0.0
  %721 = vmatprep.subr.mxu0 0.0
  %722 = vmatpush1.xpose.msra.mxu0 0.0
  %723 = vmatprep.subr.mxu0 0.0
  %724 = vmatpush1.xpose.msra.mxu0 0.0
  %725 = vmatprep.mubr.f32.mxu0 0.0
  %726 = vmatmul.mubr.f32.gmra.mrb[0].mxu0 %v657
  %v727 = vpop.f32.mrb[0].mxu0
  %v728 = vadd.f32 0.0, %v727
  %v729 = vpop.f32.mrb[0].mxu0
  %730 = vdwg.mxu0
  %v731 = vmul.f32 %v650, 0.35355338
  %v732 = vmul.f32 %v728, 0.35355338
  %v733 = vsel %vm247, %v731, -inf
  %734 = vmax.xlane.f32.xlu0 %v733
  %v735 = vpop.xlane.xlu0 %734
  %v736 = vsel %vm247, %v732, -inf
  %737 = vmax.xlane.f32.xlu0 %v736
  %v738 = vpop.xlane.xlu0 %737
  %v739 = vsub.f32 %v731, %v735
  %v740 = vsub.f32 %v732, %v738
  %v741 = vmul.f32 %v739, 1.442695
  %v742 = vpow.pop %v741
  %v743 = vmul.f32 %v740, 1.442695
  %v744 = vpow.pop %v743
  %v745 = vsel %vm247, %v742, 0.0
  %746 = vadd.xlane.f32.xlu0 %v745
  %v747 = vpop.xlane.xlu0 %746
  %v748 = vsel %vm247, %v744, 0.0
  %749 = vadd.xlane.f32.xlu0 %v748
  %v750 = vpop.xlane.xlu0 %749
  %v751 = vrcp.pop %v747
  %v752 = vmul.f32 %v742, %v751
  %v753 = vrcp.pop %v750
  %v754 = vmul.f32 %v744, %v753
  %755 = vrot.lane.b32.xlu0 %v236, 56
  %v756 = vpop.permute.xlu0 %755
  %v759 = vsel %vm247, %v752, 0
  %761 = vmatprep.subr.mxu0 0.0
  %762 = vmatpush1.msra.mxu0 %v756
  %763 = vmatprep.subr.mxu0 0.0
  %764 = vmatpush1.msra.mxu0 0.0
  %765 = vmatprep.subr.mxu0 0.0
  %766 = vmatpush1.msra.mxu0 0.0
  %767 = vmatprep.subr.mxu0 0.0
  %768 = vmatpush1.msra.mxu0 0.0
  %769 = vmatprep.subr.mxu0 0.0
  %770 = vmatpush1.msra.mxu0 0.0
  %771 = vmatprep.subr.mxu0 0.0
  %772 = vmatpush1.msra.mxu0 0.0
  %773 = vmatprep.subr.mxu0 0.0
  %774 = vmatpush1.msra.mxu0 0.0
  %775 = vmatprep.subr.mxu0 0.0
  %776 = vmatpush1.msra.mxu0 0.0
  %777 = vmatprep.subr.mxu0 0.0
  %778 = vmatpush1.msra.mxu0 0.0
  %779 = vmatprep.subr.mxu0 0.0
  %780 = vmatpush1.msra.mxu0 0.0
  %781 = vmatprep.subr.mxu0 0.0
  %782 = vmatpush1.msra.mxu0 0.0
  %783 = vmatprep.subr.mxu0 0.0
  %784 = vmatpush1.msra.mxu0 0.0
  %785 = vmatprep.subr.mxu0 0.0
  %786 = vmatpush1.msra.mxu0 0.0
  %787 = vmatprep.subr.mxu0 0.0
  %788 = vmatpush1.msra.mxu0 0.0
  %789 = vmatprep.subr.mxu0 0.0
  %790 = vmatpush1.msra.mxu0 0.0
  %791 = vmatprep.subr.mxu0 0.0
  %792 = vmatpush1.msra.mxu0 0.0
  %793 = vmatprep.subr.mxu0 0.0
  %794 = vmatpush1.msra.mxu0 0.0
  %795 = vmatprep.subr.mxu0 0.0
  %796 = vmatpush1.msra.mxu0 0.0
  %797 = vmatprep.subr.mxu0 0.0
  %798 = vmatpush1.msra.mxu0 0.0
  %799 = vmatprep.subr.mxu0 0.0
  %800 = vmatpush1.msra.mxu0 0.0
  %801 = vmatprep.subr.mxu0 0.0
  %802 = vmatpush1.msra.mxu0 0.0
  %803 = vmatprep.subr.mxu0 0.0
  %804 = vmatpush1.msra.mxu0 0.0
  %805 = vmatprep.subr.mxu0 0.0
  %806 = vmatpush1.msra.mxu0 0.0
  %807 = vmatprep.subr.mxu0 0.0
  %808 = vmatpush1.msra.mxu0 0.0
  %809 = vmatprep.subr.mxu0 0.0
  %810 = vmatpush1.msra.mxu0 0.0
  %811 = vmatprep.subr.mxu0 0.0
  %812 = vmatpush1.msra.mxu0 0.0
  %813 = vmatprep.subr.mxu0 0.0
  %814 = vmatpush1.msra.mxu0 0.0
  %815 = vmatprep.subr.mxu0 0.0
  %816 = vmatpush1.msra.mxu0 0.0
  %817 = vmatprep.subr.mxu0 0.0
  %818 = vmatpush1.msra.mxu0 0.0
  %819 = vmatprep.subr.mxu0 0.0
  %820 = vmatpush1.msra.mxu0 0.0
  %821 = vmatprep.subr.mxu0 0.0
  %822 = vmatpush1.msra.mxu0 0.0
  %823 = vmatprep.subr.mxu0 0.0
  %824 = vmatpush1.msra.mxu0 0.0
  %825 = vmatprep.mubr.f32.mxu0 0.0
  %826 = vmatmul.mubr.f32.gmra.mrb[0].mxu0 %v759
  %v827 = vpop.f32.mrb[0].mxu0
  %v828 = vadd.f32 0.0, %v827
  %v829 = vpop.f32.mrb[0].mxu0
  %830 = vdwg.mxu0
  %831 = vrot.lane.b32.xlu0 %v241, 56
  %v832 = vpop.permute.xlu0 %831
  %v835 = vsel %vm247, %v754, 0
  %837 = vmatprep.subr.mxu0 0.0
  %838 = vmatpush1.msra.mxu0 %v832
  %839 = vmatprep.subr.mxu0 0.0
  %840 = vmatpush1.msra.mxu0 0.0
  %841 = vmatprep.subr.mxu0 0.0
  %842 = vmatpush1.msra.mxu0 0.0
  %843 = vmatprep.subr.mxu0 0.0
  %844 = vmatpush1.msra.mxu0 0.0
  %845 = vmatprep.subr.mxu0 0.0
  %846 = vmatpush1.msra.mxu0 0.0
  %847 = vmatprep.subr.mxu0 0.0
  %848 = vmatpush1.msra.mxu0 0.0
  %849 = vmatprep.subr.mxu0 0.0
  %850 = vmatpush1.msra.mxu0 0.0
  %851 = vmatprep.subr.mxu0 0.0
  %852 = vmatpush1.msra.mxu0 0.0
  %853 = vmatprep.subr.mxu0 0.0
  %854 = vmatpush1.msra.mxu0 0.0
  %855 = vmatprep.subr.mxu0 0.0
  %856 = vmatpush1.msra.mxu0 0.0
  %857 = vmatprep.subr.mxu0 0.0
  %858 = vmatpush1.msra.mxu0 0.0
  %859 = vmatprep.subr.mxu0 0.0
  %860 = vmatpush1.msra.mxu0 0.0
  %861 = vmatprep.subr.mxu0 0.0
  %862 = vmatpush1.msra.mxu0 0.0
  %863 = vmatprep.subr.mxu0 0.0
  %864 = vmatpush1.msra.mxu0 0.0
  %865 = vmatprep.subr.mxu0 0.0
  %866 = vmatpush1.msra.mxu0 0.0
  %867 = vmatprep.subr.mxu0 0.0
  %868 = vmatpush1.msra.mxu0 0.0
  %869 = vmatprep.subr.mxu0 0.0
  %870 = vmatpush1.msra.mxu0 0.0
  %871 = vmatprep.subr.mxu0 0.0
  %872 = vmatpush1.msra.mxu0 0.0
  %873 = vmatprep.subr.mxu0 0.0
  %874 = vmatpush1.msra.mxu0 0.0
  %875 = vmatprep.subr.mxu0 0.0
  %876 = vmatpush1.msra.mxu0 0.0
  %877 = vmatprep.subr.mxu0 0.0
  %878 = vmatpush1.msra.mxu0 0.0
  %879 = vmatprep.subr.mxu0 0.0
  %880 = vmatpush1.msra.mxu0 0.0
  %881 = vmatprep.subr.mxu0 0.0
  %882 = vmatpush1.msra.mxu0 0.0
  %883 = vmatprep.subr.mxu0 0.0
  %884 = vmatpush1.msra.mxu0 0.0
  %885 = vmatprep.subr.mxu0 0.0
  %886 = vmatpush1.msra.mxu0 0.0
  %887 = vmatprep.subr.mxu0 0.0
  %888 = vmatpush1.msra.mxu0 0.0
  %889 = vmatprep.subr.mxu0 0.0
  %890 = vmatpush1.msra.mxu0 0.0
  %891 = vmatprep.subr.mxu0 0.0
  %892 = vmatpush1.msra.mxu0 0.0
  %893 = vmatprep.subr.mxu0 0.0
  %894 = vmatpush1.msra.mxu0 0.0
  %895 = vmatprep.subr.mxu0 0.0
  %896 = vmatpush1.msra.mxu0 0.0
  %897 = vmatprep.subr.mxu0 0.0
  %898 = vmatpush1.msra.mxu0 0.0
  %899 = vmatprep.subr.mxu0 0.0
  %900 = vmatpush1.msra.mxu0 0.0
  %901 = vmatprep.mubr.f32.mxu0 0.0
  %902 = vmatmul.mubr.f32.gmra.mrb[0].mxu0 %v835
  %v903 = vpop.f32.mrb[0].mxu0
  %v904 = vadd.f32 0.0, %v903
  %v905 = vpop.f32.mrb[0].mxu0
  %906 = vdwg.mxu0
  %v908 = vsel %vm247, %v828, 0
  %v911 = vsel %vm247, %v904, 0
  %913 = vmatprep.subr.mxu0 0.0
  %914 = vmatpush1.msra.mxu0 %v153
  %915 = vmatprep.subr.mxu0 0.0
  %916 = vmatpush1.msra.mxu0 0.0
  %917 = vmatprep.subr.mxu0 0.0
  %918 = vmatpush1.msra.mxu0 0.0
  %919 = vmatprep.subr.mxu0 0.0
  %920 = vmatpush1.msra.mxu0 0.0
  %921 = vmatprep.subr.mxu0 0.0
  %922 = vmatpush1.msra.mxu0 0.0
  %923 = vmatprep.subr.mxu0 0.0
  %924 = vmatpush1.msra.mxu0 0.0
  %925 = vmatprep.subr.mxu0 0.0
  %926 = vmatpush1.msra.mxu0 0.0
  %927 = vmatprep.subr.mxu0 0.0
  %928 = vmatpush1.msra.mxu0 0.0
  %929 = vmatprep.subr.mxu0 0.0
  %930 = vmatpush1.msra.mxu0 0.0
  %931 = vmatprep.subr.mxu0 0.0
  %932 = vmatpush1.msra.mxu0 0.0
  %933 = vmatprep.subr.mxu0 0.0
  %934 = vmatpush1.msra.mxu0 0.0
  %935 = vmatprep.subr.mxu0 0.0
  %936 = vmatpush1.msra.mxu0 0.0
  %937 = vmatprep.subr.mxu0 0.0
  %938 = vmatpush1.msra.mxu0 0.0
  %939 = vmatprep.subr.mxu0 0.0
  %940 = vmatpush1.msra.mxu0 0.0
  %941 = vmatprep.subr.mxu0 0.0
  %942 = vmatpush1.msra.mxu0 0.0
  %943 = vmatprep.subr.mxu0 0.0
  %944 = vmatpush1.msra.mxu0 0.0
  %945 = vmatprep.subr.mxu0 0.0
  %946 = vmatpush1.msra.mxu0 0.0
  %947 = vmatprep.subr.mxu0 0.0
  %948 = vmatpush1.msra.mxu0 0.0
  %949 = vmatprep.subr.mxu0 0.0
  %950 = vmatpush1.msra.mxu0 0.0
  %951 = vmatprep.subr.mxu0 0.0
  %952 = vmatpush1.msra.mxu0 0.0
  %953 = vmatprep.subr.mxu0 0.0
  %954 = vmatpush1.msra.mxu0 0.0
  %955 = vmatprep.subr.mxu0 0.0
  %956 = vmatpush1.msra.mxu0 0.0
  %957 = vmatprep.subr.mxu0 0.0
  %958 = vmatpush1.msra.mxu0 0.0
  %959 = vmatprep.subr.mxu0 0.0
  %960 = vmatpush1.msra.mxu0 0.0
  %961 = vmatprep.subr.mxu0 0.0
  %962 = vmatpush1.msra.mxu0 0.0
  %963 = vmatprep.subr.mxu0 0.0
  %964 = vmatpush1.msra.mxu0 0.0
  %965 = vmatprep.subr.mxu0 0.0
  %966 = vmatpush1.msra.mxu0 0.0
  %967 = vmatprep.subr.mxu0 0.0
  %968 = vmatpush1.msra.mxu0 0.0
  %969 = vmatprep.subr.mxu0 0.0
  %970 = vmatpush1.msra.mxu0 0.0
  %971 = vmatprep.subr.mxu0 0.0
  %972 = vmatpush1.msra.mxu0 0.0
  %973 = vmatprep.subr.mxu0 0.0
  %974 = vmatpush1.msra.mxu0 0.0
  %975 = vmatprep.subr.mxu0 0.0
  %976 = vmatpush1.msra.mxu0 0.0
  %977 = vmatprep.mubr.f32.mxu0 0.0
  %978 = vmatmul.mubr.f32.gmra.mrb[0].mxu0 %v908
  %v979 = vpop.f32.mrb[0].mxu0
  %v980 = vadd.f32 0.0, %v979
  %v981 = vpop.f32.mrb[0].mxu0
  %982 = vmatprep.mubr.f32.mxu0 0.0
  %983 = vmatmul.mubr.f32.gmra.mrb[0].mxu0 %v911
  %v984 = vpop.f32.mrb[0].mxu0
  %v985 = vadd.f32 0.0, %v984
  %v986 = vpop.f32.mrb[0].mxu0
  %987 = vdwg.mxu0
  %v989 = vsel %vm247, %v496, 0
  %v992 = vsel %vm247, %v572, 0
  %994 = vmatprep.subr.mxu0 0.0
  %995 = vmatpush1.msra.mxu0 %v152
  %996 = vmatprep.subr.mxu0 0.0
  %997 = vmatpush1.msra.mxu0 0.0
  %998 = vmatprep.subr.mxu0 0.0
  %999 = vmatpush1.msra.mxu0 0.0
  %1000 = vmatprep.subr.mxu0 0.0
  %1001 = vmatpush1.msra.mxu0 0.0
  %1002 = vmatprep.subr.mxu0 0.0
  %1003 = vmatpush1.msra.mxu0 0.0
  %1004 = vmatprep.subr.mxu0 0.0
  %1005 = vmatpush1.msra.mxu0 0.0
  %1006 = vmatprep.subr.mxu0 0.0
  %1007 = vmatpush1.msra.mxu0 0.0
  %1008 = vmatprep.subr.mxu0 0.0
  %1009 = vmatpush1.msra.mxu0 0.0
  %1010 = vmatprep.subr.mxu0 0.0
  %1011 = vmatpush1.msra.mxu0 0.0
  %1012 = vmatprep.subr.mxu0 0.0
  %1013 = vmatpush1.msra.mxu0 0.0
  %1014 = vmatprep.subr.mxu0 0.0
  %1015 = vmatpush1.msra.mxu0 0.0
  %1016 = vmatprep.subr.mxu0 0.0
  %1017 = vmatpush1.msra.mxu0 0.0
  %1018 = vmatprep.subr.mxu0 0.0
  %1019 = vmatpush1.msra.mxu0 0.0
  %1020 = vmatprep.subr.mxu0 0.0
  %1021 = vmatpush1.msra.mxu0 0.0
  %1022 = vmatprep.subr.mxu0 0.0
  %1023 = vmatpush1.msra.mxu0 0.0
  %1024 = vmatprep.subr.mxu0 0.0
  %1025 = vmatpush1.msra.mxu0 0.0
  %1026 = vmatprep.subr.mxu0 0.0
  %1027 = vmatpush1.msra.mxu0 0.0
  %1028 = vmatprep.subr.mxu0 0.0
  %1029 = vmatpush1.msra.mxu0 0.0
  %1030 = vmatprep.subr.mxu0 0.0
  %1031 = vmatpush1.msra.mxu0 0.0
  %1032 = vmatprep.subr.mxu0 0.0
  %1033 = vmatpush1.msra.mxu0 0.0
  %1034 = vmatprep.subr.mxu0 0.0
  %1035 = vmatpush1.msra.mxu0 0.0
  %1036 = vmatprep.subr.mxu0 0.0
  %1037 = vmatpush1.msra.mxu0 0.0
  %1038 = vmatprep.subr.mxu0 0.0
  %1039 = vmatpush1.msra.mxu0 0.0
  %1040 = vmatprep.subr.mxu0 0.0
  %1041 = vmatpush1.msra.mxu0 0.0
  %1042 = vmatprep.subr.mxu0 0.0
  %1043 = vmatpush1.msra.mxu0 0.0
  %1044 = vmatprep.subr.mxu0 0.0
  %1045 = vmatpush1.msra.mxu0 0.0
  %1046 = vmatprep.subr.mxu0 0.0
  %1047 = vmatpush1.msra.mxu0 0.0
  %1048 = vmatprep.subr.mxu0 0.0
  %1049 = vmatpush1.msra.mxu0 0.0
  %1050 = vmatprep.subr.mxu0 0.0
  %1051 = vmatpush1.msra.mxu0 0.0
  %1052 = vmatprep.subr.mxu0 0.0
  %1053 = vmatpush1.msra.mxu0 0.0
  %1054 = vmatprep.subr.mxu0 0.0
  %1055 = vmatpush1.msra.mxu0 0.0
  %1056 = vmatprep.subr.mxu0 0.0
  %1057 = vmatpush1.msra.mxu0 0.0
  %1058 = vmatprep.mubr.f32.mxu0 0.0
  %1059 = vmatmul.mubr.f32.gmra.mrb[0].mxu0 %v989
  %v1060 = vpop.f32.mrb[0].mxu0
  %v1061 = vadd.f32 %v980, %v1060
  %v1062 = vpop.f32.mrb[0].mxu0
  %1063 = vmatprep.mubr.f32.mxu0 0.0
  %1064 = vmatmul.mubr.f32.gmra.mrb[0].mxu0 %v992
  %v1065 = vpop.f32.mrb[0].mxu0
  %v1066 = vadd.f32 %v985, %v1065
  %v1067 = vpop.f32.mrb[0].mxu0
  %1068 = vdwg.mxu0
  %1069 = vrot.lane.b32.xlu0 %v236, 112
  %v1070 = vpop.permute.xlu0 %1069
  %1071 = vrot.lane.b32.xlu0 %v236, 80
  %v1072 = vpop.permute.xlu0 %1071
  %v1073 = vsel %vm247, %v1070, 0
  %v1075 = vsel %vm247, %v1072, 0
  %1077 = vmatprep.subr.mxu0 0.0
  %1078 = vmatpush1.xpose.msra.mxu0 %v1075
  %1079 = vmatprep.subr.mxu0 0.0
  %1080 = vmatpush1.xpose.msra.mxu0 0.0
  %1081 = vmatprep.subr.mxu0 0.0
  %1082 = vmatpush1.xpose.msra.mxu0 0.0
  %1083 = vmatprep.subr.mxu0 0.0
  %1084 = vmatpush1.xpose.msra.mxu0 0.0
  %1085 = vmatprep.subr.mxu0 0.0
  %1086 = vmatpush1.xpose.msra.mxu0 0.0
  %1087 = vmatprep.subr.mxu0 0.0
  %1088 = vmatpush1.xpose.msra.mxu0 0.0
  %1089 = vmatprep.subr.mxu0 0.0
  %1090 = vmatpush1.xpose.msra.mxu0 0.0
  %1091 = vmatprep.subr.mxu0 0.0
  %1092 = vmatpush1.xpose.msra.mxu0 0.0
  %1093 = vmatprep.subr.mxu0 0.0
  %1094 = vmatpush1.xpose.msra.mxu0 0.0
  %1095 = vmatprep.subr.mxu0 0.0
  %1096 = vmatpush1.xpose.msra.mxu0 0.0
  %1097 = vmatprep.subr.mxu0 0.0
  %1098 = vmatpush1.xpose.msra.mxu0 0.0
  %1099 = vmatprep.subr.mxu0 0.0
  %1100 = vmatpush1.xpose.msra.mxu0 0.0
  %1101 = vmatprep.subr.mxu0 0.0
  %1102 = vmatpush1.xpose.msra.mxu0 0.0
  %1103 = vmatprep.subr.mxu0 0.0
  %1104 = vmatpush1.xpose.msra.mxu0 0.0
  %1105 = vmatprep.subr.mxu0 0.0
  %1106 = vmatpush1.xpose.msra.mxu0 0.0
  %1107 = vmatprep.subr.mxu0 0.0
  %1108 = vmatpush1.xpose.msra.mxu0 0.0
  %1109 = vmatprep.subr.mxu0 0.0
  %1110 = vmatpush1.xpose.msra.mxu0 0.0
  %1111 = vmatprep.subr.mxu0 0.0
  %1112 = vmatpush1.xpose.msra.mxu0 0.0
  %1113 = vmatprep.subr.mxu0 0.0
  %1114 = vmatpush1.xpose.msra.mxu0 0.0
  %1115 = vmatprep.subr.mxu0 0.0
  %1116 = vmatpush1.xpose.msra.mxu0 0.0
  %1117 = vmatprep.subr.mxu0 0.0
  %1118 = vmatpush1.xpose.msra.mxu0 0.0
  %1119 = vmatprep.subr.mxu0 0.0
  %1120 = vmatpush1.xpose.msra.mxu0 0.0
  %1121 = vmatprep.subr.mxu0 0.0
  %1122 = vmatpush1.xpose.msra.mxu0 0.0
  %1123 = vmatprep.subr.mxu0 0.0
  %1124 = vmatpush1.xpose.msra.mxu0 0.0
  %1125 = vmatprep.subr.mxu0 0.0
  %1126 = vmatpush1.xpose.msra.mxu0 0.0
  %1127 = vmatprep.subr.mxu0 0.0
  %1128 = vmatpush1.xpose.msra.mxu0 0.0
  %1129 = vmatprep.subr.mxu0 0.0
  %1130 = vmatpush1.xpose.msra.mxu0 0.0
  %1131 = vmatprep.subr.mxu0 0.0
  %1132 = vmatpush1.xpose.msra.mxu0 0.0
  %1133 = vmatprep.subr.mxu0 0.0
  %1134 = vmatpush1.xpose.msra.mxu0 0.0
  %1135 = vmatprep.subr.mxu0 0.0
  %1136 = vmatpush1.xpose.msra.mxu0 0.0
  %1137 = vmatprep.subr.mxu0 0.0
  %1138 = vmatpush1.xpose.msra.mxu0 0.0
  %1139 = vmatprep.subr.mxu0 0.0
  %1140 = vmatpush1.xpose.msra.mxu0 0.0
  %1141 = vmatprep.mubr.f32.mxu0 0.0
  %1142 = vmatmul.mubr.f32.gmra.mrb[0].mxu0 %v1073
  %v1143 = vpop.f32.mrb[0].mxu0
  %v1144 = vadd.f32 0.0, %v1143
  %v1145 = vpop.f32.mrb[0].mxu0
  %1146 = vdwg.mxu0
  %1147 = vrot.lane.b32.xlu0 %v241, 112
  %v1148 = vpop.permute.xlu0 %1147
  %1149 = vrot.lane.b32.xlu0 %v241, 80
  %v1150 = vpop.permute.xlu0 %1149
  %v1151 = vsel %vm247, %v1148, 0
  %v1153 = vsel %vm247, %v1150, 0
  %1155 = vmatprep.subr.mxu0 0.0
  %1156 = vmatpush1.xpose.msra.mxu0 %v1153
  %1157 = vmatprep.subr.mxu0 0.0
  %1158 = vmatpush1.xpose.msra.mxu0 0.0
  %1159 = vmatprep.subr.mxu0 0.0
  %1160 = vmatpush1.xpose.msra.mxu0 0.0
  %1161 = vmatprep.subr.mxu0 0.0
  %1162 = vmatpush1.xpose.msra.mxu0 0.0
  %1163 = vmatprep.subr.mxu0 0.0
  %1164 = vmatpush1.xpose.msra.mxu0 0.0
  %1165 = vmatprep.subr.mxu0 0.0
  %1166 = vmatpush1.xpose.msra.mxu0 0.0
  %1167 = vmatprep.subr.mxu0 0.0
  %1168 = vmatpush1.xpose.msra.mxu0 0.0
  %1169 = vmatprep.subr.mxu0 0.0
  %1170 = vmatpush1.xpose.msra.mxu0 0.0
  %1171 = vmatprep.subr.mxu0 0.0
  %1172 = vmatpush1.xpose.msra.mxu0 0.0
  %1173 = vmatprep.subr.mxu0 0.0
  %1174 = vmatpush1.xpose.msra.mxu0 0.0
  %1175 = vmatprep.subr.mxu0 0.0
  %1176 = vmatpush1.xpose.msra.mxu0 0.0
  %1177 = vmatprep.subr.mxu0 0.0
  %1178 = vmatpush1.xpose.msra.mxu0 0.0
  %1179 = vmatprep.subr.mxu0 0.0
  %1180 = vmatpush1.xpose.msra.mxu0 0.0
  %1181 = vmatprep.subr.mxu0 0.0
  %1182 = vmatpush1.xpose.msra.mxu0 0.0
  %1183 = vmatprep.subr.mxu0 0.0
  %1184 = vmatpush1.xpose.msra.mxu0 0.0
  %1185 = vmatprep.subr.mxu0 0.0
  %1186 = vmatpush1.xpose.msra.mxu0 0.0
  %1187 = vmatprep.subr.mxu0 0.0
  %1188 = vmatpush1.xpose.msra.mxu0 0.0
  %1189 = vmatprep.subr.mxu0 0.0
  %1190 = vmatpush1.xpose.msra.mxu0 0.0
  %1191 = vmatprep.subr.mxu0 0.0
  %1192 = vmatpush1.xpose.msra.mxu0 0.0
  %1193 = vmatprep.subr.mxu0 0.0
  %1194 = vmatpush1.xpose.msra.mxu0 0.0
  %1195 = vmatprep.subr.mxu0 0.0
  %1196 = vmatpush1.xpose.msra.mxu0 0.0
  %1197 = vmatprep.subr.mxu0 0.0
  %1198 = vmatpush1.xpose.msra.mxu0 0.0
  %1199 = vmatprep.subr.mxu0 0.0
  %1200 = vmatpush1.xpose.msra.mxu0 0.0
  %1201 = vmatprep.subr.mxu0 0.0
  %1202 = vmatpush1.xpose.msra.mxu0 0.0
  %1203 = vmatprep.subr.mxu0 0.0
  %1204 = vmatpush1.xpose.msra.mxu0 0.0
  %1205 = vmatprep.subr.mxu0 0.0
  %1206 = vmatpush1.xpose.msra.mxu0 0.0
  %1207 = vmatprep.subr.mxu0 0.0
  %1208 = vmatpush1.xpose.msra.mxu0 0.0
  %1209 = vmatprep.subr.mxu0 0.0
  %1210 = vmatpush1.xpose.msra.mxu0 0.0
  %1211 = vmatprep.subr.mxu0 0.0
  %1212 = vmatpush1.xpose.msra.mxu0 0.0
  %1213 = vmatprep.subr.mxu0 0.0
  %1214 = vmatpush1.xpose.msra.mxu0 0.0
  %1215 = vmatprep.subr.mxu0 0.0
  %1216 = vmatpush1.xpose.msra.mxu0 0.0
  %1217 = vmatprep.subr.mxu0 0.0
  %1218 = vmatpush1.xpose.msra.mxu0 0.0
  %1219 = vmatprep.mubr.f32.mxu0 0.0
  %1220 = vmatmul.mubr.f32.gmra.mrb[0].mxu0 %v1151
  %v1221 = vpop.f32.mrb[0].mxu0
  %v1222 = vadd.f32 0.0, %v1221
  %v1223 = vpop.f32.mrb[0].mxu0
  %1224 = vdwg.mxu0
  %v1225 = vmul.f32 %v1144, 0.35355338
  %v1226 = vmul.f32 %v1222, 0.35355338
  %v1227 = vsel %vm247, %v1225, -inf
  %1228 = vmax.xlane.f32.xlu0 %v1227
  %v1229 = vpop.xlane.xlu0 %1228
  %v1230 = vsel %vm247, %v1226, -inf
  %1231 = vmax.xlane.f32.xlu0 %v1230
  %v1232 = vpop.xlane.xlu0 %1231
  %v1233 = vsub.f32 %v1225, %v1229
  %v1234 = vsub.f32 %v1226, %v1232
  %v1235 = vmul.f32 %v1233, 1.442695
  %v1236 = vpow.pop %v1235
  %v1237 = vmul.f32 %v1234, 1.442695
  %v1238 = vpow.pop %v1237
  %v1239 = vsel %vm247, %v1236, 0.0
  %1240 = vadd.xlane.f32.xlu0 %v1239
  %v1241 = vpop.xlane.xlu0 %1240
  %v1242 = vsel %vm247, %v1238, 0.0
  %1243 = vadd.xlane.f32.xlu0 %v1242
  %v1244 = vpop.xlane.xlu0 %1243
  %v1245 = vrcp.pop %v1241
  %v1246 = vmul.f32 %v1236, %v1245
  %v1247 = vrcp.pop %v1244
  %v1248 = vmul.f32 %v1238, %v1247
  %1249 = vrot.lane.b32.xlu0 %v236, 48
  %v1250 = vpop.permute.xlu0 %1249
  %v1253 = vsel %vm247, %v1246, 0
  %1255 = vmatprep.subr.mxu0 0.0
  %1256 = vmatpush1.msra.mxu0 %v1250
  %1257 = vmatprep.subr.mxu0 0.0
  %1258 = vmatpush1.msra.mxu0 0.0
  %1259 = vmatprep.subr.mxu0 0.0
  %1260 = vmatpush1.msra.mxu0 0.0
  %1261 = vmatprep.subr.mxu0 0.0
  %1262 = vmatpush1.msra.mxu0 0.0
  %1263 = vmatprep.subr.mxu0 0.0
  %1264 = vmatpush1.msra.mxu0 0.0
  %1265 = vmatprep.subr.mxu0 0.0
  %1266 = vmatpush1.msra.mxu0 0.0
  %1267 = vmatprep.subr.mxu0 0.0
  %1268 = vmatpush1.msra.mxu0 0.0
  %1269 = vmatprep.subr.mxu0 0.0
  %1270 = vmatpush1.msra.mxu0 0.0
  %1271 = vmatprep.subr.mxu0 0.0
  %1272 = vmatpush1.msra.mxu0 0.0
  %1273 = vmatprep.subr.mxu0 0.0
  %1274 = vmatpush1.msra.mxu0 0.0
  %1275 = vmatprep.subr.mxu0 0.0
  %1276 = vmatpush1.msra.mxu0 0.0
  %1277 = vmatprep.subr.mxu0 0.0
  %1278 = vmatpush1.msra.mxu0 0.0
  %1279 = vmatprep.subr.mxu0 0.0
  %1280 = vmatpush1.msra.mxu0 0.0
  %1281 = vmatprep.subr.mxu0 0.0
  %1282 = vmatpush1.msra.mxu0 0.0
  %1283 = vmatprep.subr.mxu0 0.0
  %1284 = vmatpush1.msra.mxu0 0.0
  %1285 = vmatprep.subr.mxu0 0.0
  %1286 = vmatpush1.msra.mxu0 0.0
  %1287 = vmatprep.subr.mxu0 0.0
  %1288 = vmatpush1.msra.mxu0 0.0
  %1289 = vmatprep.subr.mxu0 0.0
  %1290 = vmatpush1.msra.mxu0 0.0
  %1291 = vmatprep.subr.mxu0 0.0
  %1292 = vmatpush1.msra.mxu0 0.0
  %1293 = vmatprep.subr.mxu0 0.0
  %1294 = vmatpush1.msra.mxu0 0.0
  %1295 = vmatprep.subr.mxu0 0.0
  %1296 = vmatpush1.msra.mxu0 0.0
  %1297 = vmatprep.subr.mxu0 0.0
  %1298 = vmatpush1.msra.mxu0 0.0
  %1299 = vmatprep.subr.mxu0 0.0
  %1300 = vmatpush1.msra.mxu0 0.0
  %1301 = vmatprep.subr.mxu0 0.0
  %1302 = vmatpush1.msra.mxu0 0.0
  %1303 = vmatprep.subr.mxu0 0.0
  %1304 = vmatpush1.msra.mxu0 0.0
  %1305 = vmatprep.subr.mxu0 0.0
  %1306 = vmatpush1.msra.mxu0 0.0
  %1307 = vmatprep.subr.mxu0 0.0
  %1308 = vmatpush1.msra.mxu0 0.0
  %1309 = vmatprep.subr.mxu0 0.0
  %1310 = vmatpush1.msra.mxu0 0.0
  %1311 = vmatprep.subr.mxu0 0.0
  %1312 = vmatpush1.msra.mxu0 0.0
  %1313 = vmatprep.subr.mxu0 0.0
  %1314 = vmatpush1.msra.mxu0 0.0
  %1315 = vmatprep.subr.mxu0 0.0
  %1316 = vmatpush1.msra.mxu0 0.0
  %1317 = vmatprep.subr.mxu0 0.0
  %1318 = vmatpush1.msra.mxu0 0.0
  %1319 = vmatprep.mubr.f32.mxu0 0.0
  %1320 = vmatmul.mubr.f32.gmra.mrb[0].mxu0 %v1253
  %v1321 = vpop.f32.mrb[0].mxu0
  %v1322 = vadd.f32 0.0, %v1321
  %v1323 = vpop.f32.mrb[0].mxu0
  %1324 = vdwg.mxu0
  %1325 = vrot.lane.b32.xlu0 %v241, 48
  %v1326 = vpop.permute.xlu0 %1325
  %v1329 = vsel %vm247, %v1248, 0
  %1331 = vmatprep.subr.mxu0 0.0
  %1332 = vmatpush1.msra.mxu0 %v1326
  %1333 = vmatprep.subr.mxu0 0.0
  %1334 = vmatpush1.msra.mxu0 0.0
  %1335 = vmatprep.subr.mxu0 0.0
  %1336 = vmatpush1.msra.mxu0 0.0
  %1337 = vmatprep.subr.mxu0 0.0
  %1338 = vmatpush1.msra.mxu0 0.0
  %1339 = vmatprep.subr.mxu0 0.0
  %1340 = vmatpush1.msra.mxu0 0.0
  %1341 = vmatprep.subr.mxu0 0.0
  %1342 = vmatpush1.msra.mxu0 0.0
  %1343 = vmatprep.subr.mxu0 0.0
  %1344 = vmatpush1.msra.mxu0 0.0
  %1345 = vmatprep.subr.mxu0 0.0
  %1346 = vmatpush1.msra.mxu0 0.0
  %1347 = vmatprep.subr.mxu0 0.0
  %1348 = vmatpush1.msra.mxu0 0.0
  %1349 = vmatprep.subr.mxu0 0.0
  %1350 = vmatpush1.msra.mxu0 0.0
  %1351 = vmatprep.subr.mxu0 0.0
  %1352 = vmatpush1.msra.mxu0 0.0
  %1353 = vmatprep.subr.mxu0 0.0
  %1354 = vmatpush1.msra.mxu0 0.0
  %1355 = vmatprep.subr.mxu0 0.0
  %1356 = vmatpush1.msra.mxu0 0.0
  %1357 = vmatprep.subr.mxu0 0.0
  %1358 = vmatpush1.msra.mxu0 0.0
  %1359 = vmatprep.subr.mxu0 0.0
  %1360 = vmatpush1.msra.mxu0 0.0
  %1361 = vmatprep.subr.mxu0 0.0
  %1362 = vmatpush1.msra.mxu0 0.0
  %1363 = vmatprep.subr.mxu0 0.0
  %1364 = vmatpush1.msra.mxu0 0.0
  %1365 = vmatprep.subr.mxu0 0.0
  %1366 = vmatpush1.msra.mxu0 0.0
  %1367 = vmatprep.subr.mxu0 0.0
  %1368 = vmatpush1.msra.mxu0 0.0
  %1369 = vmatprep.subr.mxu0 0.0
  %1370 = vmatpush1.msra.mxu0 0.0
  %1371 = vmatprep.subr.mxu0 0.0
  %1372 = vmatpush1.msra.mxu0 0.0
  %1373 = vmatprep.subr.mxu0 0.0
  %1374 = vmatpush1.msra.mxu0 0.0
  %1375 = vmatprep.subr.mxu0 0.0
  %1376 = vmatpush1.msra.mxu0 0.0
  %1377 = vmatprep.subr.mxu0 0.0
  %1378 = vmatpush1.msra.mxu0 0.0
  %1379 = vmatprep.subr.mxu0 0.0
  %1380 = vmatpush1.msra.mxu0 0.0
  %1381 = vmatprep.subr.mxu0 0.0
  %1382 = vmatpush1.msra.mxu0 0.0
  %1383 = vmatprep.subr.mxu0 0.0
  %1384 = vmatpush1.msra.mxu0 0.0
  %1385 = vmatprep.subr.mxu0 0.0
  %1386 = vmatpush1.msra.mxu0 0.0
  %1387 = vmatprep.subr.mxu0 0.0
  %1388 = vmatpush1.msra.mxu0 0.0
  %1389 = vmatprep.subr.mxu0 0.0
  %1390 = vmatpush1.msra.mxu0 0.0
  %1391 = vmatprep.subr.mxu0 0.0
  %1392 = vmatpush1.msra.mxu0 0.0
  %1393 = vmatprep.subr.mxu0 0.0
  %1394 = vmatpush1.msra.mxu0 0.0
  %1395 = vmatprep.mubr.f32.mxu0 0.0
  %1396 = vmatmul.mubr.f32.gmra.mrb[0].mxu0 %v1329
  %v1397 = vpop.f32.mrb[0].mxu0
  %v1398 = vadd.f32 0.0, %v1397
  %v1399 = vpop.f32.mrb[0].mxu0
  %1400 = vdwg.mxu0
  %v1402 = vsel %vm247, %v1322, 0
  %v1405 = vsel %vm247, %v1398, 0
  %1407 = vmatprep.subr.mxu0 0.0
  %1408 = vmatpush1.msra.mxu0 %v154
  %1409 = vmatprep.subr.mxu0 0.0
  %1410 = vmatpush1.msra.mxu0 0.0
  %1411 = vmatprep.subr.mxu0 0.0
  %1412 = vmatpush1.msra.mxu0 0.0
  %1413 = vmatprep.subr.mxu0 0.0
  %1414 = vmatpush1.msra.mxu0 0.0
  %1415 = vmatprep.subr.mxu0 0.0
  %1416 = vmatpush1.msra.mxu0 0.0
  %1417 = vmatprep.subr.mxu0 0.0
  %1418 = vmatpush1.msra.mxu0 0.0
  %1419 = vmatprep.subr.mxu0 0.0
  %1420 = vmatpush1.msra.mxu0 0.0
  %1421 = vmatprep.subr.mxu0 0.0
  %1422 = vmatpush1.msra.mxu0 0.0
  %1423 = vmatprep.subr.mxu0 0.0
  %1424 = vmatpush1.msra.mxu0 0.0
  %1425 = vmatprep.subr.mxu0 0.0
  %1426 = vmatpush1.msra.mxu0 0.0
  %1427 = vmatprep.subr.mxu0 0.0
  %1428 = vmatpush1.msra.mxu0 0.0
  %1429 = vmatprep.subr.mxu0 0.0
  %1430 = vmatpush1.msra.mxu0 0.0
  %1431 = vmatprep.subr.mxu0 0.0
  %1432 = vmatpush1.msra.mxu0 0.0
  %1433 = vmatprep.subr.mxu0 0.0
  %1434 = vmatpush1.msra.mxu0 0.0
  %1435 = vmatprep.subr.mxu0 0.0
  %1436 = vmatpush1.msra.mxu0 0.0
  %1437 = vmatprep.subr.mxu0 0.0
  %1438 = vmatpush1.msra.mxu0 0.0
  %1439 = vmatprep.subr.mxu0 0.0
  %1440 = vmatpush1.msra.mxu0 0.0
  %1441 = vmatprep.subr.mxu0 0.0
  %1442 = vmatpush1.msra.mxu0 0.0
  %1443 = vmatprep.subr.mxu0 0.0
  %1444 = vmatpush1.msra.mxu0 0.0
  %1445 = vmatprep.subr.mxu0 0.0
  %1446 = vmatpush1.msra.mxu0 0.0
  %1447 = vmatprep.subr.mxu0 0.0
  %1448 = vmatpush1.msra.mxu0 0.0
  %1449 = vmatprep.subr.mxu0 0.0
  %1450 = vmatpush1.msra.mxu0 0.0
  %1451 = vmatprep.subr.mxu0 0.0
  %1452 = vmatpush1.msra.mxu0 0.0
  %1453 = vmatprep.subr.mxu0 0.0
  %1454 = vmatpush1.msra.mxu0 0.0
  %1455 = vmatprep.subr.mxu0 0.0
  %1456 = vmatpush1.msra.mxu0 0.0
  %1457 = vmatprep.subr.mxu0 0.0
  %1458 = vmatpush1.msra.mxu0 0.0
  %1459 = vmatprep.subr.mxu0 0.0
  %1460 = vmatpush1.msra.mxu0 0.0
  %1461 = vmatprep.subr.mxu0 0.0
  %1462 = vmatpush1.msra.mxu0 0.0
  %1463 = vmatprep.subr.mxu0 0.0
  %1464 = vmatpush1.msra.mxu0 0.0
  %1465 = vmatprep.subr.mxu0 0.0
  %1466 = vmatpush1.msra.mxu0 0.0
  %1467 = vmatprep.subr.mxu0 0.0
  %1468 = vmatpush1.msra.mxu0 0.0
  %1469 = vmatprep.subr.mxu0 0.0
  %1470 = vmatpush1.msra.mxu0 0.0
  %1471 = vmatprep.mubr.f32.mxu0 0.0
  %1472 = vmatmul.mubr.f32.gmra.mrb[0].mxu0 %v1402
  %v1473 = vpop.f32.mrb[0].mxu0
  %v1474 = vadd.f32 0.0, %v1473
  %v1475 = vpop.f32.mrb[0].mxu0
  %1476 = vmatprep.mubr.f32.mxu0 0.0
  %1477 = vmatmul.mubr.f32.gmra.mrb[0].mxu0 %v1405
  %v1478 = vpop.f32.mrb[0].mxu0
  %v1479 = vadd.f32 0.0, %v1478
  %v1480 = vpop.f32.mrb[0].mxu0
  %1481 = vdwg.mxu0
  %v1482 = vadd.f32 %v1061, %v1474
  %v1483 = vadd.f32 %v1066, %v1479
  %1484 = vrot.lane.b32.xlu0 %v236, 104
  %v1485 = vpop.permute.xlu0 %1484
  %1486 = vrot.lane.b32.xlu0 %v236, 72
  %v1487 = vpop.permute.xlu0 %1486
  %v1488 = vsel %vm247, %v1485, 0
  %v1490 = vsel %vm247, %v1487, 0
  %1492 = vmatprep.subr.mxu0 0.0
  %1493 = vmatpush1.xpose.msra.mxu0 %v1490
  %1494 = vmatprep.subr.mxu0 0.0
  %1495 = vmatpush1.xpose.msra.mxu0 0.0
  %1496 = vmatprep.subr.mxu0 0.0
  %1497 = vmatpush1.xpose.msra.mxu0 0.0
  %1498 = vmatprep.subr.mxu0 0.0
  %1499 = vmatpush1.xpose.msra.mxu0 0.0
  %1500 = vmatprep.subr.mxu0 0.0
  %1501 = vmatpush1.xpose.msra.mxu0 0.0
  %1502 = vmatprep.subr.mxu0 0.0
  %1503 = vmatpush1.xpose.msra.mxu0 0.0
  %1504 = vmatprep.subr.mxu0 0.0
  %1505 = vmatpush1.xpose.msra.mxu0 0.0
  %1506 = vmatprep.subr.mxu0 0.0
  %1507 = vmatpush1.xpose.msra.mxu0 0.0
  %1508 = vmatprep.subr.mxu0 0.0
  %1509 = vmatpush1.xpose.msra.mxu0 0.0
  %1510 = vmatprep.subr.mxu0 0.0
  %1511 = vmatpush1.xpose.msra.mxu0 0.0
  %1512 = vmatprep.subr.mxu0 0.0
  %1513 = vmatpush1.xpose.msra.mxu0 0.0
  %1514 = vmatprep.subr.mxu0 0.0
  %1515 = vmatpush1.xpose.msra.mxu0 0.0
  %1516 = vmatprep.subr.mxu0 0.0
  %1517 = vmatpush1.xpose.msra.mxu0 0.0
  %1518 = vmatprep.subr.mxu0 0.0
  %1519 = vmatpush1.xpose.msra.mxu0 0.0
  %1520 = vmatprep.subr.mxu0 0.0
  %1521 = vmatpush1.xpose.msra.mxu0 0.0
  %1522 = vmatprep.subr.mxu0 0.0
  %1523 = vmatpush1.xpose.msra.mxu0 0.0
  %1524 = vmatprep.subr.mxu0 0.0
  %1525 = vmatpush1.xpose.msra.mxu0 0.0
  %1526 = vmatprep.subr.mxu0 0.0
  %1527 = vmatpush1.xpose.msra.mxu0 0.0
  %1528 = vmatprep.subr.mxu0 0.0
  %1529 = vmatpush1.xpose.msra.mxu0 0.0
  %1530 = vmatprep.subr.mxu0 0.0
  %1531 = vmatpush1.xpose.msra.mxu0 0.0
  %1532 = vmatprep.subr.mxu0 0.0
  %1533 = vmatpush1.xpose.msra.mxu0 0.0
  %1534 = vmatprep.subr.mxu0 0.0
  %1535 = vmatpush1.xpose.msra.mxu0 0.0
  %1536 = vmatprep.subr.mxu0 0.0
  %1537 = vmatpush1.xpose.msra.mxu0 0.0
  %1538 = vmatprep.subr.mxu0 0.0
  %1539 = vmatpush1.xpose.msra.mxu0 0.0
  %1540 = vmatprep.subr.mxu0 0.0
  %1541 = vmatpush1.xpose.msra.mxu0 0.0
  %1542 = vmatprep.subr.mxu0 0.0
  %1543 = vmatpush1.xpose.msra.mxu0 0.0
  %1544 = vmatprep.subr.mxu0 0.0
  %1545 = vmatpush1.xpose.msra.mxu0 0.0
  %1546 = vmatprep.subr.mxu0 0.0
  %1547 = vmatpush1.xpose.msra.mxu0 0.0
  %1548 = vmatprep.subr.mxu0 0.0
  %1549 = vmatpush1.xpose.msra.mxu0 0.0
  %1550 = vmatprep.subr.mxu0 0.0
  %1551 = vmatpush1.xpose.msra.mxu0 0.0
  %1552 = vmatprep.subr.mxu0 0.0
  %1553 = vmatpush1.xpose.msra.mxu0 0.0
  %1554 = vmatprep.subr.mxu0 0.0
  %1555 = vmatpush1.xpose.msra.mxu0 0.0
  %1556 = vmatprep.mubr.f32.mxu0 0.0
  %1557 = vmatmul.mubr.f32.gmra.mrb[0].mxu0 %v1488
  %v1558 = vpop.f32.mrb[0].mxu0
  %v1559 = vadd.f32 0.0, %v1558
  %v1560 = vpop.f32.mrb[0].mxu0
  %1561 = vdwg.mxu0
  %1562 = vrot.lane.b32.xlu0 %v241, 104
  %v1563 = vpop.permute.xlu0 %1562
  %1564 = vrot.lane.b32.xlu0 %v241, 72
  %v1565 = vpop.permute.xlu0 %1564
  %v1566 = vsel %vm247, %v1563, 0
  %v1568 = vsel %vm247, %v1565, 0
  %1570 = vmatprep.subr.mxu0 0.0
  %1571 = vmatpush1.xpose.msra.mxu0 %v1568
  %1572 = vmatprep.subr.mxu0 0.0
  %1573 = vmatpush1.xpose.msra.mxu0 0.0
  %1574 = vmatprep.subr.mxu0 0.0
  %1575 = vmatpush1.xpose.msra.mxu0 0.0
  %1576 = vmatprep.subr.mxu0 0.0
  %1577 = vmatpush1.xpose.msra.mxu0 0.0
  %1578 = vmatprep.subr.mxu0 0.0
  %1579 = vmatpush1.xpose.msra.mxu0 0.0
  %1580 = vmatprep.subr.mxu0 0.0
  %1581 = vmatpush1.xpose.msra.mxu0 0.0
  %1582 = vmatprep.subr.mxu0 0.0
  %1583 = vmatpush1.xpose.msra.mxu0 0.0
  %1584 = vmatprep.subr.mxu0 0.0
  %1585 = vmatpush1.xpose.msra.mxu0 0.0
  %1586 = vmatprep.subr.mxu0 0.0
  %1587 = vmatpush1.xpose.msra.mxu0 0.0
  %1588 = vmatprep.subr.mxu0 0.0
  %1589 = vmatpush1.xpose.msra.mxu0 0.0
  %1590 = vmatprep.subr.mxu0 0.0
  %1591 = vmatpush1.xpose.msra.mxu0 0.0
  %1592 = vmatprep.subr.mxu0 0.0
  %1593 = vmatpush1.xpose.msra.mxu0 0.0
  %1594 = vmatprep.subr.mxu0 0.0
  %1595 = vmatpush1.xpose.msra.mxu0 0.0
  %1596 = vmatprep.subr.mxu0 0.0
  %1597 = vmatpush1.xpose.msra.mxu0 0.0
  %1598 = vmatprep.subr.mxu0 0.0
  %1599 = vmatpush1.xpose.msra.mxu0 0.0
  %1600 = vmatprep.subr.mxu0 0.0
  %1601 = vmatpush1.xpose.msra.mxu0 0.0
  %1602 = vmatprep.subr.mxu0 0.0
  %1603 = vmatpush1.xpose.msra.mxu0 0.0
  %1604 = vmatprep.subr.mxu0 0.0
  %1605 = vmatpush1.xpose.msra.mxu0 0.0
  %1606 = vmatprep.subr.mxu0 0.0
  %1607 = vmatpush1.xpose.msra.mxu0 0.0
  %1608 = vmatprep.subr.mxu0 0.0
  %1609 = vmatpush1.xpose.msra.mxu0 0.0
  %1610 = vmatprep.subr.mxu0 0.0
  %1611 = vmatpush1.xpose.msra.mxu0 0.0
  %1612 = vmatprep.subr.mxu0 0.0
  %1613 = vmatpush1.xpose.msra.mxu0 0.0
  %1614 = vmatprep.subr.mxu0 0.0
  %1615 = vmatpush1.xpose.msra.mxu0 0.0
  %1616 = vmatprep.subr.mxu0 0.0
  %1617 = vmatpush1.xpose.msra.mxu0 0.0
  %1618 = vmatprep.subr.mxu0 0.0
  %1619 = vmatpush1.xpose.msra.mxu0 0.0
  %1620 = vmatprep.subr.mxu0 0.0
  %1621 = vmatpush1.xpose.msra.mxu0 0.0
  %1622 = vmatprep.subr.mxu0 0.0
  %1623 = vmatpush1.xpose.msra.mxu0 0.0
  %1624 = vmatprep.subr.mxu0 0.0
  %1625 = vmatpush1.xpose.msra.mxu0 0.0
  %1626 = vmatprep.subr.mxu0 0.0
  %1627 = vmatpush1.xpose.msra.mxu0 0.0
  %1628 = vmatprep.subr.mxu0 0.0
  %1629 = vmatpush1.xpose.msra.mxu0 0.0
  %1630 = vmatprep.subr.mxu0 0.0
  %1631 = vmatpush1.xpose.msra.mxu0 0.0
  %1632 = vmatprep.subr.mxu0 0.0
  %1633 = vmatpush1.xpose.msra.mxu0 0.0
  %1634 = vmatprep.mubr.f32.mxu0 0.0
  %1635 = vmatmul.mubr.f32.gmra.mrb[0].mxu0 %v1566
  %v1636 = vpop.f32.mrb[0].mxu0
  %v1637 = vadd.f32 0.0, %v1636
  %v1638 = vpop.f32.mrb[0].mxu0
  %1639 = vdwg.mxu0
  %v1640 = vmul.f32 %v1559, 0.35355338
  %v1641 = vmul.f32 %v1637, 0.35355338
  %v1642 = vsel %vm247, %v1640, -inf
  %1643 = vmax.xlane.f32.xlu0 %v1642
  %v1644 = vpop.xlane.xlu0 %1643
  %v1645 = vsel %vm247, %v1641, -inf
  %1646 = vmax.xlane.f32.xlu0 %v1645
  %v1647 = vpop.xlane.xlu0 %1646
  %v1648 = vsub.f32 %v1640, %v1644
  %v1649 = vsub.f32 %v1641, %v1647
  %v1650 = vmul.f32 %v1648, 1.442695
  %v1651 = vpow.pop %v1650
  %v1652 = vmul.f32 %v1649, 1.442695
  %v1653 = vpow.pop %v1652
  %v1654 = vsel %vm247, %v1651, 0.0
  %1655 = vadd.xlane.f32.xlu0 %v1654
  %v1656 = vpop.xlane.xlu0 %1655
  %v1657 = vsel %vm247, %v1653, 0.0
  %1658 = vadd.xlane.f32.xlu0 %v1657
  %v1659 = vpop.xlane.xlu0 %1658
  %v1660 = vrcp.pop %v1656
  %v1661 = vmul.f32 %v1651, %v1660
  %v1662 = vrcp.pop %v1659
  %v1663 = vmul.f32 %v1653, %v1662
  %1664 = vrot.lane.b32.xlu0 %v236, 40
  %v1665 = vpop.permute.xlu0 %1664
  %v1668 = vsel %vm247, %v1661, 0
  %1670 = vmatprep.subr.mxu0 0.0
  %1671 = vmatpush1.msra.mxu0 %v1665
  %1672 = vmatprep.subr.mxu0 0.0
  %1673 = vmatpush1.msra.mxu0 0.0
  %1674 = vmatprep.subr.mxu0 0.0
  %1675 = vmatpush1.msra.mxu0 0.0
  %1676 = vmatprep.subr.mxu0 0.0
  %1677 = vmatpush1.msra.mxu0 0.0
  %1678 = vmatprep.subr.mxu0 0.0
  %1679 = vmatpush1.msra.mxu0 0.0
  %1680 = vmatprep.subr.mxu0 0.0
  %1681 = vmatpush1.msra.mxu0 0.0
  %1682 = vmatprep.subr.mxu0 0.0
  %1683 = vmatpush1.msra.mxu0 0.0
  %1684 = vmatprep.subr.mxu0 0.0
  %1685 = vmatpush1.msra.mxu0 0.0
  %1686 = vmatprep.subr.mxu0 0.0
  %1687 = vmatpush1.msra.mxu0 0.0
  %1688 = vmatprep.subr.mxu0 0.0
  %1689 = vmatpush1.msra.mxu0 0.0
  %1690 = vmatprep.subr.mxu0 0.0
  %1691 = vmatpush1.msra.mxu0 0.0
  %1692 = vmatprep.subr.mxu0 0.0
  %1693 = vmatpush1.msra.mxu0 0.0
  %1694 = vmatprep.subr.mxu0 0.0
  %1695 = vmatpush1.msra.mxu0 0.0
  %1696 = vmatprep.subr.mxu0 0.0
  %1697 = vmatpush1.msra.mxu0 0.0
  %1698 = vmatprep.subr.mxu0 0.0
  %1699 = vmatpush1.msra.mxu0 0.0
  %1700 = vmatprep.subr.mxu0 0.0
  %1701 = vmatpush1.msra.mxu0 0.0
  %1702 = vmatprep.subr.mxu0 0.0
  %1703 = vmatpush1.msra.mxu0 0.0
  %1704 = vmatprep.subr.mxu0 0.0
  %1705 = vmatpush1.msra.mxu0 0.0
  %1706 = vmatprep.subr.mxu0 0.0
  %1707 = vmatpush1.msra.mxu0 0.0
  %1708 = vmatprep.subr.mxu0 0.0
  %1709 = vmatpush1.msra.mxu0 0.0
  %1710 = vmatprep.subr.mxu0 0.0
  %1711 = vmatpush1.msra.mxu0 0.0
  %1712 = vmatprep.subr.mxu0 0.0
  %1713 = vmatpush1.msra.mxu0 0.0
  %1714 = vmatprep.subr.mxu0 0.0
  %1715 = vmatpush1.msra.mxu0 0.0
  %1716 = vmatprep.subr.mxu0 0.0
  %1717 = vmatpush1.msra.mxu0 0.0
  %1718 = vmatprep.subr.mxu0 0.0
  %1719 = vmatpush1.msra.mxu0 0.0
  %1720 = vmatprep.subr.mxu0 0.0
  %1721 = vmatpush1.msra.mxu0 0.0
  %1722 = vmatprep.subr.mxu0 0.0
  %1723 = vmatpush1.msra.mxu0 0.0
  %1724 = vmatprep.subr.mxu0 0.0
  %1725 = vmatpush1.msra.mxu0 0.0
  %1726 = vmatprep.subr.mxu0 0.0
  %1727 = vmatpush1.msra.mxu0 0.0
  %1728 = vmatprep.subr.mxu0 0.0
  %1729 = vmatpush1.msra.mxu0 0.0
  %1730 = vmatprep.subr.mxu0 0.0
  %1731 = vmatpush1.msra.mxu0 0.0
  %1732 = vmatprep.subr.mxu0 0.0
  %1733 = vmatpush1.msra.mxu0 0.0
  %1734 = vmatprep.mubr.f32.mxu0 0.0
  %1735 = vmatmul.mubr.f32.gmra.mrb[0].mxu0 %v1668
  %v1736 = vpop.f32.mrb[0].mxu0
  %v1737 = vadd.f32 0.0, %v1736
  %v1738 = vpop.f32.mrb[0].mxu0
  %1739 = vdwg.mxu0
  %1740 = vrot.lane.b32.xlu0 %v241, 40
  %v1741 = vpop.permute.xlu0 %1740
  %v1744 = vsel %vm247, %v1663, 0
  %1746 = vmatprep.subr.mxu0 0.0
  %1747 = vmatpush1.msra.mxu0 %v1741
  %1748 = vmatprep.subr.mxu0 0.0
  %1749 = vmatpush1.msra.mxu0 0.0
  %1750 = vmatprep.subr.mxu0 0.0
  %1751 = vmatpush1.msra.mxu0 0.0
  %1752 = vmatprep.subr.mxu0 0.0
  %1753 = vmatpush1.msra.mxu0 0.0
  %1754 = vmatprep.subr.mxu0 0.0
  %1755 = vmatpush1.msra.mxu0 0.0
  %1756 = vmatprep.subr.mxu0 0.0
  %1757 = vmatpush1.msra.mxu0 0.0
  %1758 = vmatprep.subr.mxu0 0.0
  %1759 = vmatpush1.msra.mxu0 0.0
  %1760 = vmatprep.subr.mxu0 0.0
  %1761 = vmatpush1.msra.mxu0 0.0
  %1762 = vmatprep.subr.mxu0 0.0
  %1763 = vmatpush1.msra.mxu0 0.0
  %1764 = vmatprep.subr.mxu0 0.0
  %1765 = vmatpush1.msra.mxu0 0.0
  %1766 = vmatprep.subr.mxu0 0.0
  %1767 = vmatpush1.msra.mxu0 0.0
  %1768 = vmatprep.subr.mxu0 0.0
  %1769 = vmatpush1.msra.mxu0 0.0
  %1770 = vmatprep.subr.mxu0 0.0
  %1771 = vmatpush1.msra.mxu0 0.0
  %1772 = vmatprep.subr.mxu0 0.0
  %1773 = vmatpush1.msra.mxu0 0.0
  %1774 = vmatprep.subr.mxu0 0.0
  %1775 = vmatpush1.msra.mxu0 0.0
  %1776 = vmatprep.subr.mxu0 0.0
  %1777 = vmatpush1.msra.mxu0 0.0
  %1778 = vmatprep.subr.mxu0 0.0
  %1779 = vmatpush1.msra.mxu0 0.0
  %1780 = vmatprep.subr.mxu0 0.0
  %1781 = vmatpush1.msra.mxu0 0.0
  %1782 = vmatprep.subr.mxu0 0.0
  %1783 = vmatpush1.msra.mxu0 0.0
  %1784 = vmatprep.subr.mxu0 0.0
  %1785 = vmatpush1.msra.mxu0 0.0
  %1786 = vmatprep.subr.mxu0 0.0
  %1787 = vmatpush1.msra.mxu0 0.0
  %1788 = vmatprep.subr.mxu0 0.0
  %1789 = vmatpush1.msra.mxu0 0.0
  %1790 = vmatprep.subr.mxu0 0.0
  %1791 = vmatpush1.msra.mxu0 0.0
  %1792 = vmatprep.subr.mxu0 0.0
  %1793 = vmatpush1.msra.mxu0 0.0
  %1794 = vmatprep.subr.mxu0 0.0
  %1795 = vmatpush1.msra.mxu0 0.0
  %1796 = vmatprep.subr.mxu0 0.0
  %1797 = vmatpush1.msra.mxu0 0.0
  %1798 = vmatprep.subr.mxu0 0.0
  %1799 = vmatpush1.msra.mxu0 0.0
  %1800 = vmatprep.subr.mxu0 0.0
  %1801 = vmatpush1.msra.mxu0 0.0
  %1802 = vmatprep.subr.mxu0 0.0
  %1803 = vmatpush1.msra.mxu0 0.0
  %1804 = vmatprep.subr.mxu0 0.0
  %1805 = vmatpush1.msra.mxu0 0.0
  %1806 = vmatprep.subr.mxu0 0.0
  %1807 = vmatpush1.msra.mxu0 0.0
  %1808 = vmatprep.subr.mxu0 0.0
  %1809 = vmatpush1.msra.mxu0 0.0
  %1810 = vmatprep.mubr.f32.mxu0 0.0
  %1811 = vmatmul.mubr.f32.gmra.mrb[0].mxu0 %v1744
  %v1812 = vpop.f32.mrb[0].mxu0
  %v1813 = vadd.f32 0.0, %v1812
  %v1814 = vpop.f32.mrb[0].mxu0
  %1815 = vdwg.mxu0
  %v1817 = vsel %vm247, %v1737, 0
  %v1820 = vsel %vm247, %v1813, 0
  %1822 = vmatprep.subr.mxu0 0.0
  %1823 = vmatpush1.msra.mxu0 %v155
  %1824 = vmatprep.subr.mxu0 0.0
  %1825 = vmatpush1.msra.mxu0 0.0
  %1826 = vmatprep.subr.mxu0 0.0
  %1827 = vmatpush1.msra.mxu0 0.0
  %1828 = vmatprep.subr.mxu0 0.0
  %1829 = vmatpush1.msra.mxu0 0.0
  %1830 = vmatprep.subr.mxu0 0.0
  %1831 = vmatpush1.msra.mxu0 0.0
  %1832 = vmatprep.subr.mxu0 0.0
  %1833 = vmatpush1.msra.mxu0 0.0
  %1834 = vmatprep.subr.mxu0 0.0
  %1835 = vmatpush1.msra.mxu0 0.0
  %1836 = vmatprep.subr.mxu0 0.0
  %1837 = vmatpush1.msra.mxu0 0.0
  %1838 = vmatprep.subr.mxu0 0.0
  %1839 = vmatpush1.msra.mxu0 0.0
  %1840 = vmatprep.subr.mxu0 0.0
  %1841 = vmatpush1.msra.mxu0 0.0
  %1842 = vmatprep.subr.mxu0 0.0
  %1843 = vmatpush1.msra.mxu0 0.0
  %1844 = vmatprep.subr.mxu0 0.0
  %1845 = vmatpush1.msra.mxu0 0.0
  %1846 = vmatprep.subr.mxu0 0.0
  %1847 = vmatpush1.msra.mxu0 0.0
  %1848 = vmatprep.subr.mxu0 0.0
  %1849 = vmatpush1.msra.mxu0 0.0
  %1850 = vmatprep.subr.mxu0 0.0
  %1851 = vmatpush1.msra.mxu0 0.0
  %1852 = vmatprep.subr.mxu0 0.0
  %1853 = vmatpush1.msra.mxu0 0.0
  %1854 = vmatprep.subr.mxu0 0.0
  %1855 = vmatpush1.msra.mxu0 0.0
  %1856 = vmatprep.subr.mxu0 0.0
  %1857 = vmatpush1.msra.mxu0 0.0
  %1858 = vmatprep.subr.mxu0 0.0
  %1859 = vmatpush1.msra.mxu0 0.0
  %1860 = vmatprep.subr.mxu0 0.0
  %1861 = vmatpush1.msra.mxu0 0.0
  %1862 = vmatprep.subr.mxu0 0.0
  %1863 = vmatpush1.msra.mxu0 0.0
  %1864 = vmatprep.subr.mxu0 0.0
  %1865 = vmatpush1.msra.mxu0 0.0
  %1866 = vmatprep.subr.mxu0 0.0
  %1867 = vmatpush1.msra.mxu0 0.0
  %1868 = vmatprep.subr.mxu0 0.0
  %1869 = vmatpush1.msra.mxu0 0.0
  %1870 = vmatprep.subr.mxu0 0.0
  %1871 = vmatpush1.msra.mxu0 0.0
  %1872 = vmatprep.subr.mxu0 0.0
  %1873 = vmatpush1.msra.mxu0 0.0
  %1874 = vmatprep.subr.mxu0 0.0
  %1875 = vmatpush1.msra.mxu0 0.0
  %1876 = vmatprep.subr.mxu0 0.0
  %1877 = vmatpush1.msra.mxu0 0.0
  %1878 = vmatprep.subr.mxu0 0.0
  %1879 = vmatpush1.msra.mxu0 0.0
  %1880 = vmatprep.subr.mxu0 0.0
  %1881 = vmatpush1.msra.mxu0 0.0
  %1882 = vmatprep.subr.mxu0 0.0
  %1883 = vmatpush1.msra.mxu0 0.0
  %1884 = vmatprep.subr.mxu0 0.0
  %1885 = vmatpush1.msra.mxu0 0.0
  %1886 = vmatprep.mubr.f32.mxu0 0.0
  %1887 = vmatmul.mubr.f32.gmra.mrb[0].mxu0 %v1817
  %v1888 = vpop.f32.mrb[0].mxu0
  %v1889 = vadd.f32 0.0, %v1888
  %v1890 = vpop.f32.mrb[0].mxu0
  %1891 = vmatprep.mubr.f32.mxu0 0.0
  %1892 = vmatmul.mubr.f32.gmra.mrb[0].mxu0 %v1820
  %v1893 = vpop.f32.mrb[0].mxu0
  %v1894 = vadd.f32 0.0, %v1893
  %v1895 = vpop.f32.mrb[0].mxu0
  %1896 = vdwg.mxu0
  %v1897 = vadd.f32 %v1482, %v1889
  %v1898 = vadd.f32 %v1483, %v1894
  %v1899 = vadd.f32 %v139, %v1897
  %v1900 = vadd.f32 %v144, %v1898
  %v1901 = vld [vmem:[%s6] sm:$0x1]
  %v1903 = vlaneseq
  %v1904 = vshrl.u32 %v1903, 7
  %v1905 = vsub.s32 0, %v1904
  %v1906 = vrot.slane %v1901, %v1905
  %v1908 = vadd.f32 %v1899, %v1906
  %v1909 = vadd.f32 %v1900, %v1906
  %v1910 = vld [vmem:[%s7] sm:$0x1]
  %v1911 = vld [vmem:[%s8] sm:$0x1]
  %v1912 = vsel %vm162, %v1908, 0.0
  %1913 = vadd.xlane.f32.xlu0 %v1912
  %v1914 = vpop.xlane.xlu0 %1913
  %v1915 = vsel %vm162, %v1909, 0.0
  %1916 = vadd.xlane.f32.xlu0 %v1915
  %v1917 = vpop.xlane.xlu0 %1916
  %v1918 = vrcp.pop 32.0
  %v1919 = vmul.f32 %v1914, %v1918
  %v1920 = vmul.f32 %v1917, %v1918
  %v1921 = vsub.f32 %v1908, %v1919
  %v1922 = vsub.f32 %v1909, %v1920
  %v1923 = vmul.f32 %v1921, %v1921
  %v1924 = vmul.f32 %v1922, %v1922
  %v1925 = vsel %vm162, %v1923, 0.0
  %1926 = vadd.xlane.f32.xlu0 %v1925
  %v1927 = vpop.xlane.xlu0 %1926
  %v1928 = vsel %vm162, %v1924, 0.0
  %1929 = vadd.xlane.f32.xlu0 %v1928
  %v1930 = vpop.xlane.xlu0 %1929
  %v1931 = vmul.f32 %v1927, %v1918
  %v1932 = vmul.f32 %v1930, %v1918
  %v1933 = vadd.f32 %v1931, 1e-05
  %v1934 = vadd.f32 %v1932, 1e-05
  %v1935 = vrsqrt.pop %v1933
  %v1936 = vrsqrt.pop %v1934
  %v1937 = vmul.f32 %v1921, %v1935
  %v1938 = vmul.f32 %v1922, %v1936
  %v1940 = vlaneseq
  %v1941 = vshrl.u32 %v1940, 7
  %v1942 = vsub.s32 0, %v1941
  %v1943 = vrot.slane %v1910, %v1942
  %v1945 = vmul.f32 %v1937, %v1943
  %v1946 = vmul.f32 %v1938, %v1943
  %v1948 = vlaneseq
  %v1949 = vshrl.u32 %v1948, 7
  %v1950 = vsub.s32 0, %v1949
  %v1951 = vrot.slane %v1911, %v1950
  %v1953 = vadd.f32 %v1945, %v1951
  %v1954 = vadd.f32 %v1946, %v1951
  %v1955 = vld [vmem:[%s9] sm:$0xff]
  %v1956 = vld [vmem:[%s9 + $0x8] sm:$0xff]
  %v1957 = vld [vmem:[%s9 + $0x10] sm:$0xff]
  %v1958 = vld [vmem:[%s9 + $0x18] sm:$0xff]
  %v1959 = vld [vmem:[%s9 + $0x20] sm:$0xff]
  %v1960 = vld [vmem:[%s9 + $0x28] sm:$0xff]
  %v1961 = vld [vmem:[%s9 + $0x30] sm:$0xff]
  %v1962 = vld [vmem:[%s9 + $0x38] sm:$0xff]
  %v1963 = vld [vmem:[%s10] sm:$0x3]
  %v1965 = vlaneseq
  %v1966 = vshrl.u32 %v1965, 7
  %v1967 = vsub.s32 0, %v1966
  %v1968 = vrot.slane %v1963, %v1967
  %v1969 = vlaneseq
  %v1970 = vshrl.u32 %v1969, 7
  %v1971 = vsub.s32 1, %v1970
  %v1972 = vrot.slane %v1963, %v1971
  %v1976 = vsel %vm162, %v1953, 0
  %v1979 = vsel %vm162, %v1954, 0
  %1981 = vmatprep.subr.mxu0 %v1956
  %1982 = vmatpush1.msra.mxu0 %v1955
  %1983 = vmatprep.subr.mxu0 %v1958
  %1984 = vmatpush1.msra.mxu0 %v1957
  %1985 = vmatprep.subr.mxu0 %v1960
  %1986 = vmatpush1.msra.mxu0 %v1959
  %1987 = vmatprep.subr.mxu0 %v1962
  %1988 = vmatpush1.msra.mxu0 %v1961
  %1989 = vmatprep.subr.mxu0 0.0
  %1990 = vmatpush1.msra.mxu0 0.0
  %1991 = vmatprep.subr.mxu0 0.0
  %1992 = vmatpush1.msra.mxu0 0.0
  %1993 = vmatprep.subr.mxu0 0.0
  %1994 = vmatpush1.msra.mxu0 0.0
  %1995 = vmatprep.subr.mxu0 0.0
  %1996 = vmatpush1.msra.mxu0 0.0
  %1997 = vmatprep.subr.mxu0 0.0
  %1998 = vmatpush1.msra.mxu0 0.0
  %1999 = vmatprep.subr.mxu0 0.0
  %2000 = vmatpush1.msra.mxu0 0.0
  %2001 = vmatprep.subr.mxu0 0.0
  %2002 = vmatpush1.msra.mxu0 0.0
  %2003 = vmatprep.subr.mxu0 0.0
  %2004 = vmatpush1.msra.mxu0 0.0
  %2005 = vmatprep.subr.mxu0 0.0
  %2006 = vmatpush1.msra.mxu0 0.0
  %2007 = vmatprep.subr.mxu0 0.0
  %2008 = vmatpush1.msra.mxu0 0.0
  %2009 = vmatprep.subr.mxu0 0.0
  %2010 = vmatpush1.msra.mxu0 0.0
  %2011 = vmatprep.subr.mxu0 0.0
  %2012 = vmatpush1.msra.mxu0 0.0
  %2013 = vmatprep.subr.mxu0 0.0
  %2014 = vmatpush1.msra.mxu0 0.0
  %2015 = vmatprep.subr.mxu0 0.0
  %2016 = vmatpush1.msra.mxu0 0.0
  %2017 = vmatprep.subr.mxu0 0.0
  %2018 = vmatpush1.msra.mxu0 0.0
  %2019 = vmatprep.subr.mxu0 0.0
  %2020 = vmatpush1.msra.mxu0 0.0
  %2021 = vmatprep.subr.mxu0 0.0
  %2022 = vmatpush1.msra.mxu0 0.0
  %2023 = vmatprep.subr.mxu0 0.0
  %2024 = vmatpush1.msra.mxu0 0.0
  %2025 = vmatprep.subr.mxu0 0.0
  %2026 = vmatpush1.msra.mxu0 0.0
  %2027 = vmatprep.subr.mxu0 0.0
  %2028 = vmatpush1.msra.mxu0 0.0
  %2029 = vmatprep.subr.mxu0 0.0
  %2030 = vmatpush1.msra.mxu0 0.0
  %2031 = vmatprep.subr.mxu0 0.0
  %2032 = vmatpush1.msra.mxu0 0.0
  %2033 = vmatprep.subr.mxu0 0.0
  %2034 = vmatpush1.msra.mxu0 0.0
  %2035 = vmatprep.subr.mxu0 0.0
  %2036 = vmatpush1.msra.mxu0 0.0
  %2037 = vmatprep.subr.mxu0 0.0
  %2038 = vmatpush1.msra.mxu0 0.0
  %2039 = vmatprep.subr.mxu0 0.0
  %2040 = vmatpush1.msra.mxu0 0.0
  %2041 = vmatprep.subr.mxu0 0.0
  %2042 = vmatpush1.msra.mxu0 0.0
  %2043 = vmatprep.subr.mxu0 0.0
  %2044 = vmatpush1.msra.mxu0 0.0
  %2045 = vmatprep.mubr.f32.mxu0 0.0
  %2046 = vmatmul.mubr.f32.gmra.mrb[0].mxu0 %v1976
  %v2047 = vpop.f32.mrb[0].mxu0
  %v2048 = vadd.f32 %v1968, %v2047
  %v2049 = vpop.f32.mrb[0].mxu0
  %v2050 = vadd.f32 %v1972, %v2049
  %2051 = vmatprep.mubr.f32.mxu0 0.0
  %2052 = vmatmul.mubr.f32.gmra.mrb[0].mxu0 %v1979
  %v2053 = vpop.f32.mrb[0].mxu0
  %v2054 = vadd.f32 %v1968, %v2053
  %v2055 = vpop.f32.mrb[0].mxu0
  %v2056 = vadd.f32 %v1972, %v2055
  %2057 = vdwg.mxu0
  %v2058 = vmax.f32 %v2048, 0.0
  %v2059 = vmax.f32 %v2050, 0.0
  %v2060 = vmax.f32 %v2054, 0.0
  %v2061 = vmax.f32 %v2056, 0.0
  %v2062 = vld [vmem:[%s11] sm:$0xff]
  %v2063 = vld [vmem:[%s11 + $0x8] sm:$0xff]
  %v2064 = vld [vmem:[%s11 + $0x10] sm:$0xff]
  %v2065 = vld [vmem:[%s11 + $0x18] sm:$0xff]
  %v2066 = vld [vmem:[%s11 + $0x20] sm:$0xff]
  %v2067 = vld [vmem:[%s11 + $0x28] sm:$0xff]
  %v2068 = vld [vmem:[%s11 + $0x30] sm:$0xff]
  %v2069 = vld [vmem:[%s11 + $0x38] sm:$0xff]
  %v2070 = vld [vmem:[%s11 + $0x40] sm:$0xff]
  %v2071 = vld [vmem:[%s11 + $0x48] sm:$0xff]
  %v2072 = vld [vmem:[%s11 + $0x50] sm:$0xff]
  %v2073 = vld [vmem:[%s11 + $0x58] sm:$0xff]
  %v2074 = vld [vmem:[%s11 + $0x60] sm:$0xff]
  %v2075 = vld [vmem:[%s11 + $0x68] sm:$0xff]
  %v2076 = vld [vmem:[%s11 + $0x70] sm:$0xff]
  %v2077 = vld [vmem:[%s11 + $0x78] sm:$0xff]
  %v2078 = vld [vmem:[%s11 + $0x80] sm:$0xff]
  %v2079 = vld [vmem:[%s11 + $0x88] sm:$0xff]
  %v2080 = vld [vmem:[%s11 + $0x90] sm:$0xff]
  %v2081 = vld [vmem:[%s11 + $0x98] sm:$0xff]
  %v2082 = vld [vmem:[%s11 + $0xa0] sm:$0xff]
  %v2083 = vld [vmem:[%s11 + $0xa8] sm:$0xff]
  %v2084 = vld [vmem:[%s11 + $0xb0] sm:$0xff]
  %v2085 = vld [vmem:[%s11 + $0xb8] sm:$0xff]
  %v2086 = vld [vmem:[%s11 + $0xc0] sm:$0xff]
  %v2087 = vld [vmem:[%s11 + $0xc8] sm:$0xff]
  %v2088 = vld [vmem:[%s11 + $0xd0] sm:$0xff]
  %v2089 = vld [vmem:[%s11 + $0xd8] sm:$0xff]
  %v2090 = vld [vmem:[%s11 + $0xe0] sm:$0xff]
  %v2091 = vld [vmem:[%s11 + $0xe8] sm:$0xff]
  %v2092 = vld [vmem:[%s11 + $0xf0] sm:$0xff]
  %v2093 = vld [vmem:[%s11 + $0xf8] sm:$0xff]
  %v2094 = vld [vmem:[%s12] sm:$0x1]
  %v2096 = vlaneseq
  %v2097 = vshrl.u32 %v2096, 7
  %v2098 = vsub.s32 0, %v2097
  %v2099 = vrot.slane %v2094, %v2098
  %2101 = vmatprep.subr.mxu0 0.0
  %2102 = vmatpush1.msra.mxu0 %v2062
  %2103 = vmatprep.subr.mxu0 0.0
  %2104 = vmatpush1.msra.mxu0 %v2063
  %2105 = vmatprep.subr.mxu0 0.0
  %2106 = vmatpush1.msra.mxu0 %v2064
  %2107 = vmatprep.subr.mxu0 0.0
  %2108 = vmatpush1.msra.mxu0 %v2065
  %2109 = vmatprep.subr.mxu0 0.0
  %2110 = vmatpush1.msra.mxu0 %v2066
  %2111 = vmatprep.subr.mxu0 0.0
  %2112 = vmatpush1.msra.mxu0 %v2067
  %2113 = vmatprep.subr.mxu0 0.0
  %2114 = vmatpush1.msra.mxu0 %v2068
  %2115 = vmatprep.subr.mxu0 0.0
  %2116 = vmatpush1.msra.mxu0 %v2069
  %2117 = vmatprep.subr.mxu0 0.0
  %2118 = vmatpush1.msra.mxu0 %v2070
  %2119 = vmatprep.subr.mxu0 0.0
  %2120 = vmatpush1.msra.mxu0 %v2071
  %2121 = vmatprep.subr.mxu0 0.0
  %2122 = vmatpush1.msra.mxu0 %v2072
  %2123 = vmatprep.subr.mxu0 0.0
  %2124 = vmatpush1.msra.mxu0 %v2073
  %2125 = vmatprep.subr.mxu0 0.0
  %2126 = vmatpush1.msra.mxu0 %v2074
  %2127 = vmatprep.subr.mxu0 0.0
  %2128 = vmatpush1.msra.mxu0 %v2075
  %2129 = vmatprep.subr.mxu0 0.0
  %2130 = vmatpush1.msra.mxu0 %v2076
  %2131 = vmatprep.subr.mxu0 0.0
  %2132 = vmatpush1.msra.mxu0 %v2077
  %2133 = vmatprep.subr.mxu0 0.0
  %2134 = vmatpush1.msra.mxu0 %v2078
  %2135 = vmatprep.subr.mxu0 0.0
  %2136 = vmatpush1.msra.mxu0 %v2079
  %2137 = vmatprep.subr.mxu0 0.0
  %2138 = vmatpush1.msra.mxu0 %v2080
  %2139 = vmatprep.subr.mxu0 0.0
  %2140 = vmatpush1.msra.mxu0 %v2081
  %2141 = vmatprep.subr.mxu0 0.0
  %2142 = vmatpush1.msra.mxu0 %v2082
  %2143 = vmatprep.subr.mxu0 0.0
  %2144 = vmatpush1.msra.mxu0 %v2083
  %2145 = vmatprep.subr.mxu0 0.0
  %2146 = vmatpush1.msra.mxu0 %v2084
  %2147 = vmatprep.subr.mxu0 0.0
  %2148 = vmatpush1.msra.mxu0 %v2085
  %2149 = vmatprep.subr.mxu0 0.0
  %2150 = vmatpush1.msra.mxu0 %v2086
  %2151 = vmatprep.subr.mxu0 0.0
  %2152 = vmatpush1.msra.mxu0 %v2087
  %2153 = vmatprep.subr.mxu0 0.0
  %2154 = vmatpush1.msra.mxu0 %v2088
  %2155 = vmatprep.subr.mxu0 0.0
  %2156 = vmatpush1.msra.mxu0 %v2089
  %2157 = vmatprep.subr.mxu0 0.0
  %2158 = vmatpush1.msra.mxu0 %v2090
  %2159 = vmatprep.subr.mxu0 0.0
  %2160 = vmatpush1.msra.mxu0 %v2091
  %2161 = vmatprep.subr.mxu0 0.0
  %2162 = vmatpush1.msra.mxu0 %v2092
  %2163 = vmatprep.subr.mxu0 0.0
  %2164 = vmatpush1.msra.mxu0 %v2093
  %2165 = vmatprep.mubr.f32.mxu0 %v2059
  %2166 = vmatmul.mubr.f32.gmra.mrb[0].mxu0 %v2058
  %v2167 = vpop.f32.mrb[0].mxu0
  %v2168 = vadd.f32 %v2099, %v2167
  %v2169 = vpop.f32.mrb[0].mxu0
  %2170 = vmatprep.mubr.f32.mxu0 %v2061
  %2171 = vmatmul.mubr.f32.gmra.mrb[0].mxu0 %v2060
  %v2172 = vpop.f32.mrb[0].mxu0
  %v2173 = vadd.f32 %v2099, %v2172
  %v2174 = vpop.f32.mrb[0].mxu0
  %2175 = vdwg.mxu0
  %v2176 = vadd.f32 %v1953, %v2168
  %v2177 = vadd.f32 %v1954, %v2173
  %v2178 = vld [vmem:[%s13] sm:$0x1]
  %v2179 = vld [vmem:[%s14] sm:$0x1]
  %v2180 = vsel %vm162, %v2176, 0.0
  %2181 = vadd.xlane.f32.xlu0 %v2180
  %v2182 = vpop.xlane.xlu0 %2181
  %v2183 = vsel %vm162, %v2177, 0.0
  %2184 = vadd.xlane.f32.xlu0 %v2183
  %v2185 = vpop.xlane.xlu0 %2184
  %v2186 = vmul.f32 %v2182, %v1918
  %v2187 = vmul.f32 %v2185, %v1918
  %v2188 = vsub.f32 %v2176, %v2186
  %v2189 = vsub.f32 %v2177, %v2187
  %v2190 = vmul.f32 %v2188, %v2188
  %v2191 = vmul.f32 %v2189, %v2189
  %v2192 = vsel %vm162, %v2190, 0.0
  %2193 = vadd.xlane.f32.xlu0 %v2192
  %v2194 = vpop.xlane.xlu0 %2193
  %v2195 = vsel %vm162, %v2191, 0.0
  %2196 = vadd.xlane.f32.xlu0 %v2195
  %v2197 = vpop.xlane.xlu0 %2196
  %v2198 = vmul.f32 %v2194, %v1918
  %v2199 = vmul.f32 %v2197, %v1918
  %v2200 = vadd.f32 %v2198, 1e-05
  %v2201 = vadd.f32 %v2199, 1e-05
  %v2202 = vrsqrt.pop %v2200
  %v2203 = vrsqrt.pop %v2201
  %v2204 = vmul.f32 %v2188, %v2202
  %v2205 = vmul.f32 %v2189, %v2203
  %v2207 = vlaneseq
  %v2208 = vshrl.u32 %v2207, 7
  %v2209 = vsub.s32 0, %v2208
  %v2210 = vrot.slane %v2178, %v2209
  %v2212 = vmul.f32 %v2204, %v2210
  %v2213 = vmul.f32 %v2205, %v2210
  %v2215 = vlaneseq
  %v2216 = vshrl.u32 %v2215, 7
  %v2217 = vsub.s32 0, %v2216
  %v2218 = vrot.slane %v2179, %v2217
  %v2220 = vadd.f32 %v2212, %v2218
  %v2221 = vadd.f32 %v2213, %v2218
  %s2222 = scalar_lea.vmem %s3, 32
  %v2223 = vld [vmem:[%s2222] sm:$0xff]
  %v2224 = vld [vmem:[%s2222 + $0x8] sm:$0xff]
  %v2225 = vld [vmem:[%s2222 + $0x10] sm:$0xff]
  %v2226 = vld [vmem:[%s2222 + $0x18] sm:$0xff]
  %s2227 = scalar_lea.vmem %s4, 1
  %v2228 = vld [vmem:[%s2227] sm:$0x1]
  %s2229 = scalar_lea.vmem %s5, 32
  %v2230 = vld [vmem:[%s2229] sm:$0xff]
  %v2231 = vld [vmem:[%s2229 + $0x8] sm:$0xff]
  %v2232 = vld [vmem:[%s2229 + $0x10] sm:$0xff]
  %v2233 = vld [vmem:[%s2229 + $0x18] sm:$0xff]
  %v2235 = vlaneseq
  %v2236 = vshrl.u32 %v2235, 7
  %v2237 = vsub.s32 0, %v2236
  %v2238 = vrot.slane %v2228, %v2237
  %v2241 = vsel %vm162, %v2220, 0
  %v2244 = vsel %vm162, %v2221, 0
  %2246 = vmatprep.subr.mxu0 0.0
  %2247 = vmatpush1.msra.mxu0 %v2223
  %2248 = vmatprep.subr.mxu0 0.0
  %2249 = vmatpush1.msra.mxu0 %v2224
  %2250 = vmatprep.subr.mxu0 0.0
  %2251 = vmatpush1.msra.mxu0 %v2225
  %2252 = vmatprep.subr.mxu0 0.0
  %2253 = vmatpush1.msra.mxu0 %v2226
  %2254 = vmatprep.subr.mxu0 0.0
  %2255 = vmatpush1.msra.mxu0 0.0
  %2256 = vmatprep.subr.mxu0 0.0
  %2257 = vmatpush1.msra.mxu0 0.0
  %2258 = vmatprep.subr.mxu0 0.0
  %2259 = vmatpush1.msra.mxu0 0.0
  %2260 = vmatprep.subr.mxu0 0.0
  %2261 = vmatpush1.msra.mxu0 0.0
  %2262 = vmatprep.subr.mxu0 0.0
  %2263 = vmatpush1.msra.mxu0 0.0
  %2264 = vmatprep.subr.mxu0 0.0
  %2265 = vmatpush1.msra.mxu0 0.0
  %2266 = vmatprep.subr.mxu0 0.0
  %2267 = vmatpush1.msra.mxu0 0.0
  %2268 = vmatprep.subr.mxu0 0.0
  %2269 = vmatpush1.msra.mxu0 0.0
  %2270 = vmatprep.subr.mxu0 0.0
  %2271 = vmatpush1.msra.mxu0 0.0
  %2272 = vmatprep.subr.mxu0 0.0
  %2273 = vmatpush1.msra.mxu0 0.0
  %2274 = vmatprep.subr.mxu0 0.0
  %2275 = vmatpush1.msra.mxu0 0.0
  %2276 = vmatprep.subr.mxu0 0.0
  %2277 = vmatpush1.msra.mxu0 0.0
  %2278 = vmatprep.subr.mxu0 0.0
  %2279 = vmatpush1.msra.mxu0 0.0
  %2280 = vmatprep.subr.mxu0 0.0
  %2281 = vmatpush1.msra.mxu0 0.0
  %2282 = vmatprep.subr.mxu0 0.0
  %2283 = vmatpush1.msra.mxu0 0.0
  %2284 = vmatprep.subr.mxu0 0.0
  %2285 = vmatpush1.msra.mxu0 0.0
  %2286 = vmatprep.subr.mxu0 0.0
  %2287 = vmatpush1.msra.mxu0 0.0
  %2288 = vmatprep.subr.mxu0 0.0
  %2289 = vmatpush1.msra.mxu0 0.0
  %2290 = vmatprep.subr.mxu0 0.0
  %2291 = vmatpush1.msra.mxu0 0.0
  %2292 = vmatprep.subr.mxu0 0.0
  %2293 = vmatpush1.msra.mxu0 0.0
  %2294 = vmatprep.subr.mxu0 0.0
  %2295 = vmatpush1.msra.mxu0 0.0
  %2296 = vmatprep.subr.mxu0 0.0
  %2297 = vmatpush1.msra.mxu0 0.0
  %2298 = vmatprep.subr.mxu0 0.0
  %2299 = vmatpush1.msra.mxu0 0.0
  %2300 = vmatprep.subr.mxu0 0.0
  %2301 = vmatpush1.msra.mxu0 0.0
  %2302 = vmatprep.subr.mxu0 0.0
  %2303 = vmatpush1.msra.mxu0 0.0
  %2304 = vmatprep.subr.mxu0 0.0
  %2305 = vmatpush1.msra.mxu0 0.0
  %2306 = vmatprep.subr.mxu0 0.0
  %2307 = vmatpush1.msra.mxu0 0.0
  %2308 = vmatprep.subr.mxu0 0.0
  %2309 = vmatpush1.msra.mxu0 0.0
  %2310 = vmatprep.mubr.f32.mxu0 0.0
  %2311 = vmatmul.mubr.f32.gmra.mrb[0].mxu0 %v2241
  %v2312 = vpop.f32.mrb[0].mxu0
  %v2313 = vadd.f32 %v2238, %v2312
  %v2314 = vpop.f32.mrb[0].mxu0
  %2315 = vmatprep.mubr.f32.mxu0 0.0
  %2316 = vmatmul.mubr.f32.gmra.mrb[0].mxu0 %v2244
  %v2317 = vpop.f32.mrb[0].mxu0
  %v2318 = vadd.f32 %v2238, %v2317
  %v2319 = vpop.f32.mrb[0].mxu0
  %2320 = vdwg.mxu0
  %2322 = vrot.lane.b32.xlu0 %v2313, 96
  %v2323 = vpop.permute.xlu0 %2322
  %v2324 = vsel %vm247, %v2313, 0
  %v2326 = vsel %vm247, %v2323, 0
  %2328 = vmatprep.subr.mxu0 0.0
  %2329 = vmatpush1.xpose.msra.mxu0 %v2326
  %2330 = vmatprep.subr.mxu0 0.0
  %2331 = vmatpush1.xpose.msra.mxu0 0.0
  %2332 = vmatprep.subr.mxu0 0.0
  %2333 = vmatpush1.xpose.msra.mxu0 0.0
  %2334 = vmatprep.subr.mxu0 0.0
  %2335 = vmatpush1.xpose.msra.mxu0 0.0
  %2336 = vmatprep.subr.mxu0 0.0
  %2337 = vmatpush1.xpose.msra.mxu0 0.0
  %2338 = vmatprep.subr.mxu0 0.0
  %2339 = vmatpush1.xpose.msra.mxu0 0.0
  %2340 = vmatprep.subr.mxu0 0.0
  %2341 = vmatpush1.xpose.msra.mxu0 0.0
  %2342 = vmatprep.subr.mxu0 0.0
  %2343 = vmatpush1.xpose.msra.mxu0 0.0
  %2344 = vmatprep.subr.mxu0 0.0
  %2345 = vmatpush1.xpose.msra.mxu0 0.0
  %2346 = vmatprep.subr.mxu0 0.0
  %2347 = vmatpush1.xpose.msra.mxu0 0.0
  %2348 = vmatprep.subr.mxu0 0.0
  %2349 = vmatpush1.xpose.msra.mxu0 0.0
  %2350 = vmatprep.subr.mxu0 0.0
  %2351 = vmatpush1.xpose.msra.mxu0 0.0
  %2352 = vmatprep.subr.mxu0 0.0
  %2353 = vmatpush1.xpose.msra.mxu0 0.0
  %2354 = vmatprep.subr.mxu0 0.0
  %2355 = vmatpush1.xpose.msra.mxu0 0.0
  %2356 = vmatprep.subr.mxu0 0.0
  %2357 = vmatpush1.xpose.msra.mxu0 0.0
  %2358 = vmatprep.subr.mxu0 0.0
  %2359 = vmatpush1.xpose.msra.mxu0 0.0
  %2360 = vmatprep.subr.mxu0 0.0
  %2361 = vmatpush1.xpose.msra.mxu0 0.0
  %2362 = vmatprep.subr.mxu0 0.0
  %2363 = vmatpush1.xpose.msra.mxu0 0.0
  %2364 = vmatprep.subr.mxu0 0.0
  %2365 = vmatpush1.xpose.msra.mxu0 0.0
  %2366 = vmatprep.subr.mxu0 0.0
  %2367 = vmatpush1.xpose.msra.mxu0 0.0
  %2368 = vmatprep.subr.mxu0 0.0
  %2369 = vmatpush1.xpose.msra.mxu0 0.0
  %2370 = vmatprep.subr.mxu0 0.0
  %2371 = vmatpush1.xpose.msra.mxu0 0.0
  %2372 = vmatprep.subr.mxu0 0.0
  %2373 = vmatpush1.xpose.msra.mxu0 0.0
  %2374 = vmatprep.subr.mxu0 0.0
  %2375 = vmatpush1.xpose.msra.mxu0 0.0
  %2376 = vmatprep.subr.mxu0 0.0
  %2377 = vmatpush1.xpose.msra.mxu0 0.0
  %2378 = vmatprep.subr.mxu0 0.0
  %2379 = vmatpush1.xpose.msra.mxu0 0.0
  %2380 = vmatprep.subr.mxu0 0.0
  %2381 = vmatpush1.xpose.msra.mxu0 0.0
  %2382 = vmatprep.subr.mxu0 0.0
  %2383 = vmatpush1.xpose.msra.mxu0 0.0
  %2384 = vmatprep.subr.mxu0 0.0
  %2385 = vmatpush1.xpose.msra.mxu0 0.0
  %2386 = vmatprep.subr.mxu0 0.0
  %2387 = vmatpush1.xpose.msra.mxu0 0.0
  %2388 = vmatprep.subr.mxu0 0.0
  %2389 = vmatpush1.xpose.msra.mxu0 0.0
  %2390 = vmatprep.subr.mxu0 0.0
  %2391 = vmatpush1.xpose.msra.mxu0 0.0
  %2392 = vmatprep.mubr.f32.mxu0 0.0
  %2393 = vmatmul.mubr.f32.gmra.mrb[0].mxu0 %v2324
  %v2394 = vpop.f32.mrb[0].mxu0
  %v2395 = vadd.f32 0.0, %v2394
  %v2396 = vpop.f32.mrb[0].mxu0
  %2397 = vdwg.mxu0
  %2399 = vrot.lane.b32.xlu0 %v2318, 96
  %v2400 = vpop.permute.xlu0 %2399
  %v2401 = vsel %vm247, %v2318, 0
  %v2403 = vsel %vm247, %v2400, 0
  %2405 = vmatprep.subr.mxu0 0.0
  %2406 = vmatpush1.xpose.msra.mxu0 %v2403
  %2407 = vmatprep.subr.mxu0 0.0
  %2408 = vmatpush1.xpose.msra.mxu0 0.0
  %2409 = vmatprep.subr.mxu0 0.0
  %2410 = vmatpush1.xpose.msra.mxu0 0.0
  %2411 = vmatprep.subr.mxu0 0.0
  %2412 = vmatpush1.xpose.msra.mxu0 0.0
  %2413 = vmatprep.subr.mxu0 0.0
  %2414 = vmatpush1.xpose.msra.mxu0 0.0
  %2415 = vmatprep.subr.mxu0 0.0
  %2416 = vmatpush1.xpose.msra.mxu0 0.0
  %2417 = vmatprep.subr.mxu0 0.0
  %2418 = vmatpush1.xpose.msra.mxu0 0.0
  %2419 = vmatprep.subr.mxu0 0.0
  %2420 = vmatpush1.xpose.msra.mxu0 0.0
  %2421 = vmatprep.subr.mxu0 0.0
  %2422 = vmatpush1.xpose.msra.mxu0 0.0
  %2423 = vmatprep.subr.mxu0 0.0
  %2424 = vmatpush1.xpose.msra.mxu0 0.0
  %2425 = vmatprep.subr.mxu0 0.0
  %2426 = vmatpush1.xpose.msra.mxu0 0.0
  %2427 = vmatprep.subr.mxu0 0.0
  %2428 = vmatpush1.xpose.msra.mxu0 0.0
  %2429 = vmatprep.subr.mxu0 0.0
  %2430 = vmatpush1.xpose.msra.mxu0 0.0
  %2431 = vmatprep.subr.mxu0 0.0
  %2432 = vmatpush1.xpose.msra.mxu0 0.0
  %2433 = vmatprep.subr.mxu0 0.0
  %2434 = vmatpush1.xpose.msra.mxu0 0.0
  %2435 = vmatprep.subr.mxu0 0.0
  %2436 = vmatpush1.xpose.msra.mxu0 0.0
  %2437 = vmatprep.subr.mxu0 0.0
  %2438 = vmatpush1.xpose.msra.mxu0 0.0
  %2439 = vmatprep.subr.mxu0 0.0
  %2440 = vmatpush1.xpose.msra.mxu0 0.0
  %2441 = vmatprep.subr.mxu0 0.0
  %2442 = vmatpush1.xpose.msra.mxu0 0.0
  %2443 = vmatprep.subr.mxu0 0.0
  %2444 = vmatpush1.xpose.msra.mxu0 0.0
  %2445 = vmatprep.subr.mxu0 0.0
  %2446 = vmatpush1.xpose.msra.mxu0 0.0
  %2447 = vmatprep.subr.mxu0 0.0
  %2448 = vmatpush1.xpose.msra.mxu0 0.0
  %2449 = vmatprep.subr.mxu0 0.0
  %2450 = vmatpush1.xpose.msra.mxu0 0.0
  %2451 = vmatprep.subr.mxu0 0.0
  %2452 = vmatpush1.xpose.msra.mxu0 0.0
  %2453 = vmatprep.subr.mxu0 0.0
  %2454 = vmatpush1.xpose.msra.mxu0 0.0
  %2455 = vmatprep.subr.mxu0 0.0
  %2456 = vmatpush1.xpose.msra.mxu0 0.0
  %2457 = vmatprep.subr.mxu0 0.0
  %2458 = vmatpush1.xpose.msra.mxu0 0.0
  %2459 = vmatprep.subr.mxu0 0.0
  %2460 = vmatpush1.xpose.msra.mxu0 0.0
  %2461 = vmatprep.subr.mxu0 0.0
  %2462 = vmatpush1.xpose.msra.mxu0 0.0
  %2463 = vmatprep.subr.mxu0 0.0
  %2464 = vmatpush1.xpose.msra.mxu0 0.0
  %2465 = vmatprep.subr.mxu0 0.0
  %2466 = vmatpush1.xpose.msra.mxu0 0.0
  %2467 = vmatprep.subr.mxu0 0.0
  %2468 = vmatpush1.xpose.msra.mxu0 0.0
  %2469 = vmatprep.mubr.f32.mxu0 0.0
  %2470 = vmatmul.mubr.f32.gmra.mrb[0].mxu0 %v2401
  %v2471 = vpop.f32.mrb[0].mxu0
  %v2472 = vadd.f32 0.0, %v2471
  %v2473 = vpop.f32.mrb[0].mxu0
  %2474 = vdwg.mxu0
  %v2475 = vmul.f32 %v2395, 0.35355338
  %v2476 = vmul.f32 %v2472, 0.35355338
  %v2477 = vsel %vm247, %v2475, -inf
  %2478 = vmax.xlane.f32.xlu0 %v2477
  %v2479 = vpop.xlane.xlu0 %2478
  %v2480 = vsel %vm247, %v2476, -inf
  %2481 = vmax.xlane.f32.xlu0 %v2480
  %v2482 = vpop.xlane.xlu0 %2481
  %v2483 = vsub.f32 %v2475, %v2479
  %v2484 = vsub.f32 %v2476, %v2482
  %v2485 = vmul.f32 %v2483, 1.442695
  %v2486 = vpow.pop %v2485
  %v2487 = vmul.f32 %v2484, 1.442695
  %v2488 = vpow.pop %v2487
  %v2489 = vsel %vm247, %v2486, 0.0
  %2490 = vadd.xlane.f32.xlu0 %v2489
  %v2491 = vpop.xlane.xlu0 %2490
  %v2492 = vsel %vm247, %v2488, 0.0
  %2493 = vadd.xlane.f32.xlu0 %v2492
  %v2494 = vpop.xlane.xlu0 %2493
  %v2495 = vrcp.pop %v2491
  %v2496 = vmul.f32 %v2486, %v2495
  %v2497 = vrcp.pop %v2494
  %v2498 = vmul.f32 %v2488, %v2497
  %2499 = vrot.lane.b32.xlu0 %v2313, 64
  %v2500 = vpop.permute.xlu0 %2499
  %v2503 = vsel %vm247, %v2496, 0
  %2505 = vmatprep.subr.mxu0 0.0
  %2506 = vmatpush1.msra.mxu0 %v2500
  %2507 = vmatprep.subr.mxu0 0.0
  %2508 = vmatpush1.msra.mxu0 0.0
  %2509 = vmatprep.subr.mxu0 0.0
  %2510 = vmatpush1.msra.mxu0 0.0
  %2511 = vmatprep.subr.mxu0 0.0
  %2512 = vmatpush1.msra.mxu0 0.0
  %2513 = vmatprep.subr.mxu0 0.0
  %2514 = vmatpush1.msra.mxu0 0.0
  %2515 = vmatprep.subr.mxu0 0.0
  %2516 = vmatpush1.msra.mxu0 0.0
  %2517 = vmatprep.subr.mxu0 0.0
  %2518 = vmatpush1.msra.mxu0 0.0
  %2519 = vmatprep.subr.mxu0 0.0
  %2520 = vmatpush1.msra.mxu0 0.0
  %2521 = vmatprep.subr.mxu0 0.0
  %2522 = vmatpush1.msra.mxu0 0.0
  %2523 = vmatprep.subr.mxu0 0.0
  %2524 = vmatpush1.msra.mxu0 0.0
  %2525 = vmatprep.subr.mxu0 0.0
  %2526 = vmatpush1.msra.mxu0 0.0
  %2527 = vmatprep.subr.mxu0 0.0
  %2528 = vmatpush1.msra.mxu0 0.0
  %2529 = vmatprep.subr.mxu0 0.0
  %2530 = vmatpush1.msra.mxu0 0.0
  %2531 = vmatprep.subr.mxu0 0.0
  %2532 = vmatpush1.msra.mxu0 0.0
  %2533 = vmatprep.subr.mxu0 0.0
  %2534 = vmatpush1.msra.mxu0 0.0
  %2535 = vmatprep.subr.mxu0 0.0
  %2536 = vmatpush1.msra.mxu0 0.0
  %2537 = vmatprep.subr.mxu0 0.0
  %2538 = vmatpush1.msra.mxu0 0.0
  %2539 = vmatprep.subr.mxu0 0.0
  %2540 = vmatpush1.msra.mxu0 0.0
  %2541 = vmatprep.subr.mxu0 0.0
  %2542 = vmatpush1.msra.mxu0 0.0
  %2543 = vmatprep.subr.mxu0 0.0
  %2544 = vmatpush1.msra.mxu0 0.0
  %2545 = vmatprep.subr.mxu0 0.0
  %2546 = vmatpush1.msra.mxu0 0.0
  %2547 = vmatprep.subr.mxu0 0.0
  %2548 = vmatpush1.msra.mxu0 0.0
  %2549 = vmatprep.subr.mxu0 0.0
  %2550 = vmatpush1.msra.mxu0 0.0
  %2551 = vmatprep.subr.mxu0 0.0
  %2552 = vmatpush1.msra.mxu0 0.0
  %2553 = vmatprep.subr.mxu0 0.0
  %2554 = vmatpush1.msra.mxu0 0.0
  %2555 = vmatprep.subr.mxu0 0.0
  %2556 = vmatpush1.msra.mxu0 0.0
  %2557 = vmatprep.subr.mxu0 0.0
  %2558 = vmatpush1.msra.mxu0 0.0
  %2559 = vmatprep.subr.mxu0 0.0
  %2560 = vmatpush1.msra.mxu0 0.0
  %2561 = vmatprep.subr.mxu0 0.0
  %2562 = vmatpush1.msra.mxu0 0.0
  %2563 = vmatprep.subr.mxu0 0.0
  %2564 = vmatpush1.msra.mxu0 0.0
  %2565 = vmatprep.subr.mxu0 0.0
  %2566 = vmatpush1.msra.mxu0 0.0
  %2567 = vmatprep.subr.mxu0 0.0
  %2568 = vmatpush1.msra.mxu0 0.0
  %2569 = vmatprep.mubr.f32.mxu0 0.0
  %2570 = vmatmul.mubr.f32.gmra.mrb[0].mxu0 %v2503
  %v2571 = vpop.f32.mrb[0].mxu0
  %v2572 = vadd.f32 0.0, %v2571
  %v2573 = vpop.f32.mrb[0].mxu0
  %2574 = vdwg.mxu0
  %2575 = vrot.lane.b32.xlu0 %v2318, 64
  %v2576 = vpop.permute.xlu0 %2575
  %v2579 = vsel %vm247, %v2498, 0
  %2581 = vmatprep.subr.mxu0 0.0
  %2582 = vmatpush1.msra.mxu0 %v2576
  %2583 = vmatprep.subr.mxu0 0.0
  %2584 = vmatpush1.msra.mxu0 0.0
  %2585 = vmatprep.subr.mxu0 0.0
  %2586 = vmatpush1.msra.mxu0 0.0
  %2587 = vmatprep.subr.mxu0 0.0
  %2588 = vmatpush1.msra.mxu0 0.0
  %2589 = vmatprep.subr.mxu0 0.0
  %2590 = vmatpush1.msra.mxu0 0.0
  %2591 = vmatprep.subr.mxu0 0.0
  %2592 = vmatpush1.msra.mxu0 0.0
  %2593 = vmatprep.subr.mxu0 0.0
  %2594 = vmatpush1.msra.mxu0 0.0
  %2595 = vmatprep.subr.mxu0 0.0
  %2596 = vmatpush1.msra.mxu0 0.0
  %2597 = vmatprep.subr.mxu0 0.0
  %2598 = vmatpush1.msra.mxu0 0.0
  %2599 = vmatprep.subr.mxu0 0.0
  %2600 = vmatpush1.msra.mxu0 0.0
  %2601 = vmatprep.subr.mxu0 0.0
  %2602 = vmatpush1.msra.mxu0 0.0
  %2603 = vmatprep.subr.mxu0 0.0
  %2604 = vmatpush1.msra.mxu0 0.0
  %2605 = vmatprep.subr.mxu0 0.0
  %2606 = vmatpush1.msra.mxu0 0.0
  %2607 = vmatprep.subr.mxu0 0.0
  %2608 = vmatpush1.msra.mxu0 0.0
  %2609 = vmatprep.subr.mxu0 0.0
  %2610 = vmatpush1.msra.mxu0 0.0
  %2611 = vmatprep.subr.mxu0 0.0
  %2612 = vmatpush1.msra.mxu0 0.0
  %2613 = vmatprep.subr.mxu0 0.0
  %2614 = vmatpush1.msra.mxu0 0.0
  %2615 = vmatprep.subr.mxu0 0.0
  %2616 = vmatpush1.msra.mxu0 0.0
  %2617 = vmatprep.subr.mxu0 0.0
  %2618 = vmatpush1.msra.mxu0 0.0
  %2619 = vmatprep.subr.mxu0 0.0
  %2620 = vmatpush1.msra.mxu0 0.0
  %2621 = vmatprep.subr.mxu0 0.0
  %2622 = vmatpush1.msra.mxu0 0.0
  %2623 = vmatprep.subr.mxu0 0.0
  %2624 = vmatpush1.msra.mxu0 0.0
  %2625 = vmatprep.subr.mxu0 0.0
  %2626 = vmatpush1.msra.mxu0 0.0
  %2627 = vmatprep.subr.mxu0 0.0
  %2628 = vmatpush1.msra.mxu0 0.0
  %2629 = vmatprep.subr.mxu0 0.0
  %2630 = vmatpush1.msra.mxu0 0.0
  %2631 = vmatprep.subr.mxu0 0.0
  %2632 = vmatpush1.msra.mxu0 0.0
  %2633 = vmatprep.subr.mxu0 0.0
  %2634 = vmatpush1.msra.mxu0 0.0
  %2635 = vmatprep.subr.mxu0 0.0
  %2636 = vmatpush1.msra.mxu0 0.0
  %2637 = vmatprep.subr.mxu0 0.0
  %2638 = vmatpush1.msra.mxu0 0.0
  %2639 = vmatprep.subr.mxu0 0.0
  %2640 = vmatpush1.msra.mxu0 0.0
  %2641 = vmatprep.subr.mxu0 0.0
  %2642 = vmatpush1.msra.mxu0 0.0
  %2643 = vmatprep.subr.mxu0 0.0
  %2644 = vmatpush1.msra.mxu0 0.0
  %2645 = vmatprep.mubr.f32.mxu0 0.0
  %2646 = vmatmul.mubr.f32.gmra.mrb[0].mxu0 %v2579
  %v2647 = vpop.f32.mrb[0].mxu0
  %v2648 = vadd.f32 0.0, %v2647
  %v2649 = vpop.f32.mrb[0].mxu0
  %2650 = vdwg.mxu0
  %2651 = vrot.lane.b32.xlu0 %v2313, 120
  %v2652 = vpop.permute.xlu0 %2651
  %2653 = vrot.lane.b32.xlu0 %v2313, 88
  %v2654 = vpop.permute.xlu0 %2653
  %v2655 = vsel %vm247, %v2652, 0
  %v2657 = vsel %vm247, %v2654, 0
  %2659 = vmatprep.subr.mxu0 0.0
  %2660 = vmatpush1.xpose.msra.mxu0 %v2657
  %2661 = vmatprep.subr.mxu0 0.0
  %2662 = vmatpush1.xpose.msra.mxu0 0.0
  %2663 = vmatprep.subr.mxu0 0.0
  %2664 = vmatpush1.xpose.msra.mxu0 0.0
  %2665 = vmatprep.subr.mxu0 0.0
  %2666 = vmatpush1.xpose.msra.mxu0 0.0
  %2667 = vmatprep.subr.mxu0 0.0
  %2668 = vmatpush1.xpose.msra.mxu0 0.0
  %2669 = vmatprep.subr.mxu0 0.0
  %2670 = vmatpush1.xpose.msra.mxu0 0.0
  %2671 = vmatprep.subr.mxu0 0.0
  %2672 = vmatpush1.xpose.msra.mxu0 0.0
  %2673 = vmatprep.subr.mxu0 0.0
  %2674 = vmatpush1.xpose.msra.mxu0 0.0
  %2675 = vmatprep.subr.mxu0 0.0
  %2676 = vmatpush1.xpose.msra.mxu0 0.0
  %2677 = vmatprep.subr.mxu0 0.0
  %2678 = vmatpush1.xpose.msra.mxu0 0.0
  %2679 = vmatprep.subr.mxu0 0.0
  %2680 = vmatpush1.xpose.msra.mxu0 0.0
  %2681 = vmatprep.subr.mxu0 0.0
  %2682 = vmatpush1.xpose.msra.mxu0 0.0
  %2683 = vmatprep.subr.mxu0 0.0
  %2684 = vmatpush1.xpose.msra.mxu0 0.0
  %2685 = vmatprep.subr.mxu0 0.0
  %2686 = vmatpush1.xpose.msra.mxu0 0.0
  %2687 = vmatprep.subr.mxu0 0.0
  %2688 = vmatpush1.xpose.msra.mxu0 0.0
  %2689 = vmatprep.subr.mxu0 0.0
  %2690 = vmatpush1.xpose.msra.mxu0 0.0
  %2691 = vmatprep.subr.mxu0 0.0
  %2692 = vmatpush1.xpose.msra.mxu0 0.0
  %2693 = vmatprep.subr.mxu0 0.0
  %2694 = vmatpush1.xpose.msra.mxu0 0.0
  %2695 = vmatprep.subr.mxu0 0.0
  %2696 = vmatpush1.xpose.msra.mxu0 0.0
  %2697 = vmatprep.subr.mxu0 0.0
  %2698 = vmatpush1.xpose.msra.mxu0 0.0
  %2699 = vmatprep.subr.mxu0 0.0
  %2700 = vmatpush1.xpose.msra.mxu0 0.0
  %2701 = vmatprep.subr.mxu0 0.0
  %2702 = vmatpush1.xpose.msra.mxu0 0.0
  %2703 = vmatprep.subr.mxu0 0.0
  %2704 = vmatpush1.xpose.msra.mxu0 0.0
  %2705 = vmatprep.subr.mxu0 0.0
  %2706 = vmatpush1.xpose.msra.mxu0 0.0
  %2707 = vmatprep.subr.mxu0 0.0
  %2708 = vmatpush1.xpose.msra.mxu0 0.0
  %2709 = vmatprep.subr.mxu0 0.0
  %2710 = vmatpush1.xpose.msra.mxu0 0.0
  %2711 = vmatprep.subr.mxu0 0.0
  %2712 = vmatpush1.xpose.msra.mxu0 0.0
  %2713 = vmatprep.subr.mxu0 0.0
  %2714 = vmatpush1.xpose.msra.mxu0 0.0
  %2715 = vmatprep.subr.mxu0 0.0
  %2716 = vmatpush1.xpose.msra.mxu0 0.0
  %2717 = vmatprep.subr.mxu0 0.0
  %2718 = vmatpush1.xpose.msra.mxu0 0.0
  %2719 = vmatprep.subr.mxu0 0.0
  %2720 = vmatpush1.xpose.msra.mxu0 0.0
  %2721 = vmatprep.subr.mxu0 0.0
  %2722 = vmatpush1.xpose.msra.mxu0 0.0
  %2723 = vmatprep.mubr.f32.mxu0 0.0
  %2724 = vmatmul.mubr.f32.gmra.mrb[0].mxu0 %v2655
  %v2725 = vpop.f32.mrb[0].mxu0
  %v2726 = vadd.f32 0.0, %v2725
  %v2727 = vpop.f32.mrb[0].mxu0
  %2728 = vdwg.mxu0
  %2729 = vrot.lane.b32.xlu0 %v2318, 120
  %v2730 = vpop.permute.xlu0 %2729
  %2731 = vrot.lane.b32.xlu0 %v2318, 88
  %v2732 = vpop.permute.xlu0 %2731
  %v2733 = vsel %vm247, %v2730, 0
  %v2735 = vsel %vm247, %v2732, 0
  %2737 = vmatprep.subr.mxu0 0.0
  %2738 = vmatpush1.xpose.msra.mxu0 %v2735
  %2739 = vmatprep.subr.mxu0 0.0
  %2740 = vmatpush1.xpose.msra.mxu0 0.0
  %2741 = vmatprep.subr.mxu0 0.0
  %2742 = vmatpush1.xpose.msra.mxu0 0.0
  %2743 = vmatprep.subr.mxu0 0.0
  %2744 = vmatpush1.xpose.msra.mxu0 0.0
  %2745 = vmatprep.subr.mxu0 0.0
  %2746 = vmatpush1.xpose.msra.mxu0 0.0
  %2747 = vmatprep.subr.mxu0 0.0
  %2748 = vmatpush1.xpose.msra.mxu0 0.0
  %2749 = vmatprep.subr.mxu0 0.0
  %2750 = vmatpush1.xpose.msra.mxu0 0.0
  %2751 = vmatprep.subr.mxu0 0.0
  %2752 = vmatpush1.xpose.msra.mxu0 0.0
  %2753 = vmatprep.subr.mxu0 0.0
  %2754 = vmatpush1.xpose.msra.mxu0 0.0
  %2755 = vmatprep.subr.mxu0 0.0
  %2756 = vmatpush1.xpose.msra.mxu0 0.0
  %2757 = vmatprep.subr.mxu0 0.0
  %2758 = vmatpush1.xpose.msra.mxu0 0.0
  %2759 = vmatprep.subr.mxu0 0.0
  %2760 = vmatpush1.xpose.msra.mxu0 0.0
  %2761 = vmatprep.subr.mxu0 0.0
  %2762 = vmatpush1.xpose.msra.mxu0 0.0
  %2763 = vmatprep.subr.mxu0 0.0
  %2764 = vmatpush1.xpose.msra.mxu0 0.0
  %2765 = vmatprep.subr.mxu0 0.0
  %2766 = vmatpush1.xpose.msra.mxu0 0.0
  %2767 = vmatprep.subr.mxu0 0.0
  %2768 = vmatpush1.xpose.msra.mxu0 0.0
  %2769 = vmatprep.subr.mxu0 0.0
  %2770 = vmatpush1.xpose.msra.mxu0 0.0
  %2771 = vmatprep.subr.mxu0 0.0
  %2772 = vmatpush1.xpose.msra.mxu0 0.0
  %2773 = vmatprep.subr.mxu0 0.0
  %2774 = vmatpush1.xpose.msra.mxu0 0.0
  %2775 = vmatprep.subr.mxu0 0.0
  %2776 = vmatpush1.xpose.msra.mxu0 0.0
  %2777 = vmatprep.subr.mxu0 0.0
  %2778 = vmatpush1.xpose.msra.mxu0 0.0
  %2779 = vmatprep.subr.mxu0 0.0
  %2780 = vmatpush1.xpose.msra.mxu0 0.0
  %2781 = vmatprep.subr.mxu0 0.0
  %2782 = vmatpush1.xpose.msra.mxu0 0.0
  %2783 = vmatprep.subr.mxu0 0.0
  %2784 = vmatpush1.xpose.msra.mxu0 0.0
  %2785 = vmatprep.subr.mxu0 0.0
  %2786 = vmatpush1.xpose.msra.mxu0 0.0
  %2787 = vmatprep.subr.mxu0 0.0
  %2788 = vmatpush1.xpose.msra.mxu0 0.0
  %2789 = vmatprep.subr.mxu0 0.0
  %2790 = vmatpush1.xpose.msra.mxu0 0.0
  %2791 = vmatprep.subr.mxu0 0.0
  %2792 = vmatpush1.xpose.msra.mxu0 0.0
  %2793 = vmatprep.subr.mxu0 0.0
  %2794 = vmatpush1.xpose.msra.mxu0 0.0
  %2795 = vmatprep.subr.mxu0 0.0
  %2796 = vmatpush1.xpose.msra.mxu0 0.0
  %2797 = vmatprep.subr.mxu0 0.0
  %2798 = vmatpush1.xpose.msra.mxu0 0.0
  %2799 = vmatprep.subr.mxu0 0.0
  %2800 = vmatpush1.xpose.msra.mxu0 0.0
  %2801 = vmatprep.mubr.f32.mxu0 0.0
  %2802 = vmatmul.mubr.f32.gmra.mrb[0].mxu0 %v2733
  %v2803 = vpop.f32.mrb[0].mxu0
  %v2804 = vadd.f32 0.0, %v2803
  %v2805 = vpop.f32.mrb[0].mxu0
  %2806 = vdwg.mxu0
  %v2807 = vmul.f32 %v2726, 0.35355338
  %v2808 = vmul.f32 %v2804, 0.35355338
  %v2809 = vsel %vm247, %v2807, -inf
  %2810 = vmax.xlane.f32.xlu0 %v2809
  %v2811 = vpop.xlane.xlu0 %2810
  %v2812 = vsel %vm247, %v2808, -inf
  %2813 = vmax.xlane.f32.xlu0 %v2812
  %v2814 = vpop.xlane.xlu0 %2813
  %v2815 = vsub.f32 %v2807, %v2811
  %v2816 = vsub.f32 %v2808, %v2814
  %v2817 = vmul.f32 %v2815, 1.442695
  %v2818 = vpow.pop %v2817
  %v2819 = vmul.f32 %v2816, 1.442695
  %v2820 = vpow.pop %v2819
  %v2821 = vsel %vm247, %v2818, 0.0
  %2822 = vadd.xlane.f32.xlu0 %v2821
  %v2823 = vpop.xlane.xlu0 %2822
  %v2824 = vsel %vm247, %v2820, 0.0
  %2825 = vadd.xlane.f32.xlu0 %v2824
  %v2826 = vpop.xlane.xlu0 %2825
  %v2827 = vrcp.pop %v2823
  %v2828 = vmul.f32 %v2818, %v2827
  %v2829 = vrcp.pop %v2826
  %v2830 = vmul.f32 %v2820, %v2829
  %2831 = vrot.lane.b32.xlu0 %v2313, 56
  %v2832 = vpop.permute.xlu0 %2831
  %v2835 = vsel %vm247, %v2828, 0
  %2837 = vmatprep.subr.mxu0 0.0
  %2838 = vmatpush1.msra.mxu0 %v2832
  %2839 = vmatprep.subr.mxu0 0.0
  %2840 = vmatpush1.msra.mxu0 0.0
  %2841 = vmatprep.subr.mxu0 0.0
  %2842 = vmatpush1.msra.mxu0 0.0
  %2843 = vmatprep.subr.mxu0 0.0
  %2844 = vmatpush1.msra.mxu0 0.0
  %2845 = vmatprep.subr.mxu0 0.0
  %2846 = vmatpush1.msra.mxu0 0.0
  %2847 = vmatprep.subr.mxu0 0.0
  %2848 = vmatpush1.msra.mxu0 0.0
  %2849 = vmatprep.subr.mxu0 0.0
  %2850 = vmatpush1.msra.mxu0 0.0
  %2851 = vmatprep.subr.mxu0 0.0
  %2852 = vmatpush1.msra.mxu0 0.0
  %2853 = vmatprep.subr.mxu0 0.0
  %2854 = vmatpush1.msra.mxu0 0.0
  %2855 = vmatprep.subr.mxu0 0.0
  %2856 = vmatpush1.msra.mxu0 0.0
  %2857 = vmatprep.subr.mxu0 0.0
  %2858 = vmatpush1.msra.mxu0 0.0
  %2859 = vmatprep.subr.mxu0 0.0
  %2860 = vmatpush1.msra.mxu0 0.0
  %2861 = vmatprep.subr.mxu0 0.0
  %2862 = vmatpush1.msra.mxu0 0.0
  %2863 = vmatprep.subr.mxu0 0.0
  %2864 = vmatpush1.msra.mxu0 0.0
  %2865 = vmatprep.subr.mxu0 0.0
  %2866 = vmatpush1.msra.mxu0 0.0
  %2867 = vmatprep.subr.mxu0 0.0
  %2868 = vmatpush1.msra.mxu0 0.0
  %2869 = vmatprep.subr.mxu0 0.0
  %2870 = vmatpush1.msra.mxu0 0.0
  %2871 = vmatprep.subr.mxu0 0.0
  %2872 = vmatpush1.msra.mxu0 0.0
  %2873 = vmatprep.subr.mxu0 0.0
  %2874 = vmatpush1.msra.mxu0 0.0
  %2875 = vmatprep.subr.mxu0 0.0
  %2876 = vmatpush1.msra.mxu0 0.0
  %2877 = vmatprep.subr.mxu0 0.0
  %2878 = vmatpush1.msra.mxu0 0.0
  %2879 = vmatprep.subr.mxu0 0.0
  %2880 = vmatpush1.msra.mxu0 0.0
  %2881 = vmatprep.subr.mxu0 0.0
  %2882 = vmatpush1.msra.mxu0 0.0
  %2883 = vmatprep.subr.mxu0 0.0
  %2884 = vmatpush1.msra.mxu0 0.0
  %2885 = vmatprep.subr.mxu0 0.0
  %2886 = vmatpush1.msra.mxu0 0.0
  %2887 = vmatprep.subr.mxu0 0.0
  %2888 = vmatpush1.msra.mxu0 0.0
  %2889 = vmatprep.subr.mxu0 0.0
  %2890 = vmatpush1.msra.mxu0 0.0
  %2891 = vmatprep.subr.mxu0 0.0
  %2892 = vmatpush1.msra.mxu0 0.0
  %2893 = vmatprep.subr.mxu0 0.0
  %2894 = vmatpush1.msra.mxu0 0.0
  %2895 = vmatprep.subr.mxu0 0.0
  %2896 = vmatpush1.msra.mxu0 0.0
  %2897 = vmatprep.subr.mxu0 0.0
  %2898 = vmatpush1.msra.mxu0 0.0
  %2899 = vmatprep.subr.mxu0 0.0
  %2900 = vmatpush1.msra.mxu0 0.0
  %2901 = vmatprep.mubr.f32.mxu0 0.0
  %2902 = vmatmul.mubr.f32.gmra.mrb[0].mxu0 %v2835
  %v2903 = vpop.f32.mrb[0].mxu0
  %v2904 = vadd.f32 0.0, %v2903
  %v2905 = vpop.f32.mrb[0].mxu0
  %2906 = vdwg.mxu0
  %2907 = vrot.lane.b32.xlu0 %v2318, 56
  %v2908 = vpop.permute.xlu0 %2907
  %v2911 = vsel %vm247, %v2830, 0
  %2913 = vmatprep.subr.mxu0 0.0
  %2914 = vmatpush1.msra.mxu0 %v2908
  %2915 = vmatprep.subr.mxu0 0.0
  %2916 = vmatpush1.msra.mxu0 0.0
  %2917 = vmatprep.subr.mxu0 0.0
  %2918 = vmatpush1.msra.mxu0 0.0
  %2919 = vmatprep.subr.mxu0 0.0
  %2920 = vmatpush1.msra.mxu0 0.0
  %2921 = vmatprep.subr.mxu0 0.0
  %2922 = vmatpush1.msra.mxu0 0.0
  %2923 = vmatprep.subr.mxu0 0.0
  %2924 = vmatpush1.msra.mxu0 0.0
  %2925 = vmatprep.subr.mxu0 0.0
  %2926 = vmatpush1.msra.mxu0 0.0
  %2927 = vmatprep.subr.mxu0 0.0
  %2928 = vmatpush1.msra.mxu0 0.0
  %2929 = vmatprep.subr.mxu0 0.0
  %2930 = vmatpush1.msra.mxu0 0.0
  %2931 = vmatprep.subr.mxu0 0.0
  %2932 = vmatpush1.msra.mxu0 0.0
  %2933 = vmatprep.subr.mxu0 0.0
  %2934 = vmatpush1.msra.mxu0 0.0
  %2935 = vmatprep.subr.mxu0 0.0
  %2936 = vmatpush1.msra.mxu0 0.0
  %2937 = vmatprep.subr.mxu0 0.0
  %2938 = vmatpush1.msra.mxu0 0.0
  %2939 = vmatprep.subr.mxu0 0.0
  %2940 = vmatpush1.msra.mxu0 0.0
  %2941 = vmatprep.subr.mxu0 0.0
  %2942 = vmatpush1.msra.mxu0 0.0
  %2943 = vmatprep.subr.mxu0 0.0
  %2944 = vmatpush1.msra.mxu0 0.0
  %2945 = vmatprep.subr.mxu0 0.0
  %2946 = vmatpush1.msra.mxu0 0.0
  %2947 = vmatprep.subr.mxu0 0.0
  %2948 = vmatpush1.msra.mxu0 0.0
  %2949 = vmatprep.subr.mxu0 0.0
  %2950 = vmatpush1.msra.mxu0 0.0
  %2951 = vmatprep.subr.mxu0 0.0
  %2952 = vmatpush1.msra.mxu0 0.0
  %2953 = vmatprep.subr.mxu0 0.0
  %2954 = vmatpush1.msra.mxu0 0.0
  %2955 = vmatprep.subr.mxu0 0.0
  %2956 = vmatpush1.msra.mxu0 0.0
  %2957 = vmatprep.subr.mxu0 0.0
  %2958 = vmatpush1.msra.mxu0 0.0
  %2959 = vmatprep.subr.mxu0 0.0
  %2960 = vmatpush1.msra.mxu0 0.0
  %2961 = vmatprep.subr.mxu0 0.0
  %2962 = vmatpush1.msra.mxu0 0.0
  %2963 = vmatprep.subr.mxu0 0.0
  %2964 = vmatpush1.msra.mxu0 0.0
  %2965 = vmatprep.subr.mxu0 0.0
  %2966 = vmatpush1.msra.mxu0 0.0
  %2967 = vmatprep.subr.mxu0 0.0
  %2968 = vmatpush1.msra.mxu0 0.0
  %2969 = vmatprep.subr.mxu0 0.0
  %2970 = vmatpush1.msra.mxu0 0.0
  %2971 = vmatprep.subr.mxu0 0.0
  %2972 = vmatpush1.msra.mxu0 0.0
  %2973 = vmatprep.subr.mxu0 0.0
  %2974 = vmatpush1.msra.mxu0 0.0
  %2975 = vmatprep.subr.mxu0 0.0
  %2976 = vmatpush1.msra.mxu0 0.0
  %2977 = vmatprep.mubr.f32.mxu0 0.0
  %2978 = vmatmul.mubr.f32.gmra.mrb[0].mxu0 %v2911
  %v2979 = vpop.f32.mrb[0].mxu0
  %v2980 = vadd.f32 0.0, %v2979
  %v2981 = vpop.f32.mrb[0].mxu0
  %2982 = vdwg.mxu0
  %v2984 = vsel %vm247, %v2904, 0
  %v2987 = vsel %vm247, %v2980, 0
  %2989 = vmatprep.subr.mxu0 0.0
  %2990 = vmatpush1.msra.mxu0 %v2231
  %2991 = vmatprep.subr.mxu0 0.0
  %2992 = vmatpush1.msra.mxu0 0.0
  %2993 = vmatprep.subr.mxu0 0.0
  %2994 = vmatpush1.msra.mxu0 0.0
  %2995 = vmatprep.subr.mxu0 0.0
  %2996 = vmatpush1.msra.mxu0 0.0
  %2997 = vmatprep.subr.mxu0 0.0
  %2998 = vmatpush1.msra.mxu0 0.0
  %2999 = vmatprep.subr.mxu0 0.0
  %3000 = vmatpush1.msra.mxu0 0.0
  %3001 = vmatprep.subr.mxu0 0.0
  %3002 = vmatpush1.msra.mxu0 0.0
  %3003 = vmatprep.subr.mxu0 0.0
  %3004 = vmatpush1.msra.mxu0 0.0
  %3005 = vmatprep.subr.mxu0 0.0
  %3006 = vmatpush1.msra.mxu0 0.0
  %3007 = vmatprep.subr.mxu0 0.0
  %3008 = vmatpush1.msra.mxu0 0.0
  %3009 = vmatprep.subr.mxu0 0.0
  %3010 = vmatpush1.msra.mxu0 0.0
  %3011 = vmatprep.subr.mxu0 0.0
  %3012 = vmatpush1.msra.mxu0 0.0
  %3013 = vmatprep.subr.mxu0 0.0
  %3014 = vmatpush1.msra.mxu0 0.0
  %3015 = vmatprep.subr.mxu0 0.0
  %3016 = vmatpush1.msra.mxu0 0.0
  %3017 = vmatprep.subr.mxu0 0.0
  %3018 = vmatpush1.msra.mxu0 0.0
  %3019 = vmatprep.subr.mxu0 0.0
  %3020 = vmatpush1.msra.mxu0 0.0
  %3021 = vmatprep.subr.mxu0 0.0
  %3022 = vmatpush1.msra.mxu0 0.0
  %3023 = vmatprep.subr.mxu0 0.0
  %3024 = vmatpush1.msra.mxu0 0.0
  %3025 = vmatprep.subr.mxu0 0.0
  %3026 = vmatpush1.msra.mxu0 0.0
  %3027 = vmatprep.subr.mxu0 0.0
  %3028 = vmatpush1.msra.mxu0 0.0
  %3029 = vmatprep.subr.mxu0 0.0
  %3030 = vmatpush1.msra.mxu0 0.0
  %3031 = vmatprep.subr.mxu0 0.0
  %3032 = vmatpush1.msra.mxu0 0.0
  %3033 = vmatprep.subr.mxu0 0.0
  %3034 = vmatpush1.msra.mxu0 0.0
  %3035 = vmatprep.subr.mxu0 0.0
  %3036 = vmatpush1.msra.mxu0 0.0
  %3037 = vmatprep.subr.mxu0 0.0
  %3038 = vmatpush1.msra.mxu0 0.0
  %3039 = vmatprep.subr.mxu0 0.0
  %3040 = vmatpush1.msra.mxu0 0.0
  %3041 = vmatprep.subr.mxu0 0.0
  %3042 = vmatpush1.msra.mxu0 0.0
  %3043 = vmatprep.subr.mxu0 0.0
  %3044 = vmatpush1.msra.mxu0 0.0
  %3045 = vmatprep.subr.mxu0 0.0
  %3046 = vmatpush1.msra.mxu0 0.0
  %3047 = vmatprep.subr.mxu0 0.0
  %3048 = vmatpush1.msra.mxu0 0.0
  %3049 = vmatprep.subr.mxu0 0.0
  %3050 = vmatpush1.msra.mxu0 0.0
  %3051 = vmatprep.subr.mxu0 0.0
  %3052 = vmatpush1.msra.mxu0 0.0
  %3053 = vmatprep.mubr.f32.mxu0 0.0
  %3054 = vmatmul.mubr.f32.gmra.mrb[0].mxu0 %v2984
  %v3055 = vpop.f32.mrb[0].mxu0
  %v3056 = vadd.f32 0.0, %v3055
  %v3057 = vpop.f32.mrb[0].mxu0
  %3058 = vmatprep.mubr.f32.mxu0 0.0
  %3059 = vmatmul.mubr.f32.gmra.mrb[0].mxu0 %v2987
  %v3060 = vpop.f32.mrb[0].mxu0
  %v3061 = vadd.f32 0.0, %v3060
  %v3062 = vpop.f32.mrb[0].mxu0
  %3063 = vdwg.mxu0
  %v3065 = vsel %vm247, %v2572, 0
  %v3068 = vsel %vm247, %v2648, 0
  %3070 = vmatprep.subr.mxu0 0.0
  %3071 = vmatpush1.msra.mxu0 %v2230
  %3072 = vmatprep.subr.mxu0 0.0
  %3073 = vmatpush1.msra.mxu0 0.0
  %3074 = vmatprep.subr.mxu0 0.0
  %3075 = vmatpush1.msra.mxu0 0.0
  %3076 = vmatprep.subr.mxu0 0.0
  %3077 = vmatpush1.msra.mxu0 0.0
  %3078 = vmatprep.subr.mxu0 0.0
  %3079 = vmatpush1.msra.mxu0 0.0
  %3080 = vmatprep.subr.mxu0 0.0
  %3081 = vmatpush1.msra.mxu0 0.0
  %3082 = vmatprep.subr.mxu0 0.0
  %3083 = vmatpush1.msra.mxu0 0.0
  %3084 = vmatprep.subr.mxu0 0.0
  %3085 = vmatpush1.msra.mxu0 0.0
  %3086 = vmatprep.subr.mxu0 0.0
  %3087 = vmatpush1.msra.mxu0 0.0
  %3088 = vmatprep.subr.mxu0 0.0
  %3089 = vmatpush1.msra.mxu0 0.0
  %3090 = vmatprep.subr.mxu0 0.0
  %3091 = vmatpush1.msra.mxu0 0.0
  %3092 = vmatprep.subr.mxu0 0.0
  %3093 = vmatpush1.msra.mxu0 0.0
  %3094 = vmatprep.subr.mxu0 0.0
  %3095 = vmatpush1.msra.mxu0 0.0
  %3096 = vmatprep.subr.mxu0 0.0
  %3097 = vmatpush1.msra.mxu0 0.0
  %3098 = vmatprep.subr.mxu0 0.0
  %3099 = vmatpush1.msra.mxu0 0.0
  %3100 = vmatprep.subr.mxu0 0.0
  %3101 = vmatpush1.msra.mxu0 0.0
  %3102 = vmatprep.subr.mxu0 0.0
  %3103 = vmatpush1.msra.mxu0 0.0
  %3104 = vmatprep.subr.mxu0 0.0
  %3105 = vmatpush1.msra.mxu0 0.0
  %3106 = vmatprep.subr.mxu0 0.0
  %3107 = vmatpush1.msra.mxu0 0.0
  %3108 = vmatprep.subr.mxu0 0.0
  %3109 = vmatpush1.msra.mxu0 0.0
  %3110 = vmatprep.subr.mxu0 0.0
  %3111 = vmatpush1.msra.mxu0 0.0
  %3112 = vmatprep.subr.mxu0 0.0
  %3113 = vmatpush1.msra.mxu0 0.0
  %3114 = vmatprep.subr.mxu0 0.0
  %3115 = vmatpush1.msra.mxu0 0.0
  %3116 = vmatprep.subr.mxu0 0.0
  %3117 = vmatpush1.msra.mxu0 0.0
  %3118 = vmatprep.subr.mxu0 0.0
  %3119 = vmatpush1.msra.mxu0 0.0
  %3120 = vmatprep.subr.mxu0 0.0
  %3121 = vmatpush1.msra.mxu0 0.0
  %3122 = vmatprep.subr.mxu0 0.0
  %3123 = vmatpush1.msra.mxu0 0.0
  %3124 = vmatprep.subr.mxu0 0.0
  %3125 = vmatpush1.msra.mxu0 0.0
  %3126 = vmatprep.subr.mxu0 0.0
  %3127 = vmatpush1.msra.mxu0 0.0
  %3128 = vmatprep.subr.mxu0 0.0
  %3129 = vmatpush1.msra.mxu0 0.0
  %3130 = vmatprep.subr.mxu0 0.0
  %3131 = vmatpush1.msra.mxu0 0.0
  %3132 = vmatprep.subr.mxu0 0.0
  %3133 = vmatpush1.msra.mxu0 0.0
  %3134 = vmatprep.mubr.f32.mxu0 0.0
  %3135 = vmatmul.mubr.f32.gmra.mrb[0].mxu0 %v3065
  %v3136 = vpop.f32.mrb[0].mxu0
  %v3137 = vadd.f32 %v3056, %v3136
  %v3138 = vpop.f32.mrb[0].mxu0
  %3139 = vmatprep.mubr.f32.mxu0 0.0
  %3140 = vmatmul.mubr.f32.gmra.mrb[0].mxu0 %v3068
  %v3141 = vpop.f32.mrb[0].mxu0
  %v3142 = vadd.f32 %v3061, %v3141
  %v3143 = vpop.f32.mrb[0].mxu0
  %3144 = vdwg.mxu0
  %3145 = vrot.lane.b32.xlu0 %v2313, 112
  %v3146 = vpop.permute.xlu0 %3145
  %3147 = vrot.lane.b32.xlu0 %v2313, 80
  %v3148 = vpop.permute.xlu0 %3147
  %v3149 = vsel %vm247, %v3146, 0
  %v3151 = vsel %vm247, %v3148, 0
  %3153 = vmatprep.subr.mxu0 0.0
  %3154 = vmatpush1.xpose.msra.mxu0 %v3151
  %3155 = vmatprep.subr.mxu0 0.0
  %3156 = vmatpush1.xpose.msra.mxu0 0.0
  %3157 = vmatprep.subr.mxu0 0.0
  %3158 = vmatpush1.xpose.msra.mxu0 0.0
  %3159 = vmatprep.subr.mxu0 0.0
  %3160 = vmatpush1.xpose.msra.mxu0 0.0
  %3161 = vmatprep.subr.mxu0 0.0
  %3162 = vmatpush1.xpose.msra.mxu0 0.0
  %3163 = vmatprep.subr.mxu0 0.0
  %3164 = vmatpush1.xpose.msra.mxu0 0.0
  %3165 = vmatprep.subr.mxu0 0.0
  %3166 = vmatpush1.xpose.msra.mxu0 0.0
  %3167 = vmatprep.subr.mxu0 0.0
  %3168 = vmatpush1.xpose.msra.mxu0 0.0
  %3169 = vmatprep.subr.mxu0 0.0
  %3170 = vmatpush1.xpose.msra.mxu0 0.0
  %3171 = vmatprep.subr.mxu0 0.0
  %3172 = vmatpush1.xpose.msra.mxu0 0.0
  %3173 = vmatprep.subr.mxu0 0.0
  %3174 = vmatpush1.xpose.msra.mxu0 0.0
  %3175 = vmatprep.subr.mxu0 0.0
  %3176 = vmatpush1.xpose.msra.mxu0 0.0
  %3177 = vmatprep.subr.mxu0 0.0
  %3178 = vmatpush1.xpose.msra.mxu0 0.0
  %3179 = vmatprep.subr.mxu0 0.0
  %3180 = vmatpush1.xpose.msra.mxu0 0.0
  %3181 = vmatprep.subr.mxu0 0.0
  %3182 = vmatpush1.xpose.msra.mxu0 0.0
  %3183 = vmatprep.subr.mxu0 0.0
  %3184 = vmatpush1.xpose.msra.mxu0 0.0
  %3185 = vmatprep.subr.mxu0 0.0
  %3186 = vmatpush1.xpose.msra.mxu0 0.0
  %3187 = vmatprep.subr.mxu0 0.0
  %3188 = vmatpush1.xpose.msra.mxu0 0.0
  %3189 = vmatprep.subr.mxu0 0.0
  %3190 = vmatpush1.xpose.msra.mxu0 0.0
  %3191 = vmatprep.subr.mxu0 0.0
  %3192 = vmatpush1.xpose.msra.mxu0 0.0
  %3193 = vmatprep.subr.mxu0 0.0
  %3194 = vmatpush1.xpose.msra.mxu0 0.0
  %3195 = vmatprep.subr.mxu0 0.0
  %3196 = vmatpush1.xpose.msra.mxu0 0.0
  %3197 = vmatprep.subr.mxu0 0.0
  %3198 = vmatpush1.xpose.msra.mxu0 0.0
  %3199 = vmatprep.subr.mxu0 0.0
  %3200 = vmatpush1.xpose.msra.mxu0 0.0
  %3201 = vmatprep.subr.mxu0 0.0
  %3202 = vmatpush1.xpose.msra.mxu0 0.0
  %3203 = vmatprep.subr.mxu0 0.0
  %3204 = vmatpush1.xpose.msra.mxu0 0.0
  %3205 = vmatprep.subr.mxu0 0.0
  %3206 = vmatpush1.xpose.msra.mxu0 0.0
  %3207 = vmatprep.subr.mxu0 0.0
  %3208 = vmatpush1.xpose.msra.mxu0 0.0
  %3209 = vmatprep.subr.mxu0 0.0
  %3210 = vmatpush1.xpose.msra.mxu0 0.0
  %3211 = vmatprep.subr.mxu0 0.0
  %3212 = vmatpush1.xpose.msra.mxu0 0.0
  %3213 = vmatprep.subr.mxu0 0.0
  %3214 = vmatpush1.xpose.msra.mxu0 0.0
  %3215 = vmatprep.subr.mxu0 0.0
  %3216 = vmatpush1.xpose.msra.mxu0 0.0
  %3217 = vmatprep.mubr.f32.mxu0 0.0
  %3218 = vmatmul.mubr.f32.gmra.mrb[0].mxu0 %v3149
  %v3219 = vpop.f32.mrb[0].mxu0
  %v3220 = vadd.f32 0.0, %v3219
  %v3221 = vpop.f32.mrb[0].mxu0
  %3222 = vdwg.mxu0
  %3223 = vrot.lane.b32.xlu0 %v2318, 112
  %v3224 = vpop.permute.xlu0 %3223
  %3225 = vrot.lane.b32.xlu0 %v2318, 80
  %v3226 = vpop.permute.xlu0 %3225
  %v3227 = vsel %vm247, %v3224, 0
  %v3229 = vsel %vm247, %v3226, 0
  %3231 = vmatprep.subr.mxu0 0.0
  %3232 = vmatpush1.xpose.msra.mxu0 %v3229
  %3233 = vmatprep.subr.mxu0 0.0
  %3234 = vmatpush1.xpose.msra.mxu0 0.0
  %3235 = vmatprep.subr.mxu0 0.0
  %3236 = vmatpush1.xpose.msra.mxu0 0.0
  %3237 = vmatprep.subr.mxu0 0.0
  %3238 = vmatpush1.xpose.msra.mxu0 0.0
  %3239 = vmatprep.subr.mxu0 0.0
  %3240 = vmatpush1.xpose.msra.mxu0 0.0
  %3241 = vmatprep.subr.mxu0 0.0
  %3242 = vmatpush1.xpose.msra.mxu0 0.0
  %3243 = vmatprep.subr.mxu0 0.0
  %3244 = vmatpush1.xpose.msra.mxu0 0.0
  %3245 = vmatprep.subr.mxu0 0.0
  %3246 = vmatpush1.xpose.msra.mxu0 0.0
  %3247 = vmatprep.subr.mxu0 0.0
  %3248 = vmatpush1.xpose.msra.mxu0 0.0
  %3249 = vmatprep.subr.mxu0 0.0
  %3250 = vmatpush1.xpose.msra.mxu0 0.0
  %3251 = vmatprep.subr.mxu0 0.0
  %3252 = vmatpush1.xpose.msra.mxu0 0.0
  %3253 = vmatprep.subr.mxu0 0.0
  %3254 = vmatpush1.xpose.msra.mxu0 0.0
  %3255 = vmatprep.subr.mxu0 0.0
  %3256 = vmatpush1.xpose.msra.mxu0 0.0
  %3257 = vmatprep.subr.mxu0 0.0
  %3258 = vmatpush1.xpose.msra.mxu0 0.0
  %3259 = vmatprep.subr.mxu0 0.0
  %3260 = vmatpush1.xpose.msra.mxu0 0.0
  %3261 = vmatprep.subr.mxu0 0.0
  %3262 = vmatpush1.xpose.msra.mxu0 0.0
  %3263 = vmatprep.subr.mxu0 0.0
  %3264 = vmatpush1.xpose.msra.mxu0 0.0
  %3265 = vmatprep.subr.mxu0 0.0
  %3266 = vmatpush1.xpose.msra.mxu0 0.0
  %3267 = vmatprep.subr.mxu0 0.0
  %3268 = vmatpush1.xpose.msra.mxu0 0.0
  %3269 = vmatprep.subr.mxu0 0.0
  %3270 = vmatpush1.xpose.msra.mxu0 0.0
  %3271 = vmatprep.subr.mxu0 0.0
  %3272 = vmatpush1.xpose.msra.mxu0 0.0
  %3273 = vmatprep.subr.mxu0 0.0
  %3274 = vmatpush1.xpose.msra.mxu0 0.0
  %3275 = vmatprep.subr.mxu0 0.0
  %3276 = vmatpush1.xpose.msra.mxu0 0.0
  %3277 = vmatprep.subr.mxu0 0.0
  %3278 = vmatpush1.xpose.msra.mxu0 0.0
  %3279 = vmatprep.subr.mxu0 0.0
  %3280 = vmatpush1.xpose.msra.mxu0 0.0
  %3281 = vmatprep.subr.mxu0 0.0
  %3282 = vmatpush1.xpose.msra.mxu0 0.0
  %3283 = vmatprep.subr.mxu0 0.0
  %3284 = vmatpush1.xpose.msra.mxu0 0.0
  %3285 = vmatprep.subr.mxu0 0.0
  %3286 = vmatpush1.xpose.msra.mxu0 0.0
  %3287 = vmatprep.subr.mxu0 0.0
  %3288 = vmatpush1.xpose.msra.mxu0 0.0
  %3289 = vmatprep.subr.mxu0 0.0
  %3290 = vmatpush1.xpose.msra.mxu0 0.0
  %3291 = vmatprep.subr.mxu0 0.0
  %3292 = vmatpush1.xpose.msra.mxu0 0.0
  %3293 = vmatprep.subr.mxu0 0.0
  %3294 = vmatpush1.xpose.msra.mxu0 0.0
  %3295 = vmatprep.mubr.f32.mxu0 0.0
  %3296 = vmatmul.mubr.f32.gmra.mrb[0].mxu0 %v3227
  %v3297 = vpop.f32.mrb[0].mxu0
  %v3298 = vadd.f32 0.0, %v3297
  %v3299 = vpop.f32.mrb[0].mxu0
  %3300 = vdwg.mxu0
  %v3301 = vmul.f32 %v3220, 0.35355338
  %v3302 = vmul.f32 %v3298, 0.35355338
  %v3303 = vsel %vm247, %v3301, -inf
  %3304 = vmax.xlane.f32.xlu0 %v3303
  %v3305 = vpop.xlane.xlu0 %3304
  %v3306 = vsel %vm247, %v3302, -inf
  %3307 = vmax.xlane.f32.xlu0 %v3306
  %v3308 = vpop.xlane.xlu0 %3307
  %v3309 = vsub.f32 %v3301, %v3305
  %v3310 = vsub.f32 %v3302, %v3308
  %v3311 = vmul.f32 %v3309, 1.442695
  %v3312 = vpow.pop %v3311
  %v3313 = vmul.f32 %v3310, 1.442695
  %v3314 = vpow.pop %v3313
  %v3315 = vsel %vm247, %v3312, 0.0
  %3316 = vadd.xlane.f32.xlu0 %v3315
  %v3317 = vpop.xlane.xlu0 %3316
  %v3318 = vsel %vm247, %v3314, 0.0
  %3319 = vadd.xlane.f32.xlu0 %v3318
  %v3320 = vpop.xlane.xlu0 %3319
  %v3321 = vrcp.pop %v3317
  %v3322 = vmul.f32 %v3312, %v3321
  %v3323 = vrcp.pop %v3320
  %v3324 = vmul.f32 %v3314, %v3323
  %3325 = vrot.lane.b32.xlu0 %v2313, 48
  %v3326 = vpop.permute.xlu0 %3325
  %v3329 = vsel %vm247, %v3322, 0
  %3331 = vmatprep.subr.mxu0 0.0
  %3332 = vmatpush1.msra.mxu0 %v3326
  %3333 = vmatprep.subr.mxu0 0.0
  %3334 = vmatpush1.msra.mxu0 0.0
  %3335 = vmatprep.subr.mxu0 0.0
  %3336 = vmatpush1.msra.mxu0 0.0
  %3337 = vmatprep.subr.mxu0 0.0
  %3338 = vmatpush1.msra.mxu0 0.0
  %3339 = vmatprep.subr.mxu0 0.0
  %3340 = vmatpush1.msra.mxu0 0.0
  %3341 = vmatprep.subr.mxu0 0.0
  %3342 = vmatpush1.msra.mxu0 0.0
  %3343 = vmatprep.subr.mxu0 0.0
  %3344 = vmatpush1.msra.mxu0 0.0
  %3345 = vmatprep.subr.mxu0 0.0
  %3346 = vmatpush1.msra.mxu0 0.0
  %3347 = vmatprep.subr.mxu0 0.0
  %3348 = vmatpush1.msra.mxu0 0.0
  %3349 = vmatprep.subr.mxu0 0.0
  %3350 = vmatpush1.msra.mxu0 0.0
  %3351 = vmatprep.subr.mxu0 0.0
  %3352 = vmatpush1.msra.mxu0 0.0
  %3353 = vmatprep.subr.mxu0 0.0
  %3354 = vmatpush1.msra.mxu0 0.0
  %3355 = vmatprep.subr.mxu0 0.0
  %3356 = vmatpush1.msra.mxu0 0.0
  %3357 = vmatprep.subr.mxu0 0.0
  %3358 = vmatpush1.msra.mxu0 0.0
  %3359 = vmatprep.subr.mxu0 0.0
  %3360 = vmatpush1.msra.mxu0 0.0
  %3361 = vmatprep.subr.mxu0 0.0
  %3362 = vmatpush1.msra.mxu0 0.0
  %3363 = vmatprep.subr.mxu0 0.0
  %3364 = vmatpush1.msra.mxu0 0.0
  %3365 = vmatprep.subr.mxu0 0.0
  %3366 = vmatpush1.msra.mxu0 0.0
  %3367 = vmatprep.subr.mxu0 0.0
  %3368 = vmatpush1.msra.mxu0 0.0
  %3369 = vmatprep.subr.mxu0 0.0
  %3370 = vmatpush1.msra.mxu0 0.0
  %3371 = vmatprep.subr.mxu0 0.0
  %3372 = vmatpush1.msra.mxu0 0.0
  %3373 = vmatprep.subr.mxu0 0.0
  %3374 = vmatpush1.msra.mxu0 0.0
  %3375 = vmatprep.subr.mxu0 0.0
  %3376 = vmatpush1.msra.mxu0 0.0
  %3377 = vmatprep.subr.mxu0 0.0
  %3378 = vmatpush1.msra.mxu0 0.0
  %3379 = vmatprep.subr.mxu0 0.0
  %3380 = vmatpush1.msra.mxu0 0.0
  %3381 = vmatprep.subr.mxu0 0.0
  %3382 = vmatpush1.msra.mxu0 0.0
  %3383 = vmatprep.subr.mxu0 0.0
  %3384 = vmatpush1.msra.mxu0 0.0
  %3385 = vmatprep.subr.mxu0 0.0
  %3386 = vmatpush1.msra.mxu0 0.0
  %3387 = vmatprep.subr.mxu0 0.0
  %3388 = vmatpush1.msra.mxu0 0.0
  %3389 = vmatprep.subr.mxu0 0.0
  %3390 = vmatpush1.msra.mxu0 0.0
  %3391 = vmatprep.subr.mxu0 0.0
  %3392 = vmatpush1.msra.mxu0 0.0
  %3393 = vmatprep.subr.mxu0 0.0
  %3394 = vmatpush1.msra.mxu0 0.0
  %3395 = vmatprep.mubr.f32.mxu0 0.0
  %3396 = vmatmul.mubr.f32.gmra.mrb[0].mxu0 %v3329
  %v3397 = vpop.f32.mrb[0].mxu0
  %v3398 = vadd.f32 0.0, %v3397
  %v3399 = vpop.f32.mrb[0].mxu0
  %3400 = vdwg.mxu0
  %3401 = vrot.lane.b32.xlu0 %v2318, 48
  %v3402 = vpop.permute.xlu0 %3401
  %v3405 = vsel %vm247, %v3324, 0
  %3407 = vmatprep.subr.mxu0 0.0
  %3408 = vmatpush1.msra.mxu0 %v3402
  %3409 = vmatprep.subr.mxu0 0.0
  %3410 = vmatpush1.msra.mxu0 0.0
  %3411 = vmatprep.subr.mxu0 0.0
  %3412 = vmatpush1.msra.mxu0 0.0
  %3413 = vmatprep.subr.mxu0 0.0
  %3414 = vmatpush1.msra.mxu0 0.0
  %3415 = vmatprep.subr.mxu0 0.0
  %3416 = vmatpush1.msra.mxu0 0.0
  %3417 = vmatprep.subr.mxu0 0.0
  %3418 = vmatpush1.msra.mxu0 0.0
  %3419 = vmatprep.subr.mxu0 0.0
  %3420 = vmatpush1.msra.mxu0 0.0
  %3421 = vmatprep.subr.mxu0 0.0
  %3422 = vmatpush1.msra.mxu0 0.0
  %3423 = vmatprep.subr.mxu0 0.0
  %3424 = vmatpush1.msra.mxu0 0.0
  %3425 = vmatprep.subr.mxu0 0.0
  %3426 = vmatpush1.msra.mxu0 0.0
  %3427 = vmatprep.subr.mxu0 0.0
  %3428 = vmatpush1.msra.mxu0 0.0
  %3429 = vmatprep.subr.mxu0 0.0
  %3430 = vmatpush1.msra.mxu0 0.0
  %3431 = vmatprep.subr.mxu0 0.0
  %3432 = vmatpush1.msra.mxu0 0.0
  %3433 = vmatprep.subr.mxu0 0.0
  %3434 = vmatpush1.msra.mxu0 0.0
  %3435 = vmatprep.subr.mxu0 0.0
  %3436 = vmatpush1.msra.mxu0 0.0
  %3437 = vmatprep.subr.mxu0 0.0
  %3438 = vmatpush1.msra.mxu0 0.0
  %3439 = vmatprep.subr.mxu0 0.0
  %3440 = vmatpush1.msra.mxu0 0.0
  %3441 = vmatprep.subr.mxu0 0.0
  %3442 = vmatpush1.msra.mxu0 0.0
  %3443 = vmatprep.subr.mxu0 0.0
  %3444 = vmatpush1.msra.mxu0 0.0
  %3445 = vmatprep.subr.mxu0 0.0
  %3446 = vmatpush1.msra.mxu0 0.0
  %3447 = vmatprep.subr.mxu0 0.0
  %3448 = vmatpush1.msra.mxu0 0.0
  %3449 = vmatprep.subr.mxu0 0.0
  %3450 = vmatpush1.msra.mxu0 0.0
  %3451 = vmatprep.subr.mxu0 0.0
  %3452 = vmatpush1.msra.mxu0 0.0
  %3453 = vmatprep.subr.mxu0 0.0
  %3454 = vmatpush1.msra.mxu0 0.0
  %3455 = vmatprep.subr.mxu0 0.0
  %3456 = vmatpush1.msra.mxu0 0.0
  %3457 = vmatprep.subr.mxu0 0.0
  %3458 = vmatpush1.msra.mxu0 0.0
  %3459 = vmatprep.subr.mxu0 0.0
  %3460 = vmatpush1.msra.mxu0 0.0
  %3461 = vmatprep.subr.mxu0 0.0
  %3462 = vmatpush1.msra.mxu0 0.0
  %3463 = vmatprep.subr.mxu0 0.0
  %3464 = vmatpush1.msra.mxu0 0.0
  %3465 = vmatprep.subr.mxu0 0.0
  %3466 = vmatpush1.msra.mxu0 0.0
  %3467 = vmatprep.subr.mxu0 0.0
  %3468 = vmatpush1.msra.mxu0 0.0
  %3469 = vmatprep.subr.mxu0 0.0
  %3470 = vmatpush1.msra.mxu0 0.0
  %3471 = vmatprep.mubr.f32.mxu0 0.0
  %3472 = vmatmul.mubr.f32.gmra.mrb[0].mxu0 %v3405
  %v3473 = vpop.f32.mrb[0].mxu0
  %v3474 = vadd.f32 0.0, %v3473
  %v3475 = vpop.f32.mrb[0].mxu0
  %3476 = vdwg.mxu0
  %v3478 = vsel %vm247, %v3398, 0
  %v3481 = vsel %vm247, %v3474, 0
  %3483 = vmatprep.subr.mxu0 0.0
  %3484 = vmatpush1.msra.mxu0 %v2232
  %3485 = vmatprep.subr.mxu0 0.0
  %3486 = vmatpush1.msra.mxu0 0.0
  %3487 = vmatprep.subr.mxu0 0.0
  %3488 = vmatpush1.msra.mxu0 0.0
  %3489 = vmatprep.subr.mxu0 0.0
  %3490 = vmatpush1.msra.mxu0 0.0
  %3491 = vmatprep.subr.mxu0 0.0
  %3492 = vmatpush1.msra.mxu0 0.0
  %3493 = vmatprep.subr.mxu0 0.0
  %3494 = vmatpush1.msra.mxu0 0.0
  %3495 = vmatprep.subr.mxu0 0.0
  %3496 = vmatpush1.msra.mxu0 0.0
  %3497 = vmatprep.subr.mxu0 0.0
  %3498 = vmatpush1.msra.mxu0 0.0
  %3499 = vmatprep.subr.mxu0 0.0
  %3500 = vmatpush1.msra.mxu0 0.0
  %3501 = vmatprep.subr.mxu0 0.0
  %3502 = vmatpush1.msra.mxu0 0.0
  %3503 = vmatprep.subr.mxu0 0.0
  %3504 = vmatpush1.msra.mxu0 0.0
  %3505 = vmatprep.subr.mxu0 0.0
  %3506 = vmatpush1.msra.mxu0 0.0
  %3507 = vmatprep.subr.mxu0 0.0
  %3508 = vmatpush1.msra.mxu0 0.0
  %3509 = vmatprep.subr.mxu0 0.0
  %3510 = vmatpush1.msra.mxu0 0.0
  %3511 = vmatprep.subr.mxu0 0.0
  %3512 = vmatpush1.msra.mxu0 0.0
  %3513 = vmatprep.subr.mxu0 0.0
  %3514 = vmatpush1.msra.mxu0 0.0
  %3515 = vmatprep.subr.mxu0 0.0
  %3516 = vmatpush1.msra.mxu0 0.0
  %3517 = vmatprep.subr.mxu0 0.0
  %3518 = vmatpush1.msra.mxu0 0.0
  %3519 = vmatprep.subr.mxu0 0.0
  %3520 = vmatpush1.msra.mxu0 0.0
  %3521 = vmatprep.subr.mxu0 0.0
  %3522 = vmatpush1.msra.mxu0 0.0
  %3523 = vmatprep.subr.mxu0 0.0
  %3524 = vmatpush1.msra.mxu0 0.0
  %3525 = vmatprep.subr.mxu0 0.0
  %3526 = vmatpush1.msra.mxu0 0.0
  %3527 = vmatprep.subr.mxu0 0.0
  %3528 = vmatpush1.msra.mxu0 0.0
  %3529 = vmatprep.subr.mxu0 0.0
  %3530 = vmatpush1.msra.mxu0 0.0
  %3531 = vmatprep.subr.mxu0 0.0
  %3532 = vmatpush1.msra.mxu0 0.0
  %3533 = vmatprep.subr.mxu0 0.0
  %3534 = vmatpush1.msra.mxu0 0.0
  %3535 = vmatprep.subr.mxu0 0.0
  %3536 = vmatpush1.msra.mxu0 0.0
  %3537 = vmatprep.subr.mxu0 0.0
  %3538 = vmatpush1.msra.mxu0 0.0
  %3539 = vmatprep.subr.mxu0 0.0
  %3540 = vmatpush1.msra.mxu0 0.0
  %3541 = vmatprep.subr.mxu0 0.0
  %3542 = vmatpush1.msra.mxu0 0.0
  %3543 = vmatprep.subr.mxu0 0.0
  %3544 = vmatpush1.msra.mxu0 0.0
  %3545 = vmatprep.subr.mxu0 0.0
  %3546 = vmatpush1.msra.mxu0 0.0
  %3547 = vmatprep.mubr.f32.mxu0 0.0
  %3548 = vmatmul.mubr.f32.gmra.mrb[0].mxu0 %v3478
  %v3549 = vpop.f32.mrb[0].mxu0
  %v3550 = vadd.f32 0.0, %v3549
  %v3551 = vpop.f32.mrb[0].mxu0
  %3552 = vmatprep.mubr.f32.mxu0 0.0
  %3553 = vmatmul.mubr.f32.gmra.mrb[0].mxu0 %v3481
  %v3554 = vpop.f32.mrb[0].mxu0
  %v3555 = vadd.f32 0.0, %v3554
  %v3556 = vpop.f32.mrb[0].mxu0
  %3557 = vdwg.mxu0
  %v3558 = vadd.f32 %v3137, %v3550
  %v3559 = vadd.f32 %v3142, %v3555
  %3560 = vrot.lane.b32.xlu0 %v2313, 104
  %v3561 = vpop.permute.xlu0 %3560
  %3562 = vrot.lane.b32.xlu0 %v2313, 72
  %v3563 = vpop.permute.xlu0 %3562
  %v3564 = vsel %vm247, %v3561, 0
  %v3566 = vsel %vm247, %v3563, 0
  %3568 = vmatprep.subr.mxu0 0.0
  %3569 = vmatpush1.xpose.msra.mxu0 %v3566
  %3570 = vmatprep.subr.mxu0 0.0
  %3571 = vmatpush1.xpose.msra.mxu0 0.0
  %3572 = vmatprep.subr.mxu0 0.0
  %3573 = vmatpush1.xpose.msra.mxu0 0.0
  %3574 = vmatprep.subr.mxu0 0.0
  %3575 = vmatpush1.xpose.msra.mxu0 0.0
  %3576 = vmatprep.subr.mxu0 0.0
  %3577 = vmatpush1.xpose.msra.mxu0 0.0
  %3578 = vmatprep.subr.mxu0 0.0
  %3579 = vmatpush1.xpose.msra.mxu0 0.0
  %3580 = vmatprep.subr.mxu0 0.0
  %3581 = vmatpush1.xpose.msra.mxu0 0.0
  %3582 = vmatprep.subr.mxu0 0.0
  %3583 = vmatpush1.xpose.msra.mxu0 0.0
  %3584 = vmatprep.subr.mxu0 0.0
  %3585 = vmatpush1.xpose.msra.mxu0 0.0
  %3586 = vmatprep.subr.mxu0 0.0
  %3587 = vmatpush1.xpose.msra.mxu0 0.0
  %3588 = vmatprep.subr.mxu0 0.0
  %3589 = vmatpush1.xpose.msra.mxu0 0.0
  %3590 = vmatprep.subr.mxu0 0.0
  %3591 = vmatpush1.xpose.msra.mxu0 0.0
  %3592 = vmatprep.subr.mxu0 0.0
  %3593 = vmatpush1.xpose.msra.mxu0 0.0
  %3594 = vmatprep.subr.mxu0 0.0
  %3595 = vmatpush1.xpose.msra.mxu0 0.0
  %3596 = vmatprep.subr.mxu0 0.0
  %3597 = vmatpush1.xpose.msra.mxu0 0.0
  %3598 = vmatprep.subr.mxu0 0.0
  %3599 = vmatpush1.xpose.msra.mxu0 0.0
  %3600 = vmatprep.subr.mxu0 0.0
  %3601 = vmatpush1.xpose.msra.mxu0 0.0
  %3602 = vmatprep.subr.mxu0 0.0
  %3603 = vmatpush1.xpose.msra.mxu0 0.0
  %3604 = vmatprep.subr.mxu0 0.0
  %3605 = vmatpush1.xpose.msra.mxu0 0.0
  %3606 = vmatprep.subr.mxu0 0.0
  %3607 = vmatpush1.xpose.msra.mxu0 0.0
  %3608 = vmatprep.subr.mxu0 0.0
  %3609 = vmatpush1.xpose.msra.mxu0 0.0
  %3610 = vmatprep.subr.mxu0 0.0
  %3611 = vmatpush1.xpose.msra.mxu0 0.0
  %3612 = vmatprep.subr.mxu0 0.0
  %3613 = vmatpush1.xpose.msra.mxu0 0.0
  %3614 = vmatprep.subr.mxu0 0.0
  %3615 = vmatpush1.xpose.msra.mxu0 0.0
  %3616 = vmatprep.subr.mxu0 0.0
  %3617 = vmatpush1.xpose.msra.mxu0 0.0
  %3618 = vmatprep.subr.mxu0 0.0
  %3619 = vmatpush1.xpose.msra.mxu0 0.0
  %3620 = vmatprep.subr.mxu0 0.0
  %3621 = vmatpush1.xpose.msra.mxu0 0.0
  %3622 = vmatprep.subr.mxu0 0.0
  %3623 = vmatpush1.xpose.msra.mxu0 0.0
  %3624 = vmatprep.subr.mxu0 0.0
  %3625 = vmatpush1.xpose.msra.mxu0 0.0
  %3626 = vmatprep.subr.mxu0 0.0
  %3627 = vmatpush1.xpose.msra.mxu0 0.0
  %3628 = vmatprep.subr.mxu0 0.0
  %3629 = vmatpush1.xpose.msra.mxu0 0.0
  %3630 = vmatprep.subr.mxu0 0.0
  %3631 = vmatpush1.xpose.msra.mxu0 0.0
  %3632 = vmatprep.mubr.f32.mxu0 0.0
  %3633 = vmatmul.mubr.f32.gmra.mrb[0].mxu0 %v3564
  %v3634 = vpop.f32.mrb[0].mxu0
  %v3635 = vadd.f32 0.0, %v3634
  %v3636 = vpop.f32.mrb[0].mxu0
  %3637 = vdwg.mxu0
  %3638 = vrot.lane.b32.xlu0 %v2318, 104
  %v3639 = vpop.permute.xlu0 %3638
  %3640 = vrot.lane.b32.xlu0 %v2318, 72
  %v3641 = vpop.permute.xlu0 %3640
  %v3642 = vsel %vm247, %v3639, 0
  %v3644 = vsel %vm247, %v3641, 0
  %3646 = vmatprep.subr.mxu0 0.0
  %3647 = vmatpush1.xpose.msra.mxu0 %v3644
  %3648 = vmatprep.subr.mxu0 0.0
  %3649 = vmatpush1.xpose.msra.mxu0 0.0
  %3650 = vmatprep.subr.mxu0 0.0
  %3651 = vmatpush1.xpose.msra.mxu0 0.0
  %3652 = vmatprep.subr.mxu0 0.0
  %3653 = vmatpush1.xpose.msra.mxu0 0.0
  %3654 = vmatprep.subr.mxu0 0.0
  %3655 = vmatpush1.xpose.msra.mxu0 0.0
  %3656 = vmatprep.subr.mxu0 0.0
  %3657 = vmatpush1.xpose.msra.mxu0 0.0
  %3658 = vmatprep.subr.mxu0 0.0
  %3659 = vmatpush1.xpose.msra.mxu0 0.0
  %3660 = vmatprep.subr.mxu0 0.0
  %3661 = vmatpush1.xpose.msra.mxu0 0.0
  %3662 = vmatprep.subr.mxu0 0.0
  %3663 = vmatpush1.xpose.msra.mxu0 0.0
  %3664 = vmatprep.subr.mxu0 0.0
  %3665 = vmatpush1.xpose.msra.mxu0 0.0
  %3666 = vmatprep.subr.mxu0 0.0
  %3667 = vmatpush1.xpose.msra.mxu0 0.0
  %3668 = vmatprep.subr.mxu0 0.0
  %3669 = vmatpush1.xpose.msra.mxu0 0.0
  %3670 = vmatprep.subr.mxu0 0.0
  %3671 = vmatpush1.xpose.msra.mxu0 0.0
  %3672 = vmatprep.subr.mxu0 0.0
  %3673 = vmatpush1.xpose.msra.mxu0 0.0
  %3674 = vmatprep.subr.mxu0 0.0
  %3675 = vmatpush1.xpose.msra.mxu0 0.0
  %3676 = vmatprep.subr.mxu0 0.0
  %3677 = vmatpush1.xpose.msra.mxu0 0.0
  %3678 = vmatprep.subr.mxu0 0.0
  %3679 = vmatpush1.xpose.msra.mxu0 0.0
  %3680 = vmatprep.subr.mxu0 0.0
  %3681 = vmatpush1.xpose.msra.mxu0 0.0
  %3682 = vmatprep.subr.mxu0 0.0
  %3683 = vmatpush1.xpose.msra.mxu0 0.0
  %3684 = vmatprep.subr.mxu0 0.0
  %3685 = vmatpush1.xpose.msra.mxu0 0.0
  %3686 = vmatprep.subr.mxu0 0.0
  %3687 = vmatpush1.xpose.msra.mxu0 0.0
  %3688 = vmatprep.subr.mxu0 0.0
  %3689 = vmatpush1.xpose.msra.mxu0 0.0
  %3690 = vmatprep.subr.mxu0 0.0
  %3691 = vmatpush1.xpose.msra.mxu0 0.0
  %3692 = vmatprep.subr.mxu0 0.0
  %3693 = vmatpush1.xpose.msra.mxu0 0.0
  %3694 = vmatprep.subr.mxu0 0.0
  %3695 = vmatpush1.xpose.msra.mxu0 0.0
  %3696 = vmatprep.subr.mxu0 0.0
  %3697 = vmatpush1.xpose.msra.mxu0 0.0
  %3698 = vmatprep.subr.mxu0 0.0
  %3699 = vmatpush1.xpose.msra.mxu0 0.0
  %3700 = vmatprep.subr.mxu0 0.0
  %3701 = vmatpush1.xpose.msra.mxu0 0.0
  %3702 = vmatprep.subr.mxu0 0.0
  %3703 = vmatpush1.xpose.msra.mxu0 0.0
  %3704 = vmatprep.subr.mxu0 0.0
  %3705 = vmatpush1.xpose.msra.mxu0 0.0
  %3706 = vmatprep.subr.mxu0 0.0
  %3707 = vmatpush1.xpose.msra.mxu0 0.0
  %3708 = vmatprep.subr.mxu0 0.0
  %3709 = vmatpush1.xpose.msra.mxu0 0.0
  %3710 = vmatprep.mubr.f32.mxu0 0.0
  %3711 = vmatmul.mubr.f32.gmra.mrb[0].mxu0 %v3642
  %v3712 = vpop.f32.mrb[0].mxu0
  %v3713 = vadd.f32 0.0, %v3712
  %v3714 = vpop.f32.mrb[0].mxu0
  %3715 = vdwg.mxu0
  %v3716 = vmul.f32 %v3635, 0.35355338
  %v3717 = vmul.f32 %v3713, 0.35355338
  %v3718 = vsel %vm247, %v3716, -inf
  %3719 = vmax.xlane.f32.xlu0 %v3718
  %v3720 = vpop.xlane.xlu0 %3719
  %v3721 = vsel %vm247, %v3717, -inf
  %3722 = vmax.xlane.f32.xlu0 %v3721
  %v3723 = vpop.xlane.xlu0 %3722
  %v3724 = vsub.f32 %v3716, %v3720
  %v3725 = vsub.f32 %v3717, %v3723
  %v3726 = vmul.f32 %v3724, 1.442695
  %v3727 = vpow.pop %v3726
  %v3728 = vmul.f32 %v3725, 1.442695
  %v3729 = vpow.pop %v3728
  %v3730 = vsel %vm247, %v3727, 0.0
  %3731 = vadd.xlane.f32.xlu0 %v3730
  %v3732 = vpop.xlane.xlu0 %3731
  %v3733 = vsel %vm247, %v3729, 0.0
  %3734 = vadd.xlane.f32.xlu0 %v3733
  %v3735 = vpop.xlane.xlu0 %3734
  %v3736 = vrcp.pop %v3732
  %v3737 = vmul.f32 %v3727, %v3736
  %v3738 = vrcp.pop %v3735
  %v3739 = vmul.f32 %v3729, %v3738
  %3740 = vrot.lane.b32.xlu0 %v2313, 40
  %v3741 = vpop.permute.xlu0 %3740
  %v3744 = vsel %vm247, %v3737, 0
  %3746 = vmatprep.subr.mxu0 0.0
  %3747 = vmatpush1.msra.mxu0 %v3741
  %3748 = vmatprep.subr.mxu0 0.0
  %3749 = vmatpush1.msra.mxu0 0.0
  %3750 = vmatprep.subr.mxu0 0.0
  %3751 = vmatpush1.msra.mxu0 0.0
  %3752 = vmatprep.subr.mxu0 0.0
  %3753 = vmatpush1.msra.mxu0 0.0
  %3754 = vmatprep.subr.mxu0 0.0
  %3755 = vmatpush1.msra.mxu0 0.0
  %3756 = vmatprep.subr.mxu0 0.0
  %3757 = vmatpush1.msra.mxu0 0.0
  %3758 = vmatprep.subr.mxu0 0.0
  %3759 = vmatpush1.msra.mxu0 0.0
  %3760 = vmatprep.subr.mxu0 0.0
  %3761 = vmatpush1.msra.mxu0 0.0
  %3762 = vmatprep.subr.mxu0 0.0
  %3763 = vmatpush1.msra.mxu0 0.0
  %3764 = vmatprep.subr.mxu0 0.0
  %3765 = vmatpush1.msra.mxu0 0.0
  %3766 = vmatprep.subr.mxu0 0.0
  %3767 = vmatpush1.msra.mxu0 0.0
  %3768 = vmatprep.subr.mxu0 0.0
  %3769 = vmatpush1.msra.mxu0 0.0
  %3770 = vmatprep.subr.mxu0 0.0
  %3771 = vmatpush1.msra.mxu0 0.0
  %3772 = vmatprep.subr.mxu0 0.0
  %3773 = vmatpush1.msra.mxu0 0.0
  %3774 = vmatprep.subr.mxu0 0.0
  %3775 = vmatpush1.msra.mxu0 0.0
  %3776 = vmatprep.subr.mxu0 0.0
  %3777 = vmatpush1.msra.mxu0 0.0
  %3778 = vmatprep.subr.mxu0 0.0
  %3779 = vmatpush1.msra.mxu0 0.0
  %3780 = vmatprep.subr.mxu0 0.0
  %3781 = vmatpush1.msra.mxu0 0.0
  %3782 = vmatprep.subr.mxu0 0.0
  %3783 = vmatpush1.msra.mxu0 0.0
  %3784 = vmatprep.subr.mxu0 0.0
  %3785 = vmatpush1.msra.mxu0 0.0
  %3786 = vmatprep.subr.mxu0 0.0
  %3787 = vmatpush1.msra.mxu0 0.0
  %3788 = vmatprep.subr.mxu0 0.0
  %3789 = vmatpush1.msra.mxu0 0.0
  %3790 = vmatprep.subr.mxu0 0.0
  %3791 = vmatpush1.msra.mxu0 0.0
  %3792 = vmatprep.subr.mxu0 0.0
  %3793 = vmatpush1.msra.mxu0 0.0
  %3794 = vmatprep.subr.mxu0 0.0
  %3795 = vmatpush1.msra.mxu0 0.0
  %3796 = vmatprep.subr.mxu0 0.0
  %3797 = vmatpush1.msra.mxu0 0.0
  %3798 = vmatprep.subr.mxu0 0.0
  %3799 = vmatpush1.msra.mxu0 0.0
  %3800 = vmatprep.subr.mxu0 0.0
  %3801 = vmatpush1.msra.mxu0 0.0
  %3802 = vmatprep.subr.mxu0 0.0
  %3803 = vmatpush1.msra.mxu0 0.0
  %3804 = vmatprep.subr.mxu0 0.0
  %3805 = vmatpush1.msra.mxu0 0.0
  %3806 = vmatprep.subr.mxu0 0.0
  %3807 = vmatpush1.msra.mxu0 0.0
  %3808 = vmatprep.subr.mxu0 0.0
  %3809 = vmatpush1.msra.mxu0 0.0
  %3810 = vmatprep.mubr.f32.mxu0 0.0
  %3811 = vmatmul.mubr.f32.gmra.mrb[0].mxu0 %v3744
  %v3812 = vpop.f32.mrb[0].mxu0
  %v3813 = vadd.f32 0.0, %v3812
  %v3814 = vpop.f32.mrb[0].mxu0
  %3815 = vdwg.mxu0
  %3816 = vrot.lane.b32.xlu0 %v2318, 40
  %v3817 = vpop.permute.xlu0 %3816
  %v3820 = vsel %vm247, %v3739, 0
  %3822 = vmatprep.subr.mxu0 0.0
  %3823 = vmatpush1.msra.mxu0 %v3817
  %3824 = vmatprep.subr.mxu0 0.0
  %3825 = vmatpush1.msra.mxu0 0.0
  %3826 = vmatprep.subr.mxu0 0.0
  %3827 = vmatpush1.msra.mxu0 0.0
  %3828 = vmatprep.subr.mxu0 0.0
  %3829 = vmatpush1.msra.mxu0 0.0
  %3830 = vmatprep.subr.mxu0 0.0
  %3831 = vmatpush1.msra.mxu0 0.0
  %3832 = vmatprep.subr.mxu0 0.0
  %3833 = vmatpush1.msra.mxu0 0.0
  %3834 = vmatprep.subr.mxu0 0.0
  %3835 = vmatpush1.msra.mxu0 0.0
  %3836 = vmatprep.subr.mxu0 0.0
  %3837 = vmatpush1.msra.mxu0 0.0
  %3838 = vmatprep.subr.mxu0 0.0
  %3839 = vmatpush1.msra.mxu0 0.0
  %3840 = vmatprep.subr.mxu0 0.0
  %3841 = vmatpush1.msra.mxu0 0.0
  %3842 = vmatprep.subr.mxu0 0.0
  %3843 = vmatpush1.msra.mxu0 0.0
  %3844 = vmatprep.subr.mxu0 0.0
  %3845 = vmatpush1.msra.mxu0 0.0
  %3846 = vmatprep.subr.mxu0 0.0
  %3847 = vmatpush1.msra.mxu0 0.0
  %3848 = vmatprep.subr.mxu0 0.0
  %3849 = vmatpush1.msra.mxu0 0.0
  %3850 = vmatprep.subr.mxu0 0.0
  %3851 = vmatpush1.msra.mxu0 0.0
  %3852 = vmatprep.subr.mxu0 0.0
  %3853 = vmatpush1.msra.mxu0 0.0
  %3854 = vmatprep.subr.mxu0 0.0
  %3855 = vmatpush1.msra.mxu0 0.0
  %3856 = vmatprep.subr.mxu0 0.0
  %3857 = vmatpush1.msra.mxu0 0.0
  %3858 = vmatprep.subr.mxu0 0.0
  %3859 = vmatpush1.msra.mxu0 0.0
  %3860 = vmatprep.subr.mxu0 0.0
  %3861 = vmatpush1.msra.mxu0 0.0
  %3862 = vmatprep.subr.mxu0 0.0
  %3863 = vmatpush1.msra.mxu0 0.0
  %3864 = vmatprep.subr.mxu0 0.0
  %3865 = vmatpush1.msra.mxu0 0.0
  %3866 = vmatprep.subr.mxu0 0.0
  %3867 = vmatpush1.msra.mxu0 0.0
  %3868 = vmatprep.subr.mxu0 0.0
  %3869 = vmatpush1.msra.mxu0 0.0
  %3870 = vmatprep.subr.mxu0 0.0
  %3871 = vmatpush1.msra.mxu0 0.0
  %3872 = vmatprep.subr.mxu0 0.0
  %3873 = vmatpush1.msra.mxu0 0.0
  %3874 = vmatprep.subr.mxu0 0.0
  %3875 = vmatpush1.msra.mxu0 0.0
  %3876 = vmatprep.subr.mxu0 0.0
  %3877 = vmatpush1.msra.mxu0 0.0
  %3878 = vmatprep.subr.mxu0 0.0
  %3879 = vmatpush1.msra.mxu0 0.0
  %3880 = vmatprep.subr.mxu0 0.0
  %3881 = vmatpush1.msra.mxu0 0.0
  %3882 = vmatprep.subr.mxu0 0.0
  %3883 = vmatpush1.msra.mxu0 0.0
  %3884 = vmatprep.subr.mxu0 0.0
  %3885 = vmatpush1.msra.mxu0 0.0
  %3886 = vmatprep.mubr.f32.mxu0 0.0
  %3887 = vmatmul.mubr.f32.gmra.mrb[0].mxu0 %v3820
  %v3888 = vpop.f32.mrb[0].mxu0
  %v3889 = vadd.f32 0.0, %v3888
  %v3890 = vpop.f32.mrb[0].mxu0
  %3891 = vdwg.mxu0
  %v3893 = vsel %vm247, %v3813, 0
  %v3896 = vsel %vm247, %v3889, 0
  %3898 = vmatprep.subr.mxu0 0.0
  %3899 = vmatpush1.msra.mxu0 %v2233
  %3900 = vmatprep.subr.mxu0 0.0
  %3901 = vmatpush1.msra.mxu0 0.0
  %3902 = vmatprep.subr.mxu0 0.0
  %3903 = vmatpush1.msra.mxu0 0.0
  %3904 = vmatprep.subr.mxu0 0.0
  %3905 = vmatpush1.msra.mxu0 0.0
  %3906 = vmatprep.subr.mxu0 0.0
  %3907 = vmatpush1.msra.mxu0 0.0
  %3908 = vmatprep.subr.mxu0 0.0
  %3909 = vmatpush1.msra.mxu0 0.0
  %3910 = vmatprep.subr.mxu0 0.0
  %3911 = vmatpush1.msra.mxu0 0.0
  %3912 = vmatprep.subr.mxu0 0.0
  %3913 = vmatpush1.msra.mxu0 0.0
  %3914 = vmatprep.subr.mxu0 0.0
  %3915 = vmatpush1.msra.mxu0 0.0
  %3916 = vmatprep.subr.mxu0 0.0
  %3917 = vmatpush1.msra.mxu0 0.0
  %3918 = vmatprep.subr.mxu0 0.0
  %3919 = vmatpush1.msra.mxu0 0.0
  %3920 = vmatprep.subr.mxu0 0.0
  %3921 = vmatpush1.msra.mxu0 0.0
  %3922 = vmatprep.subr.mxu0 0.0
  %3923 = vmatpush1.msra.mxu0 0.0
  %3924 = vmatprep.subr.mxu0 0.0
  %3925 = vmatpush1.msra.mxu0 0.0
  %3926 = vmatprep.subr.mxu0 0.0
  %3927 = vmatpush1.msra.mxu0 0.0
  %3928 = vmatprep.subr.mxu0 0.0
  %3929 = vmatpush1.msra.mxu0 0.0
  %3930 = vmatprep.subr.mxu0 0.0
  %3931 = vmatpush1.msra.mxu0 0.0
  %3932 = vmatprep.subr.mxu0 0.0
  %3933 = vmatpush1.msra.mxu0 0.0
  %3934 = vmatprep.subr.mxu0 0.0
  %3935 = vmatpush1.msra.mxu0 0.0
  %3936 = vmatprep.subr.mxu0 0.0
  %3937 = vmatpush1.msra.mxu0 0.0
  %3938 = vmatprep.subr.mxu0 0.0
  %3939 = vmatpush1.msra.mxu0 0.0
  %3940 = vmatprep.subr.mxu0 0.0
  %3941 = vmatpush1.msra.mxu0 0.0
  %3942 = vmatprep.subr.mxu0 0.0
  %3943 = vmatpush1.msra.mxu0 0.0
  %3944 = vmatprep.subr.mxu0 0.0
  %3945 = vmatpush1.msra.mxu0 0.0
  %3946 = vmatprep.subr.mxu0 0.0
  %3947 = vmatpush1.msra.mxu0 0.0
  %3948 = vmatprep.subr.mxu0 0.0
  %3949 = vmatpush1.msra.mxu0 0.0
  %3950 = vmatprep.subr.mxu0 0.0
  %3951 = vmatpush1.msra.mxu0 0.0
  %3952 = vmatprep.subr.mxu0 0.0
  %3953 = vmatpush1.msra.mxu0 0.0
  %3954 = vmatprep.subr.mxu0 0.0
  %3955 = vmatpush1.msra.mxu0 0.0
  %3956 = vmatprep.subr.mxu0 0.0
  %3957 = vmatpush1.msra.mxu0 0.0
  %3958 = vmatprep.subr.mxu0 0.0
  %3959 = vmatpush1.msra.mxu0 0.0
  %3960 = vmatprep.subr.mxu0 0.0
  %3961 = vmatpush1.msra.mxu0 0.0
  %3962 = vmatprep.mubr.f32.mxu0 0.0
  %3963 = vmatmul.mubr.f32.gmra.mrb[0].mxu0 %v3893
  %v3964 = vpop.f32.mrb[0].mxu0
  %v3965 = vadd.f32 0.0, %v3964
  %v3966 = vpop.f32.mrb[0].mxu0
  %3967 = vmatprep.mubr.f32.mxu0 0.0
  %3968 = vmatmul.mubr.f32.gmra.mrb[0].mxu0 %v3896
  %v3969 = vpop.f32.mrb[0].mxu0
  %v3970 = vadd.f32 0.0, %v3969
  %v3971 = vpop.f32.mrb[0].mxu0
  %3972 = vdwg.mxu0
  %v3973 = vadd.f32 %v3558, %v3965
  %v3974 = vadd.f32 %v3559, %v3970
  %v3975 = vadd.f32 %v2220, %v3973
  %v3976 = vadd.f32 %v2221, %v3974
  %s3977 = scalar_lea.vmem %s6, 1
  %v3978 = vld [vmem:[%s3977] sm:$0x1]
  %v3980 = vlaneseq
  %v3981 = vshrl.u32 %v3980, 7
  %v3982 = vsub.s32 0, %v3981
  %v3983 = vrot.slane %v3978, %v3982
  %v3985 = vadd.f32 %v3975, %v3983
  %v3986 = vadd.f32 %v3976, %v3983
  %s3987 = scalar_lea.vmem %s7, 1
  %v3988 = vld [vmem:[%s3987] sm:$0x1]
  %s3989 = scalar_lea.vmem %s8, 1
  %v3990 = vld [vmem:[%s3989] sm:$0x1]
  %v3991 = vsel %vm162, %v3985, 0.0
  %3992 = vadd.xlane.f32.xlu0 %v3991
  %v3993 = vpop.xlane.xlu0 %3992
  %v3994 = vsel %vm162, %v3986, 0.0
  %3995 = vadd.xlane.f32.xlu0 %v3994
  %v3996 = vpop.xlane.xlu0 %3995
  %v3997 = vmul.f32 %v3993, %v1918
  %v3998 = vmul.f32 %v3996, %v1918
  %v3999 = vsub.f32 %v3985, %v3997
  %v4000 = vsub.f32 %v3986, %v3998
  %v4001 = vmul.f32 %v3999, %v3999
  %v4002 = vmul.f32 %v4000, %v4000
  %v4003 = vsel %vm162, %v4001, 0.0
  %4004 = vadd.xlane.f32.xlu0 %v4003
  %v4005 = vpop.xlane.xlu0 %4004
  %v4006 = vsel %vm162, %v4002, 0.0
  %4007 = vadd.xlane.f32.xlu0 %v4006
  %v4008 = vpop.xlane.xlu0 %4007
  %v4009 = vmul.f32 %v4005, %v1918
  %v4010 = vmul.f32 %v4008, %v1918
  %v4011 = vadd.f32 %v4009, 1e-05
  %v4012 = vadd.f32 %v4010, 1e-05
  %v4013 = vrsqrt.pop %v4011
  %v4014 = vrsqrt.pop %v4012
  %v4015 = vmul.f32 %v3999, %v4013
  %v4016 = vmul.f32 %v4000, %v4014
  %v4018 = vlaneseq
  %v4019 = vshrl.u32 %v4018, 7
  %v4020 = vsub.s32 0, %v4019
  %v4021 = vrot.slane %v3988, %v4020
  %v4023 = vmul.f32 %v4015, %v4021
  %v4024 = vmul.f32 %v4016, %v4021
  %v4026 = vlaneseq
  %v4027 = vshrl.u32 %v4026, 7
  %v4028 = vsub.s32 0, %v4027
  %v4029 = vrot.slane %v3990, %v4028
  %v4031 = vadd.f32 %v4023, %v4029
  %v4032 = vadd.f32 %v4024, %v4029
  %s4033 = scalar_lea.vmem %s9, 64
  %v4034 = vld [vmem:[%s4033] sm:$0xff]
  %v4035 = vld [vmem:[%s4033 + $0x8] sm:$0xff]
  %v4036 = vld [vmem:[%s4033 + $0x10] sm:$0xff]
  %v4037 = vld [vmem:[%s4033 + $0x18] sm:$0xff]
  %v4038 = vld [vmem:[%s4033 + $0x20] sm:$0xff]
  %v4039 = vld [vmem:[%s4033 + $0x28] sm:$0xff]
  %v4040 = vld [vmem:[%s4033 + $0x30] sm:$0xff]
  %v4041 = vld [vmem:[%s4033 + $0x38] sm:$0xff]
  %s4042 = scalar_lea.vmem %s10, 2
  %v4043 = vld [vmem:[%s4042] sm:$0x3]
  %v4045 = vlaneseq
  %v4046 = vshrl.u32 %v4045, 7
  %v4047 = vsub.s32 0, %v4046
  %v4048 = vrot.slane %v4043, %v4047
  %v4049 = vlaneseq
  %v4050 = vshrl.u32 %v4049, 7
  %v4051 = vsub.s32 1, %v4050
  %v4052 = vrot.slane %v4043, %v4051
  %v4056 = vsel %vm162, %v4031, 0
  %v4059 = vsel %vm162, %v4032, 0
  %4061 = vmatprep.subr.mxu0 %v4035
  %4062 = vmatpush1.msra.mxu0 %v4034
  %4063 = vmatprep.subr.mxu0 %v4037
  %4064 = vmatpush1.msra.mxu0 %v4036
  %4065 = vmatprep.subr.mxu0 %v4039
  %4066 = vmatpush1.msra.mxu0 %v4038
  %4067 = vmatprep.subr.mxu0 %v4041
  %4068 = vmatpush1.msra.mxu0 %v4040
  %4069 = vmatprep.subr.mxu0 0.0
  %4070 = vmatpush1.msra.mxu0 0.0
  %4071 = vmatprep.subr.mxu0 0.0
  %4072 = vmatpush1.msra.mxu0 0.0
  %4073 = vmatprep.subr.mxu0 0.0
  %4074 = vmatpush1.msra.mxu0 0.0
  %4075 = vmatprep.subr.mxu0 0.0
  %4076 = vmatpush1.msra.mxu0 0.0
  %4077 = vmatprep.subr.mxu0 0.0
  %4078 = vmatpush1.msra.mxu0 0.0
  %4079 = vmatprep.subr.mxu0 0.0
  %4080 = vmatpush1.msra.mxu0 0.0
  %4081 = vmatprep.subr.mxu0 0.0
  %4082 = vmatpush1.msra.mxu0 0.0
  %4083 = vmatprep.subr.mxu0 0.0
  %4084 = vmatpush1.msra.mxu0 0.0
  %4085 = vmatprep.subr.mxu0 0.0
  %4086 = vmatpush1.msra.mxu0 0.0
  %4087 = vmatprep.subr.mxu0 0.0
  %4088 = vmatpush1.msra.mxu0 0.0
  %4089 = vmatprep.subr.mxu0 0.0
  %4090 = vmatpush1.msra.mxu0 0.0
  %4091 = vmatprep.subr.mxu0 0.0
  %4092 = vmatpush1.msra.mxu0 0.0
  %4093 = vmatprep.subr.mxu0 0.0
  %4094 = vmatpush1.msra.mxu0 0.0
  %4095 = vmatprep.subr.mxu0 0.0
  %4096 = vmatpush1.msra.mxu0 0.0
  %4097 = vmatprep.subr.mxu0 0.0
  %4098 = vmatpush1.msra.mxu0 0.0
  %4099 = vmatprep.subr.mxu0 0.0
  %4100 = vmatpush1.msra.mxu0 0.0
  %4101 = vmatprep.subr.mxu0 0.0
  %4102 = vmatpush1.msra.mxu0 0.0
  %4103 = vmatprep.subr.mxu0 0.0
  %4104 = vmatpush1.msra.mxu0 0.0
  %4105 = vmatprep.subr.mxu0 0.0
  %4106 = vmatpush1.msra.mxu0 0.0
  %4107 = vmatprep.subr.mxu0 0.0
  %4108 = vmatpush1.msra.mxu0 0.0
  %4109 = vmatprep.subr.mxu0 0.0
  %4110 = vmatpush1.msra.mxu0 0.0
  %4111 = vmatprep.subr.mxu0 0.0
  %4112 = vmatpush1.msra.mxu0 0.0
  %4113 = vmatprep.subr.mxu0 0.0
  %4114 = vmatpush1.msra.mxu0 0.0
  %4115 = vmatprep.subr.mxu0 0.0
  %4116 = vmatpush1.msra.mxu0 0.0
  %4117 = vmatprep.subr.mxu0 0.0
  %4118 = vmatpush1.msra.mxu0 0.0
  %4119 = vmatprep.subr.mxu0 0.0
  %4120 = vmatpush1.msra.mxu0 0.0
  %4121 = vmatprep.subr.mxu0 0.0
  %4122 = vmatpush1.msra.mxu0 0.0
  %4123 = vmatprep.subr.mxu0 0.0
  %4124 = vmatpush1.msra.mxu0 0.0
  %4125 = vmatprep.mubr.f32.mxu0 0.0
  %4126 = vmatmul.mubr.f32.gmra.mrb[0].mxu0 %v4056
  %v4127 = vpop.f32.mrb[0].mxu0
  %v4128 = vadd.f32 %v4048, %v4127
  %v4129 = vpop.f32.mrb[0].mxu0
  %v4130 = vadd.f32 %v4052, %v4129
  %4131 = vmatprep.mubr.f32.mxu0 0.0
  %4132 = vmatmul.mubr.f32.gmra.mrb[0].mxu0 %v4059
  %v4133 = vpop.f32.mrb[0].mxu0
  %v4134 = vadd.f32 %v4048, %v4133
  %v4135 = vpop.f32.mrb[0].mxu0
  %v4136 = vadd.f32 %v4052, %v4135
  %4137 = vdwg.mxu0
  %v4138 = vmax.f32 %v4128, 0.0
  %v4139 = vmax.f32 %v4130, 0.0
  %v4140 = vmax.f32 %v4134, 0.0
  %v4141 = vmax.f32 %v4136, 0.0
  %s4142 = scalar_lea.vmem %s11, 256
  %v4143 = vld [vmem:[%s4142] sm:$0xff]
  %v4144 = vld [vmem:[%s4142 + $0x8] sm:$0xff]
  %v4145 = vld [vmem:[%s4142 + $0x10] sm:$0xff]
  %v4146 = vld [vmem:[%s4142 + $0x18] sm:$0xff]
  %v4147 = vld [vmem:[%s4142 + $0x20] sm:$0xff]
  %v4148 = vld [vmem:[%s4142 + $0x28] sm:$0xff]
  %v4149 = vld [vmem:[%s4142 + $0x30] sm:$0xff]
  %v4150 = vld [vmem:[%s4142 + $0x38] sm:$0xff]
  %v4151 = vld [vmem:[%s4142 + $0x40] sm:$0xff]
  %v4152 = vld [vmem:[%s4142 + $0x48] sm:$0xff]
  %v4153 = vld [vmem:[%s4142 + $0x50] sm:$0xff]
  %v4154 = vld [vmem:[%s4142 + $0x58] sm:$0xff]
  %v4155 = vld [vmem:[%s4142 + $0x60] sm:$0xff]
  %v4156 = vld [vmem:[%s4142 + $0x68] sm:$0xff]
  %v4157 = vld [vmem:[%s4142 + $0x70] sm:$0xff]
  %v4158 = vld [vmem:[%s4142 + $0x78] sm:$0xff]
  %v4159 = vld [vmem:[%s4142 + $0x80] sm:$0xff]
  %v4160 = vld [vmem:[%s4142 + $0x88] sm:$0xff]
  %v4161 = vld [vmem:[%s4142 + $0x90] sm:$0xff]
  %v4162 = vld [vmem:[%s4142 + $0x98] sm:$0xff]
  %v4163 = vld [vmem:[%s4142 + $0xa0] sm:$0xff]
  %v4164 = vld [vmem:[%s4142 + $0xa8] sm:$0xff]
  %v4165 = vld [vmem:[%s4142 + $0xb0] sm:$0xff]
  %v4166 = vld [vmem:[%s4142 + $0xb8] sm:$0xff]
  %v4167 = vld [vmem:[%s4142 + $0xc0] sm:$0xff]
  %v4168 = vld [vmem:[%s4142 + $0xc8] sm:$0xff]
  %v4169 = vld [vmem:[%s4142 + $0xd0] sm:$0xff]
  %v4170 = vld [vmem:[%s4142 + $0xd8] sm:$0xff]
  %v4171 = vld [vmem:[%s4142 + $0xe0] sm:$0xff]
  %v4172 = vld [vmem:[%s4142 + $0xe8] sm:$0xff]
  %v4173 = vld [vmem:[%s4142 + $0xf0] sm:$0xff]
  %v4174 = vld [vmem:[%s4142 + $0xf8] sm:$0xff]
  %s4175 = scalar_lea.vmem %s12, 1
  %v4176 = vld [vmem:[%s4175] sm:$0x1]
  %v4178 = vlaneseq
  %v4179 = vshrl.u32 %v4178, 7
  %v4180 = vsub.s32 0, %v4179
  %v4181 = vrot.slane %v4176, %v4180
  %4183 = vmatprep.subr.mxu0 0.0
  %4184 = vmatpush1.msra.mxu0 %v4143
  %4185 = vmatprep.subr.mxu0 0.0
  %4186 = vmatpush1.msra.mxu0 %v4144
  %4187 = vmatprep.subr.mxu0 0.0
  %4188 = vmatpush1.msra.mxu0 %v4145
  %4189 = vmatprep.subr.mxu0 0.0
  %4190 = vmatpush1.msra.mxu0 %v4146
  %4191 = vmatprep.subr.mxu0 0.0
  %4192 = vmatpush1.msra.mxu0 %v4147
  %4193 = vmatprep.subr.mxu0 0.0
  %4194 = vmatpush1.msra.mxu0 %v4148
  %4195 = vmatprep.subr.mxu0 0.0
  %4196 = vmatpush1.msra.mxu0 %v4149
  %4197 = vmatprep.subr.mxu0 0.0
  %4198 = vmatpush1.msra.mxu0 %v4150
  %4199 = vmatprep.subr.mxu0 0.0
  %4200 = vmatpush1.msra.mxu0 %v4151
  %4201 = vmatprep.subr.mxu0 0.0
  %4202 = vmatpush1.msra.mxu0 %v4152
  %4203 = vmatprep.subr.mxu0 0.0
  %4204 = vmatpush1.msra.mxu0 %v4153
  %4205 = vmatprep.subr.mxu0 0.0
  %4206 = vmatpush1.msra.mxu0 %v4154
  %4207 = vmatprep.subr.mxu0 0.0
  %4208 = vmatpush1.msra.mxu0 %v4155
  %4209 = vmatprep.subr.mxu0 0.0
  %4210 = vmatpush1.msra.mxu0 %v4156
  %4211 = vmatprep.subr.mxu0 0.0
  %4212 = vmatpush1.msra.mxu0 %v4157
  %4213 = vmatprep.subr.mxu0 0.0
  %4214 = vmatpush1.msra.mxu0 %v4158
  %4215 = vmatprep.subr.mxu0 0.0
  %4216 = vmatpush1.msra.mxu0 %v4159
  %4217 = vmatprep.subr.mxu0 0.0
  %4218 = vmatpush1.msra.mxu0 %v4160
  %4219 = vmatprep.subr.mxu0 0.0
  %4220 = vmatpush1.msra.mxu0 %v4161
  %4221 = vmatprep.subr.mxu0 0.0
  %4222 = vmatpush1.msra.mxu0 %v4162
  %4223 = vmatprep.subr.mxu0 0.0
  %4224 = vmatpush1.msra.mxu0 %v4163
  %4225 = vmatprep.subr.mxu0 0.0
  %4226 = vmatpush1.msra.mxu0 %v4164
  %4227 = vmatprep.subr.mxu0 0.0
  %4228 = vmatpush1.msra.mxu0 %v4165
  %4229 = vmatprep.subr.mxu0 0.0
  %4230 = vmatpush1.msra.mxu0 %v4166
  %4231 = vmatprep.subr.mxu0 0.0
  %4232 = vmatpush1.msra.mxu0 %v4167
  %4233 = vmatprep.subr.mxu0 0.0
  %4234 = vmatpush1.msra.mxu0 %v4168
  %4235 = vmatprep.subr.mxu0 0.0
  %4236 = vmatpush1.msra.mxu0 %v4169
  %4237 = vmatprep.subr.mxu0 0.0
  %4238 = vmatpush1.msra.mxu0 %v4170
  %4239 = vmatprep.subr.mxu0 0.0
  %4240 = vmatpush1.msra.mxu0 %v4171
  %4241 = vmatprep.subr.mxu0 0.0
  %4242 = vmatpush1.msra.mxu0 %v4172
  %4243 = vmatprep.subr.mxu0 0.0
  %4244 = vmatpush1.msra.mxu0 %v4173
  %4245 = vmatprep.subr.mxu0 0.0
  %4246 = vmatpush1.msra.mxu0 %v4174
  %4247 = vmatprep.mubr.f32.mxu0 %v4139
  %4248 = vmatmul.mubr.f32.gmra.mrb[0].mxu0 %v4138
  %v4249 = vpop.f32.mrb[0].mxu0
  %v4250 = vadd.f32 %v4181, %v4249
  %v4251 = vpop.f32.mrb[0].mxu0
  %4252 = vmatprep.mubr.f32.mxu0 %v4141
  %4253 = vmatmul.mubr.f32.gmra.mrb[0].mxu0 %v4140
  %v4254 = vpop.f32.mrb[0].mxu0
  %v4255 = vadd.f32 %v4181, %v4254
  %v4256 = vpop.f32.mrb[0].mxu0
  %4257 = vdwg.mxu0
  %v4258 = vadd.f32 %v4031, %v4250
  %v4259 = vadd.f32 %v4032, %v4255
  %s4260 = scalar_lea.vmem %s13, 1
  %v4261 = vld [vmem:[%s4260] sm:$0x1]
  %s4262 = scalar_lea.vmem %s14, 1
  %v4263 = vld [vmem:[%s4262] sm:$0x1]
  %v4264 = vsel %vm162, %v4258, 0.0
  %4265 = vadd.xlane.f32.xlu0 %v4264
  %v4266 = vpop.xlane.xlu0 %4265
  %v4267 = vsel %vm162, %v4259, 0.0
  %4268 = vadd.xlane.f32.xlu0 %v4267
  %v4269 = vpop.xlane.xlu0 %4268
  %v4270 = vmul.f32 %v4266, %v1918
  %v4271 = vmul.f32 %v4269, %v1918
  %v4272 = vsub.f32 %v4258, %v4270
  %v4273 = vsub.f32 %v4259, %v4271
  %v4274 = vmul.f32 %v4272, %v4272
  %v4275 = vmul.f32 %v4273, %v4273
  %v4276 = vsel %vm162, %v4274, 0.0
  %4277 = vadd.xlane.f32.xlu0 %v4276
  %v4278 = vpop.xlane.xlu0 %4277
  %v4279 = vsel %vm162, %v4275, 0.0
  %4280 = vadd.xlane.f32.xlu0 %v4279
  %v4281 = vpop.xlane.xlu0 %4280
  %v4282 = vmul.f32 %v4278, %v1918
  %v4283 = vmul.f32 %v4281, %v1918
  %v4284 = vadd.f32 %v4282, 1e-05
  %v4285 = vadd.f32 %v4283, 1e-05
  %v4286 = vrsqrt.pop %v4284
  %v4287 = vrsqrt.pop %v4285
  %v4288 = vmul.f32 %v4272, %v4286
  %v4289 = vmul.f32 %v4273, %v4287
  %v4291 = vlaneseq
  %v4292 = vshrl.u32 %v4291, 7
  %v4293 = vsub.s32 0, %v4292
  %v4294 = vrot.slane %v4261, %v4293
  %v4296 = vmul.f32 %v4288, %v4294
  %v4297 = vmul.f32 %v4289, %v4294
  %v4299 = vlaneseq
  %v4300 = vshrl.u32 %v4299, 7
  %v4301 = vsub.s32 0, %v4300
  %v4302 = vrot.slane %v4263, %v4301
  %v4304 = vadd.f32 %v4296, %v4302
  %v4305 = vadd.f32 %v4297, %v4302
  %v4306 = vld [vmem:[%s15] sm:$0xff]
  %v4307 = vld [vmem:[%s15 + $0x8] sm:$0xff]
  %v4308 = vld [vmem:[%s15 + $0x10] sm:$0xff]
  %v4309 = vld [vmem:[%s15 + $0x18] sm:$0xff]
  %v4310 = vld [vmem:[%s16] sm:$0x1]
  %v4312 = vlaneseq
  %v4313 = vshrl.u32 %v4312, 7
  %v4314 = vsub.s32 0, %v4313
  %v4315 = vrot.slane %v4310, %v4314
  %v4318 = vsel %vm162, %v4304, 0
  %v4321 = vsel %vm162, %v4305, 0
  %4323 = vmatprep.subr.mxu0 0.0
  %4324 = vmatpush1.msra.mxu0 %v4306
  %4325 = vmatprep.subr.mxu0 0.0
  %4326 = vmatpush1.msra.mxu0 %v4307
  %4327 = vmatprep.subr.mxu0 0.0
  %4328 = vmatpush1.msra.mxu0 %v4308
  %4329 = vmatprep.subr.mxu0 0.0
  %4330 = vmatpush1.msra.mxu0 %v4309
  %4331 = vmatprep.subr.mxu0 0.0
  %4332 = vmatpush1.msra.mxu0 0.0
  %4333 = vmatprep.subr.mxu0 0.0
  %4334 = vmatpush1.msra.mxu0 0.0
  %4335 = vmatprep.subr.mxu0 0.0
  %4336 = vmatpush1.msra.mxu0 0.0
  %4337 = vmatprep.subr.mxu0 0.0
  %4338 = vmatpush1.msra.mxu0 0.0
  %4339 = vmatprep.subr.mxu0 0.0
  %4340 = vmatpush1.msra.mxu0 0.0
  %4341 = vmatprep.subr.mxu0 0.0
  %4342 = vmatpush1.msra.mxu0 0.0
  %4343 = vmatprep.subr.mxu0 0.0
  %4344 = vmatpush1.msra.mxu0 0.0
  %4345 = vmatprep.subr.mxu0 0.0
  %4346 = vmatpush1.msra.mxu0 0.0
  %4347 = vmatprep.subr.mxu0 0.0
  %4348 = vmatpush1.msra.mxu0 0.0
  %4349 = vmatprep.subr.mxu0 0.0
  %4350 = vmatpush1.msra.mxu0 0.0
  %4351 = vmatprep.subr.mxu0 0.0
  %4352 = vmatpush1.msra.mxu0 0.0
  %4353 = vmatprep.subr.mxu0 0.0
  %4354 = vmatpush1.msra.mxu0 0.0
  %4355 = vmatprep.subr.mxu0 0.0
  %4356 = vmatpush1.msra.mxu0 0.0
  %4357 = vmatprep.subr.mxu0 0.0
  %4358 = vmatpush1.msra.mxu0 0.0
  %4359 = vmatprep.subr.mxu0 0.0
  %4360 = vmatpush1.msra.mxu0 0.0
  %4361 = vmatprep.subr.mxu0 0.0
  %4362 = vmatpush1.msra.mxu0 0.0
  %4363 = vmatprep.subr.mxu0 0.0
  %4364 = vmatpush1.msra.mxu0 0.0
  %4365 = vmatprep.subr.mxu0 0.0
  %4366 = vmatpush1.msra.mxu0 0.0
  %4367 = vmatprep.subr.mxu0 0.0
  %4368 = vmatpush1.msra.mxu0 0.0
  %4369 = vmatprep.subr.mxu0 0.0
  %4370 = vmatpush1.msra.mxu0 0.0
  %4371 = vmatprep.subr.mxu0 0.0
  %4372 = vmatpush1.msra.mxu0 0.0
  %4373 = vmatprep.subr.mxu0 0.0
  %4374 = vmatpush1.msra.mxu0 0.0
  %4375 = vmatprep.subr.mxu0 0.0
  %4376 = vmatpush1.msra.mxu0 0.0
  %4377 = vmatprep.subr.mxu0 0.0
  %4378 = vmatpush1.msra.mxu0 0.0
  %4379 = vmatprep.subr.mxu0 0.0
  %4380 = vmatpush1.msra.mxu0 0.0
  %4381 = vmatprep.subr.mxu0 0.0
  %4382 = vmatpush1.msra.mxu0 0.0
  %4383 = vmatprep.subr.mxu0 0.0
  %4384 = vmatpush1.msra.mxu0 0.0
  %4385 = vmatprep.subr.mxu0 0.0
  %4386 = vmatpush1.msra.mxu0 0.0
  %4387 = vmatprep.mubr.f32.mxu0 0.0
  %4388 = vmatmul.mubr.f32.gmra.mrb[0].mxu0 %v4318
  %v4389 = vpop.f32.mrb[0].mxu0
  %v4390 = vadd.f32 %v4315, %v4389
  %v4391 = vpop.f32.mrb[0].mxu0
  %4392 = vmatprep.mubr.f32.mxu0 0.0
  %4393 = vmatmul.mubr.f32.gmra.mrb[0].mxu0 %v4321
  %v4394 = vpop.f32.mrb[0].mxu0
  %v4395 = vadd.f32 %v4315, %v4394
  %v4396 = vpop.f32.mrb[0].mxu0
  %4397 = vdwg.mxu0
  %4398 = vst [vmem:[%s17] sm:$0xff] %v4390
  %4399 = vst [vmem:[%s17 + $0x8] sm:$0xff] %v4395
  // Predicated region
  $region70: #{transformer_forward.1} parent=0 // pred_check
    _
  $region71: #{transformer_forward.1} parent=0 // pred_check_branch
    %4401 = sbr.rel (0) target = $region73
  $region72: #{transformer_forward.1} parent=0 // pred_region
    _
  $region73: #{transformer_forward.1} parent=0 // pred_fallthru
    _
  // Predicated region
  $region74: #{transformer_forward.1} parent=0 // pred_check
    _
  $region75: #{transformer_forward.1} parent=0 // pred_check_branch
    %4403 = sbr.rel (0) target = $region77
  $region76: #{transformer_forward.1} parent=0 // pred_region
    _
  $region77: #{transformer_forward.1} parent=0 // pred_fallthru
    _

</llo_original>
